<compile_context>
chip_gen: v6e
topology: v6e:2x2x1
jax: 0.10.0
libtpu: 0.0.40
codegen_flags: <defaults>
</compile_context>

<pallas_src>
import jax
import jax.numpy as jnp
from jax import lax
from jax.experimental import pallas as pl
from jax.experimental.pallas import tpu as pltpu


def _make_kernel(C, H, W, PAD):
    HW = H * W
    taps = [(oy, ox) for oy in (-1, 0, 1) for ox in (-1, 0, 1)]

    def kernel(x_ref, w1_ref, b1_ref, w2_ref, b2_ref, ml_ref, mr_ref,
               out_ref, p_ref):
        # x_ref  : (1, C, H*W)   one image, channel-major, spatial flattened
        # w*_ref : (C, 9*C)      im2col weights, K ordered as (ky, kx, cin)
        # b*_ref : (C, 1)
        # ml_ref : (1, H*W)      0. where x == 0     else 1.  (left-wrap mask)
        # mr_ref : (1, H*W)      0. where x == W - 1 else 1.  (right-wrap mask)
        # out_ref: (1, C, H*W)
        # p_ref  : (C, PAD + H*W + PAD)  VMEM staging buffer for 'same' padding
        x_img = x_ref[0]                                       # (C, H*W)

        # Zero only the pad lanes (aligned, tiny).  Done every step so the
        # kernel stays correct if the batch axis is sharded across TensorCores.
        p_ref[:, 0:PAD] = jnp.zeros((C, PAD), jnp.float32)
        p_ref[:, PAD + HW:PAD + HW + PAD] = jnp.zeros((C, PAD), jnp.float32)

        def conv(w_ref, b_ref):
            # Gather the 9 shifted taps and fuse them into one K = 9C matmul.
            pieces = []
            for oy, ox in taps:
                s = PAD + oy * W + ox
                piece = p_ref[:, s:s + HW]                     # (C, H*W)
                if ox == -1:
                    piece = piece * ml_ref[...]
                elif ox == 1:
                    piece = piece * mr_ref[...]
                pieces.append(piece)
            patches = jnp.concatenate(pieces, axis=0)          # (9C, H*W)
            return jnp.dot(w_ref[...], patches,
                           preferred_element_type=jnp.float32) + b_ref[...]

        # conv1 + ReLU
        p_ref[:, PAD:PAD + HW] = x_img.astype(jnp.float32)
        h = jnp.maximum(conv(w1_ref, b1_ref), 0.0)             # (C, H*W)

        # conv2 + residual (resWeight == 1 in the reference module)
        p_ref[:, PAD:PAD + HW] = h
        y = conv(w2_ref, b2_ref) + x_img.astype(jnp.float32)

        out_ref[0] = y.astype(out_ref.dtype)

    return kernel


@jax.jit
def post_process_residual(x_nchw, w1_oihw, b1, w2_oihw, b2):
    """x_nchw: (N, C, H, W) float32.  Returns (N, C, H, W)."""
    N, C, H, W = x_nchw.shape
    HW = H * W
    PAD = ((W + 1 + 127) // 128) * 128        # lane-aligned halo >= W + 1
    L = PAD + HW + PAD

    x_flat = x_nchw.reshape(N, C, HW)

    # OIHW -> (Cout, ky, kx, Cin) -> (Cout, 9*Cin); K order matches the
    # tap-concatenation order inside the kernel.
    w1m = jnp.transpose(w1_oihw, (0, 2, 3, 1)).reshape(C, 9 * C).astype(jnp.float32)
    w2m = jnp.transpose(w2_oihw, (0, 2, 3, 1)).reshape(C, 9 * C).astype(jnp.float32)
    b1c = b1.reshape(C, 1).astype(jnp.float32)
    b2c = b2.reshape(C, 1).astype(jnp.float32)

    # Lane masks killing the left/right wrap-around of the +-1 x-shifts.
    xpos = jnp.arange(HW, dtype=jnp.int32) % W
    mask_l = (xpos != 0).astype(jnp.float32).reshape(1, HW)
    mask_r = (xpos != W - 1).astype(jnp.float32).reshape(1, HW)

    kernel = _make_kernel(C, H, W, PAD)

    out_flat = pl.pallas_call(
        kernel,
        out_shape=jax.ShapeDtypeStruct((N, C, HW), x_nchw.dtype),
        grid_spec=pltpu.PrefetchScalarGridSpec(
            num_scalar_prefetch=0,
            grid=(N,),
            in_specs=[
                pl.BlockSpec((1, C, HW), lambda n: (n, 0, 0)),
                pl.BlockSpec((C, 9 * C), lambda n: (0, 0)),
                pl.BlockSpec((C, 1), lambda n: (0, 0)),
                pl.BlockSpec((C, 9 * C), lambda n: (0, 0)),
                pl.BlockSpec((C, 1), lambda n: (0, 0)),
                pl.BlockSpec((1, HW), lambda n: (0, 0)),
                pl.BlockSpec((1, HW), lambda n: (0, 0)),
            ],
            out_specs=pl.BlockSpec((1, C, HW), lambda n: (n, 0, 0)),
            scratch_shapes=[pltpu.VMEM((C, L), jnp.float32)],
        ),
        compiler_params=pltpu.CompilerParams(
            dimension_semantics=("parallel",)),
    )(x_flat, w1m, b1c, w2m, b2c, mask_l, mask_r)

    return out_flat.reshape(N, C, H, W)


def _reference(x_nchw, w1, b1, w2, b2):
    """Pure-JAX reference using lax.conv (NCHW, OIHW)."""
    dn = lax.conv_dimension_numbers(x_nchw.shape, w1.shape,
                                    ("NCHW", "OIHW", "NCHW"))
    h = lax.conv_general_dilated(x_nchw, w1, (1, 1), "SAME",
                                 dimension_numbers=dn)
    h = jnp.maximum(h + b1.reshape(1, -1, 1, 1), 0.0)
    y = lax.conv_general_dilated(h, w2, (1, 1), "SAME",
                                 dimension_numbers=dn)
    return y + b2.reshape(1, -1, 1, 1) + x_nchw


if __name__ == "__main__":
    # config.clrch = 1 -> channelNumber = 64 (smallest value the module implies)
    N, C, H, W = 2, 64, 16, 16

    key = jax.random.PRNGKey(0)
    kx, kw1, kw2, kb1, kb2 = jax.random.split(key, 5)

    x = jax.random.normal(kx, (N, C, H, W), dtype=jnp.float32)

    # Init mimicking torch.nn.init.trunc_normal_(std=0.01); small nonzero
    # biases so the bias path is actually exercised by the check.
    w1 = 0.01 * jax.random.truncated_normal(kw1, -2.0, 2.0, (C, C, 3, 3),
                                            dtype=jnp.float32)
    w2 = 0.01 * jax.random.truncated_normal(kw2, -2.0, 2.0, (C, C, 3, 3),
                                            dtype=jnp.float32)
    b1 = 0.01 * jax.random.normal(kb1, (C,), dtype=jnp.float32)
    b2 = 0.01 * jax.random.normal(kb2, (C,), dtype=jnp.float32)

    out = jax.block_until_ready(post_process_residual(x, w1, b1, w2, b2))

    ref = _reference(x, w1, b1, w2, b2)
    assert out.shape == (N, C, H, W)
    max_err = float(jnp.max(jnp.abs(out - ref)))
    assert jnp.allclose(out, ref, atol=1e-3, rtol=1e-3), max_err

    print("KERNEL_OK")
</pallas_src>

<mosaic_0001>
module attributes {stable_mosaic.version = 11 : i64} {
  func.func @kernel(%arg0: i32, %arg1: memref<1x64x256xf32, #tpu.memory_space<vmem>>, %arg2: memref<64x576xf32, #tpu.memory_space<vmem>>, %arg3: memref<64x1xf32, #tpu.memory_space<vmem>>, %arg4: memref<64x576xf32, #tpu.memory_space<vmem>>, %arg5: memref<64x1xf32, #tpu.memory_space<vmem>>, %arg6: memref<1x256xf32, #tpu.memory_space<vmem>>, %arg7: memref<1x256xf32, #tpu.memory_space<vmem>>, %arg8: memref<1x64x256xf32, #tpu.memory_space<vmem>>, %arg9: memref<64x512xf32, #tpu.memory_space<vmem>>) attributes {dimension_semantics = [#tpu.dimension_semantics<parallel>], iteration_bounds = array<i64: 2>, scalar_prefetch = 0 : i64, scratch_operands = 1 : i64, tpu.core_type = #tpu.core_type<tc>, window_params = [{transform_indices = @transform_0, window_bounds = array<i64: 1, 64, 256>}, {pipeline_mode = #tpu.pipeline_mode<synchronous>, transform_indices = @transform_1, window_bounds = array<i64: 64, 576>}, {pipeline_mode = #tpu.pipeline_mode<synchronous>, transform_indices = @transform_2, window_bounds = array<i64: 64, 1>}, {pipeline_mode = #tpu.pipeline_mode<synchronous>, transform_indices = @transform_3, window_bounds = array<i64: 64, 576>}, {pipeline_mode = #tpu.pipeline_mode<synchronous>, transform_indices = @transform_4, window_bounds = array<i64: 64, 1>}, {pipeline_mode = #tpu.pipeline_mode<synchronous>, transform_indices = @transform_5, window_bounds = array<i64: 1, 256>}, {pipeline_mode = #tpu.pipeline_mode<synchronous>, transform_indices = @transform_6, window_bounds = array<i64: 1, 256>}, {transform_indices = @transform_7, window_bounds = array<i64: 1, 64, 256>}]} {
    %c0 = arith.constant 0 : index
    %c0_0 = arith.constant 0 : index
    %c0_1 = arith.constant 0 : index
    %0 = vector.load %arg1[%c0, %c0_0, %c0_1] : memref<1x64x256xf32, #tpu.memory_space<vmem>>, vector<1x64x256xf32>
    %1 = vector.shape_cast %0 : vector<1x64x256xf32> to vector<64x256xf32>
    %cst = arith.constant 0.000000e+00 : f32
    %2 = vector.broadcast %cst : f32 to vector<64x128xf32>
    %c0_2 = arith.constant 0 : index
    %c0_3 = arith.constant 0 : index
    %3 = vector.load %arg9[%c0_2, %c0_3] : memref<64x512xf32, #tpu.memory_space<vmem>>, vector<64x128xf32>
    tpu.vector_store %arg9[%c0_2, %c0_3], %2 {strides = array<i32>} : memref<64x512xf32, #tpu.memory_space<vmem>>, vector<64x128xf32>,
    %cst_4 = arith.constant 0.000000e+00 : f32
    %4 = vector.broadcast %cst_4 : f32 to vector<64x128xf32>
    %c0_5 = arith.constant 0 : index
    %c384 = arith.constant 384 : index
    %5 = vector.load %arg9[%c0_5, %c384] : memref<64x512xf32, #tpu.memory_space<vmem>>, vector<64x128xf32>
    tpu.vector_store %arg9[%c0_5, %c384], %4 {strides = array<i32>} : memref<64x512xf32, #tpu.memory_space<vmem>>, vector<64x128xf32>,
    %c0_6 = arith.constant 0 : index
    %c128 = arith.constant 128 : index
    %6 = vector.load %arg9[%c0_6, %c128] : memref<64x512xf32, #tpu.memory_space<vmem>>, vector<64x256xf32>
    tpu.vector_store %arg9[%c0_6, %c128], %1 {strides = array<i32>} : memref<64x512xf32, #tpu.memory_space<vmem>>, vector<64x256xf32>,
    %c0_7 = arith.constant 0 : index
    %c111 = arith.constant 111 : index
    %7 = vector.load %arg9[%c0_7, %c111] : memref<64x512xf32, #tpu.memory_space<vmem>>, vector<64x256xf32>
    %c0_8 = arith.constant 0 : index
    %c0_9 = arith.constant 0 : index
    %8 = vector.load %arg6[%c0_8, %c0_9] : memref<1x256xf32, #tpu.memory_space<vmem>>, vector<1x256xf32>
    %9 = vector.broadcast %8 : vector<1x256xf32> to vector<64x256xf32>
    %10 = arith.mulf %7, %9 : vector<64x256xf32>
    %c0_10 = arith.constant 0 : index
    %c112 = arith.constant 112 : index
    %11 = vector.load %arg9[%c0_10, %c112] : memref<64x512xf32, #tpu.memory_space<vmem>>, vector<64x256xf32>
    %c0_11 = arith.constant 0 : index
    %c113 = arith.constant 113 : index
    %12 = vector.load %arg9[%c0_11, %c113] : memref<64x512xf32, #tpu.memory_space<vmem>>, vector<64x256xf32>
    %c0_12 = arith.constant 0 : index
    %c0_13 = arith.constant 0 : index
    %13 = vector.load %arg7[%c0_12, %c0_13] : memref<1x256xf32, #tpu.memory_space<vmem>>, vector<1x256xf32>
    %14 = vector.broadcast %13 : vector<1x256xf32> to vector<64x256xf32>
    %15 = arith.mulf %12, %14 : vector<64x256xf32>
    %c0_14 = arith.constant 0 : index
    %c127 = arith.constant 127 : index
    %16 = vector.load %arg9[%c0_14, %c127] : memref<64x512xf32, #tpu.memory_space<vmem>>, vector<64x256xf32>
    %c0_15 = arith.constant 0 : index
    %c0_16 = arith.constant 0 : index
    %17 = vector.load %arg6[%c0_15, %c0_16] : memref<1x256xf32, #tpu.memory_space<vmem>>, vector<1x256xf32>
    %18 = vector.broadcast %17 : vector<1x256xf32> to vector<64x256xf32>
    %19 = arith.mulf %16, %18 : vector<64x256xf32>
    %c0_17 = arith.constant 0 : index
    %c128_18 = arith.constant 128 : index
    %20 = vector.load %arg9[%c0_17, %c128_18] : memref<64x512xf32, #tpu.memory_space<vmem>>, vector<64x256xf32>
    %c0_19 = arith.constant 0 : index
    %c129 = arith.constant 129 : index
    %21 = vector.load %arg9[%c0_19, %c129] : memref<64x512xf32, #tpu.memory_space<vmem>>, vector<64x256xf32>
    %c0_20 = arith.constant 0 : index
    %c0_21 = arith.constant 0 : index
    %22 = vector.load %arg7[%c0_20, %c0_21] : memref<1x256xf32, #tpu.memory_space<vmem>>, vector<1x256xf32>
    %23 = vector.broadcast %22 : vector<1x256xf32> to vector<64x256xf32>
    %24 = arith.mulf %21, %23 : vector<64x256xf32>
    %c0_22 = arith.constant 0 : index
    %c143 = arith.constant 143 : index
    %25 = vector.load %arg9[%c0_22, %c143] : memref<64x512xf32, #tpu.memory_space<vmem>>, vector<64x256xf32>
    %c0_23 = arith.constant 0 : index
    %c0_24 = arith.constant 0 : index
    %26 = vector.load %arg6[%c0_23, %c0_24] : memref<1x256xf32, #tpu.memory_space<vmem>>, vector<1x256xf32>
    %27 = vector.broadcast %26 : vector<1x256xf32> to vector<64x256xf32>
    %28 = arith.mulf %25, %27 : vector<64x256xf32>
    %c0_25 = arith.constant 0 : index
    %c144 = arith.constant 144 : index
    %29 = vector.load %arg9[%c0_25, %c144] : memref<64x512xf32, #tpu.memory_space<vmem>>, vector<64x256xf32>
    %c0_26 = arith.constant 0 : index
    %c145 = arith.constant 145 : index
    %30 = vector.load %arg9[%c0_26, %c145] : memref<64x512xf32, #tpu.memory_space<vmem>>, vector<64x256xf32>
    %c0_27 = arith.constant 0 : index
    %c0_28 = arith.constant 0 : index
    %31 = vector.load %arg7[%c0_27, %c0_28] : memref<1x256xf32, #tpu.memory_space<vmem>>, vector<1x256xf32>
    %32 = vector.broadcast %31 : vector<1x256xf32> to vector<64x256xf32>
    %33 = arith.mulf %30, %32 : vector<64x256xf32>
    %34 = tpu.concatenate %10, %11, %15, %19, %20, %24, %28, %29, %33 in 0 : vector<64x256xf32>, vector<64x256xf32>, vector<64x256xf32>, vector<64x256xf32>, vector<64x256xf32>, vector<64x256xf32>, vector<64x256xf32>, vector<64x256xf32>, vector<64x256xf32> -> vector<576x256xf32>
    %c0_29 = arith.constant 0 : index
    %c0_30 = arith.constant 0 : index
    %35 = vector.load %arg2[%c0_29, %c0_30] : memref<64x576xf32, #tpu.memory_space<vmem>>, vector<64x576xf32>
    %cst_31 = arith.constant dense<0.000000e+00> : vector<64x256xf32>
    %36 = tpu.matmul %35, %34, %cst_31 {dimension_numbers = #tpu.dot_dimension_numbers<[1], [0], [0], [1], [0, 0, 1, 1], [], []>} : vector<64x576xf32>, vector<576x256xf32>, vector<64x256xf32> -> vector<64x256xf32>
    %c0_32 = arith.constant 0 : index
    %c0_33 = arith.constant 0 : index
    %37 = vector.load %arg3[%c0_32, %c0_33] : memref<64x1xf32, #tpu.memory_space<vmem>>, vector<64x1xf32>
    %38 = vector.broadcast %37 : vector<64x1xf32> to vector<64x256xf32>
    %39 = arith.addf %36, %38 : vector<64x256xf32>
    %cst_34 = arith.constant 0.000000e+00 : f32
    %40 = vector.broadcast %cst_34 : f32 to vector<64x256xf32>
    %41 = arith.maximumf %39, %40 : vector<64x256xf32>
    %c0_35 = arith.constant 0 : index
    %c128_36 = arith.constant 128 : index
    %42 = vector.load %arg9[%c0_35, %c128_36] : memref<64x512xf32, #tpu.memory_space<vmem>>, vector<64x256xf32>
    tpu.vector_store %arg9[%c0_35, %c128_36], %41 {strides = array<i32>} : memref<64x512xf32, #tpu.memory_space<vmem>>, vector<64x256xf32>,
    %c0_37 = arith.constant 0 : index
    %c111_38 = arith.constant 111 : index
    %43 = vector.load %arg9[%c0_37, %c111_38] : memref<64x512xf32, #tpu.memory_space<vmem>>, vector<64x256xf32>
    %c0_39 = arith.constant 0 : index
    %c0_40 = arith.constant 0 : index
    %44 = vector.load %arg6[%c0_39, %c0_40] : memref<1x256xf32, #tpu.memory_space<vmem>>, vector<1x256xf32>
    %45 = vector.broadcast %44 : vector<1x256xf32> to vector<64x256xf32>
    %46 = arith.mulf %43, %45 : vector<64x256xf32>
    %c0_41 = arith.constant 0 : index
    %c112_42 = arith.constant 112 : index
    %47 = vector.load %arg9[%c0_41, %c112_42] : memref<64x512xf32, #tpu.memory_space<vmem>>, vector<64x256xf32>
    %c0_43 = arith.constant 0 : index
    %c113_44 = arith.constant 113 : index
    %48 = vector.load %arg9[%c0_43, %c113_44] : memref<64x512xf32, #tpu.memory_space<vmem>>, vector<64x256xf32>
    %c0_45 = arith.constant 0 : index
    %c0_46 = arith.constant 0 : index
    %49 = vector.load %arg7[%c0_45, %c0_46] : memref<1x256xf32, #tpu.memory_space<vmem>>, vector<1x256xf32>
    %50 = vector.broadcast %49 : vector<1x256xf32> to vector<64x256xf32>
    %51 = arith.mulf %48, %50 : vector<64x256xf32>
    %c0_47 = arith.constant 0 : index
    %c127_48 = arith.constant 127 : index
    %52 = vector.load %arg9[%c0_47, %c127_48] : memref<64x512xf32, #tpu.memory_space<vmem>>, vector<64x256xf32>
    %c0_49 = arith.constant 0 : index
    %c0_50 = arith.constant 0 : index
    %53 = vector.load %arg6[%c0_49, %c0_50] : memref<1x256xf32, #tpu.memory_space<vmem>>, vector<1x256xf32>
    %54 = vector.broadcast %53 : vector<1x256xf32> to vector<64x256xf32>
    %55 = arith.mulf %52, %54 : vector<64x256xf32>
    %c0_51 = arith.constant 0 : index
    %c128_52 = arith.constant 128 : index
    %56 = vector.load %arg9[%c0_51, %c128_52] : memref<64x512xf32, #tpu.memory_space<vmem>>, vector<64x256xf32>
    %c0_53 = arith.constant 0 : index
    %c129_54 = arith.constant 129 : index
    %57 = vector.load %arg9[%c0_53, %c129_54] : memref<64x512xf32, #tpu.memory_space<vmem>>, vector<64x256xf32>
    %c0_55 = arith.constant 0 : index
    %c0_56 = arith.constant 0 : index
    %58 = vector.load %arg7[%c0_55, %c0_56] : memref<1x256xf32, #tpu.memory_space<vmem>>, vector<1x256xf32>
    %59 = vector.broadcast %58 : vector<1x256xf32> to vector<64x256xf32>
    %60 = arith.mulf %57, %59 : vector<64x256xf32>
    %c0_57 = arith.constant 0 : index
    %c143_58 = arith.constant 143 : index
    %61 = vector.load %arg9[%c0_57, %c143_58] : memref<64x512xf32, #tpu.memory_space<vmem>>, vector<64x256xf32>
    %c0_59 = arith.constant 0 : index
    %c0_60 = arith.constant 0 : index
    %62 = vector.load %arg6[%c0_59, %c0_60] : memref<1x256xf32, #tpu.memory_space<vmem>>, vector<1x256xf32>
    %63 = vector.broadcast %62 : vector<1x256xf32> to vector<64x256xf32>
    %64 = arith.mulf %61, %63 : vector<64x256xf32>
    %c0_61 = arith.constant 0 : index
    %c144_62 = arith.constant 144 : index
    %65 = vector.load %arg9[%c0_61, %c144_62] : memref<64x512xf32, #tpu.memory_space<vmem>>, vector<64x256xf32>
    %c0_63 = arith.constant 0 : index
    %c145_64 = arith.constant 145 : index
    %66 = vector.load %arg9[%c0_63, %c145_64] : memref<64x512xf32, #tpu.memory_space<vmem>>, vector<64x256xf32>
    %c0_65 = arith.constant 0 : index
    %c0_66 = arith.constant 0 : index
    %67 = vector.load %arg7[%c0_65, %c0_66] : memref<1x256xf32, #tpu.memory_space<vmem>>, vector<1x256xf32>
    %68 = vector.broadcast %67 : vector<1x256xf32> to vector<64x256xf32>
    %69 = arith.mulf %66, %68 : vector<64x256xf32>
    %70 = tpu.concatenate %46, %47, %51, %55, %56, %60, %64, %65, %69 in 0 : vector<64x256xf32>, vector<64x256xf32>, vector<64x256xf32>, vector<64x256xf32>, vector<64x256xf32>, vector<64x256xf32>, vector<64x256xf32>, vector<64x256xf32>, vector<64x256xf32> -> vector<576x256xf32>
    %c0_67 = arith.constant 0 : index
    %c0_68 = arith.constant 0 : index
    %71 = vector.load %arg4[%c0_67, %c0_68] : memref<64x576xf32, #tpu.memory_space<vmem>>, vector<64x576xf32>
    %cst_69 = arith.constant dense<0.000000e+00> : vector<64x256xf32>
    %72 = tpu.matmul %71, %70, %cst_69 {dimension_numbers = #tpu.dot_dimension_numbers<[1], [0], [0], [1], [0, 0, 1, 1], [], []>} : vector<64x576xf32>, vector<576x256xf32>, vector<64x256xf32> -> vector<64x256xf32>
    %c0_70 = arith.constant 0 : index
    %c0_71 = arith.constant 0 : index
    %73 = vector.load %arg5[%c0_70, %c0_71] : memref<64x1xf32, #tpu.memory_space<vmem>>, vector<64x1xf32>
    %74 = vector.broadcast %73 : vector<64x1xf32> to vector<64x256xf32>
    %75 = arith.addf %72, %74 : vector<64x256xf32>
    %76 = arith.addf %75, %1 : vector<64x256xf32>
    %c0_72 = arith.constant 0 : index
    %c0_73 = arith.constant 0 : index
    %c0_74 = arith.constant 0 : index
    %77 = vector.load %arg8[%c0_72, %c0_73, %c0_74] : memref<1x64x256xf32, #tpu.memory_space<vmem>>, vector<1x64x256xf32>
    %78 = vector.shape_cast %77 : vector<1x64x256xf32> to vector<64x256xf32>
    %79 = vector.shape_cast %76 : vector<64x256xf32> to vector<1x64x256xf32>
    tpu.vector_store %arg8[%c0_72, %c0_73, %c0_74], %79 {strides = array<i32>} : memref<1x64x256xf32, #tpu.memory_space<vmem>>, vector<1x64x256xf32>,
    return
  }
  func.func @transform_0(%arg0: i32) -> (i32, i32, i32) {
    %c0_i32 = arith.constant 0 : i32
    %c0_i32_0 = arith.constant 0 : i32
    %c0_i32_1 = arith.constant 0 : i32
    return %arg0, %c0_i32, %c0_i32_0 : i32, i32, i32
  }
  func.func @transform_1(%arg0: i32) -> (i32, i32) {
    %c0_i32 = arith.constant 0 : i32
    %c0_i32_0 = arith.constant 0 : i32
    %c0_i32_1 = arith.constant 0 : i32
    return %c0_i32, %c0_i32_0 : i32, i32
  }
  func.func @transform_2(%arg0: i32) -> (i32, i32) {
    %c0_i32 = arith.constant 0 : i32
    %c0_i32_0 = arith.constant 0 : i32
    %c0_i32_1 = arith.constant 0 : i32
    return %c0_i32, %c0_i32_0 : i32, i32
  }
  func.func @transform_3(%arg0: i32) -> (i32, i32) {
    %c0_i32 = arith.constant 0 : i32
    %c0_i32_0 = arith.constant 0 : i32
    %c0_i32_1 = arith.constant 0 : i32
    return %c0_i32, %c0_i32_0 : i32, i32
  }
  func.func @transform_4(%arg0: i32) -> (i32, i32) {
    %c0_i32 = arith.constant 0 : i32
    %c0_i32_0 = arith.constant 0 : i32
    %c0_i32_1 = arith.constant 0 : i32
    return %c0_i32, %c0_i32_0 : i32, i32
  }
  func.func @transform_5(%arg0: i32) -> (i32, i32) {
    %c0_i32 = arith.constant 0 : i32
    %c0_i32_0 = arith.constant 0 : i32
    %c0_i32_1 = arith.constant 0 : i32
    return %c0_i32, %c0_i32_0 : i32, i32
  }
  func.func @transform_6(%arg0: i32) -> (i32, i32) {
    %c0_i32 = arith.constant 0 : i32
    %c0_i32_0 = arith.constant 0 : i32
    %c0_i32_1 = arith.constant 0 : i32
    return %c0_i32, %c0_i32_0 : i32, i32
  }
  func.func @transform_7(%arg0: i32) -> (i32, i32, i32) {
    %c0_i32 = arith.constant 0 : i32
    %c0_i32_0 = arith.constant 0 : i32
    %c0_i32_1 = arith.constant 0 : i32
    return %arg0, %c0_i32, %c0_i32_0 : i32, i32, i32
  }
}

</mosaic_0001>

<llo_original>
// kernel: post_process_residual.1
$region0: #{post_process_residual.1}
  #allocation0 [shape = 'u32[]', space=smem, size = 0x4, offset = 0x4, fixed_abs, tag = 'smem constant byte address 0x4 - core index']
  #allocation1 [shape = 'u32[144,128]{1,0:T(1,128)}', space=vmem, size = 0x12000, scoped, tag = 'internal scratch']
  #allocation2 [shape = 'f32[64,512]{1,0:T(8,128)}', space=vmem, size = 0x20000, scoped, tag = 'scratch operand']
  %s0 = inlined_call_operand.vmem [shape: f32[2,64,256], index: 0, kind: input, shape index: {}]
  %s1 = inlined_call_operand.vmem [shape: f32[64,576], index: 1, kind: input, shape index: {}]
  %s2 = inlined_call_operand.vmem [shape: f32[64,1], index: 2, kind: input, shape index: {}]
  %s3 = inlined_call_operand.vmem [shape: f32[64,576], index: 3, kind: input, shape index: {}]
  %s4 = inlined_call_operand.vmem [shape: f32[64,1], index: 4, kind: input, shape index: {}]
  %s5 = inlined_call_operand.vmem [shape: f32[1,256], index: 5, kind: input, shape index: {}]
  %s6 = inlined_call_operand.vmem [shape: f32[1,256], index: 6, kind: input, shape index: {}]
  %s7 = inlined_call_operand.vmem [shape: f32[2,64,256], index: 7, kind: output, shape index: {}]
  %s8 = sld [smem:[#allocation0]]
  $region61: #{post_process_residual.1} parent=0
    _
  %s10 = ssub.s32 1, %s8
  %s11 = scalar_select 0, %s10, %s8
  loop: start=0, step=1, limit=4
  $region2: #{post_process_residual.1} parent=0 // loop_pre_header
    _
  $region3: #{post_process_residual.1} parent=0 // loop_header
    %s13 = sphi 0, %s17
    %p14 = scmp.ge.s32.totalorder %s13, 4
    %s23 = sphi 0, %s25
    %s26 = sphi 0, %s23
    %s27 = sphi 0, %s26
    %s43 = sphi 0, %s27
    %s47 = sphi 0, %s47
    %s49 = sphi 0, %s47
    %s50 = sphi 0, %s49
    %s64 = sphi 0, %s50
    %s68 = sphi 0, %s68
    %s70 = sphi 0, %s68
    %s71 = sphi 0, %s70
    %s85 = sphi 0, %s71
    %s89 = sphi 0, %s89
    %s91 = sphi 0, %s89
    %s92 = sphi 0, %s91
    %s106 = sphi 0, %s92
    %s110 = sphi 0, %s110
    %s112 = sphi 0, %s110
    %s113 = sphi 0, %s112
    %s127 = sphi 0, %s113
    %s131 = sphi 0, %s131
    %s133 = sphi 0, %s131
    %s134 = sphi 0, %s133
    %s148 = sphi 0, %s134
    %s152 = sphi 0, %s152
    %s154 = sphi 0, %s152
    %s155 = sphi 0, %s154
    %s169 = sphi 0, %s155
    %s175 = sphi 0, %s177
    %s178 = sphi 0, %s175
    %s179 = sphi 0, %s178
    %s195 = sphi 0, %s179
  $region4: #{post_process_residual.1} parent=0 // loop_header_branch
    %16 = sbr.rel (%p14) target = $region8
  $region5: #{post_process_residual.1} parent=0 // loop_body
    %s18 = ssub.s32 %s13, 1
    %s19 = ssub.s32 %s13, 2
    %s20 = sadd.s32 %s13, 1
    %s21 = ssub.s32 %s13, %s20
    %p22 = scmp.eq.s32.totalorder %s21, 0
    %s24 = sadd.s32 %s23, 1
    %s25 = scalar_select %p22, %s23, %s24
    %p28 = pneg %p22
    %p29 = scmp.eq.s32.totalorder %s13, 1
    %p30 = por %p28, %p29
    %p31 = scmp.ne.s32.totalorder %s23, %s26
    %p32 = scmp.eq.s32.totalorder %s13, 0
    %p33 = por %p31, %p32
    %p34 = scmp.ne.s32.totalorder %s23, %s26
    %p35 = scmp.eq.s32.totalorder %s18, 1
    %p36 = por %p34, %p35
    %p37 = scmp.ne.s32.totalorder %s26, %s27
    %p38 = scmp.eq.s32.totalorder %s18, 0
    %p39 = por %p37, %p38
    %p40 = scmp.ne.s32.totalorder %s26, %s27
    %p41 = scmp.eq.s32.totalorder %s19, 1
    %p42 = por %p40, %p41
    %p44 = scmp.ne.s32.totalorder %s27, %s43
    %p45 = scmp.eq.s32.totalorder %s19, 0
    %p46 = por %p44, %p45
    %s48 = sadd.s32 %s47, 1
    %p51 = scmp.eq.s32.totalorder %s13, 1
    %p52 = scmp.ne.s32.totalorder %s47, %s49
    %p53 = scmp.eq.s32.totalorder %s13, 0
    %p54 = por %p52, %p53
    %p55 = scmp.ne.s32.totalorder %s47, %s49
    %p56 = scmp.eq.s32.totalorder %s18, 1
    %p57 = por %p55, %p56
    %p58 = scmp.ne.s32.totalorder %s49, %s50
    %p59 = scmp.eq.s32.totalorder %s18, 0
    %p60 = por %p58, %p59
    %p61 = scmp.ne.s32.totalorder %s49, %s50
    %p62 = scmp.eq.s32.totalorder %s19, 1
    %p63 = por %p61, %p62
    %p65 = scmp.ne.s32.totalorder %s50, %s64
    %p66 = scmp.eq.s32.totalorder %s19, 0
    %p67 = por %p65, %p66
    %s69 = sadd.s32 %s68, 1
    %p72 = scmp.eq.s32.totalorder %s13, 1
    %p73 = scmp.ne.s32.totalorder %s68, %s70
    %p74 = scmp.eq.s32.totalorder %s13, 0
    %p75 = por %p73, %p74
    %p76 = scmp.ne.s32.totalorder %s68, %s70
    %p77 = scmp.eq.s32.totalorder %s18, 1
    %p78 = por %p76, %p77
    %p79 = scmp.ne.s32.totalorder %s70, %s71
    %p80 = scmp.eq.s32.totalorder %s18, 0
    %p81 = por %p79, %p80
    %p82 = scmp.ne.s32.totalorder %s70, %s71
    %p83 = scmp.eq.s32.totalorder %s19, 1
    %p84 = por %p82, %p83
    %p86 = scmp.ne.s32.totalorder %s71, %s85
    %p87 = scmp.eq.s32.totalorder %s19, 0
    %p88 = por %p86, %p87
    %s90 = sadd.s32 %s89, 1
    %p93 = scmp.eq.s32.totalorder %s13, 1
    %p94 = scmp.ne.s32.totalorder %s89, %s91
    %p95 = scmp.eq.s32.totalorder %s13, 0
    %p96 = por %p94, %p95
    %p97 = scmp.ne.s32.totalorder %s89, %s91
    %p98 = scmp.eq.s32.totalorder %s18, 1
    %p99 = por %p97, %p98
    %p100 = scmp.ne.s32.totalorder %s91, %s92
    %p101 = scmp.eq.s32.totalorder %s18, 0
    %p102 = por %p100, %p101
    %p103 = scmp.ne.s32.totalorder %s91, %s92
    %p104 = scmp.eq.s32.totalorder %s19, 1
    %p105 = por %p103, %p104
    %p107 = scmp.ne.s32.totalorder %s92, %s106
    %p108 = scmp.eq.s32.totalorder %s19, 0
    %p109 = por %p107, %p108
    %s111 = sadd.s32 %s110, 1
    %p114 = scmp.eq.s32.totalorder %s13, 1
    %p115 = scmp.ne.s32.totalorder %s110, %s112
    %p116 = scmp.eq.s32.totalorder %s13, 0
    %p117 = por %p115, %p116
    %p118 = scmp.ne.s32.totalorder %s110, %s112
    %p119 = scmp.eq.s32.totalorder %s18, 1
    %p120 = por %p118, %p119
    %p121 = scmp.ne.s32.totalorder %s112, %s113
    %p122 = scmp.eq.s32.totalorder %s18, 0
    %p123 = por %p121, %p122
    %p124 = scmp.ne.s32.totalorder %s112, %s113
    %p125 = scmp.eq.s32.totalorder %s19, 1
    %p126 = por %p124, %p125
    %p128 = scmp.ne.s32.totalorder %s113, %s127
    %p129 = scmp.eq.s32.totalorder %s19, 0
    %p130 = por %p128, %p129
    %s132 = sadd.s32 %s131, 1
    %p135 = scmp.eq.s32.totalorder %s13, 1
    %p136 = scmp.ne.s32.totalorder %s131, %s133
    %p137 = scmp.eq.s32.totalorder %s13, 0
    %p138 = por %p136, %p137
    %p139 = scmp.ne.s32.totalorder %s131, %s133
    %p140 = scmp.eq.s32.totalorder %s18, 1
    %p141 = por %p139, %p140
    %p142 = scmp.ne.s32.totalorder %s133, %s134
    %p143 = scmp.eq.s32.totalorder %s18, 0
    %p144 = por %p142, %p143
    %p145 = scmp.ne.s32.totalorder %s133, %s134
    %p146 = scmp.eq.s32.totalorder %s19, 1
    %p147 = por %p145, %p146
    %p149 = scmp.ne.s32.totalorder %s134, %s148
    %p150 = scmp.eq.s32.totalorder %s19, 0
    %p151 = por %p149, %p150
    %s153 = sadd.s32 %s152, 1
    %p156 = scmp.eq.s32.totalorder %s13, 1
    %p157 = scmp.ne.s32.totalorder %s152, %s154
    %p158 = scmp.eq.s32.totalorder %s13, 0
    %p159 = por %p157, %p158
    %p160 = scmp.ne.s32.totalorder %s152, %s154
    %p161 = scmp.eq.s32.totalorder %s18, 1
    %p162 = por %p160, %p161
    %p163 = scmp.ne.s32.totalorder %s154, %s155
    %p164 = scmp.eq.s32.totalorder %s18, 0
    %p165 = por %p163, %p164
    %p166 = scmp.ne.s32.totalorder %s154, %s155
    %p167 = scmp.eq.s32.totalorder %s19, 1
    %p168 = por %p166, %p167
    %p170 = scmp.ne.s32.totalorder %s155, %s169
    %p171 = scmp.eq.s32.totalorder %s19, 0
    %p172 = por %p170, %p171
    %s173 = ssub.s32 %s13, %s20
    %p174 = scmp.eq.s32.totalorder %s173, 0
    %s176 = sadd.s32 %s175, 1
    %s177 = scalar_select %p174, %s175, %s176
    %p180 = pneg %p174
    %p181 = scmp.eq.s32.totalorder %s13, 1
    %p182 = por %p180, %p181
    %p183 = scmp.ne.s32.totalorder %s175, %s178
    %p184 = scmp.eq.s32.totalorder %s13, 0
    %p185 = por %p183, %p184
    %p186 = scmp.ne.s32.totalorder %s175, %s178
    %p187 = scmp.eq.s32.totalorder %s18, 1
    %p188 = por %p186, %p187
    %p189 = scmp.ne.s32.totalorder %s178, %s179
    %p190 = scmp.eq.s32.totalorder %s18, 0
    %p191 = por %p189, %p190
    %p192 = scmp.ne.s32.totalorder %s178, %s179
    %p193 = scmp.eq.s32.totalorder %s19, 1
    %p194 = por %p192, %p193
    %p196 = scmp.ne.s32.totalorder %s179, %s195
    %p197 = scmp.eq.s32.totalorder %s19, 0
    %p198 = por %p196, %p197
    %p199 = scmp.le.s32.totalorder 1, %s13
    %p200 = scmp.lt.s32.totalorder %s13, 3
    %p201 = pnand %p199, %p200
    %p202 = pneg %p201
    // Predicated region
    $region9: #{post_process_residual.1} parent=5 // pred_check
      _
    $region10: #{post_process_residual.1} parent=5 // pred_check_branch
      %204 = sbr.rel (%p201) target = $region12
    $region11: #{post_process_residual.1} parent=5 // pred_region
      %s205 = ssub.s32 %s13, 1
      // Predicated region
      $region13: #{post_process_residual.1} parent=11 // pred_check
        %p206 = pneg %p60
      $region14: #{post_process_residual.1} parent=11 // pred_check_branch
        %208 = sbr.rel (%p206) target = $region16
      $region15: #{post_process_residual.1} parent=11 // pred_region
        _
      $region16: #{post_process_residual.1} parent=11 // pred_fallthru
        _
      // Predicated region
      $region17: #{post_process_residual.1} parent=11 // pred_check
        %p209 = pneg %p81
      $region18: #{post_process_residual.1} parent=11 // pred_check_branch
        %211 = sbr.rel (%p209) target = $region20
      $region19: #{post_process_residual.1} parent=11 // pred_region
        _
      $region20: #{post_process_residual.1} parent=11 // pred_fallthru
        _
      // Predicated region
      $region21: #{post_process_residual.1} parent=11 // pred_check
        %p212 = pneg %p102
      $region22: #{post_process_residual.1} parent=11 // pred_check_branch
        %214 = sbr.rel (%p212) target = $region24
      $region23: #{post_process_residual.1} parent=11 // pred_region
        _
      $region24: #{post_process_residual.1} parent=11 // pred_fallthru
        _
      // Predicated region
      $region25: #{post_process_residual.1} parent=11 // pred_check
        %p215 = pneg %p123
      $region26: #{post_process_residual.1} parent=11 // pred_check_branch
        %217 = sbr.rel (%p215) target = $region28
      $region27: #{post_process_residual.1} parent=11 // pred_region
        _
      $region28: #{post_process_residual.1} parent=11 // pred_fallthru
        _
      // Predicated region
      $region29: #{post_process_residual.1} parent=11 // pred_check
        %p218 = pneg %p144
      $region30: #{post_process_residual.1} parent=11 // pred_check_branch
        %220 = sbr.rel (%p218) target = $region32
      $region31: #{post_process_residual.1} parent=11 // pred_region
        _
      $region32: #{post_process_residual.1} parent=11 // pred_fallthru
        _
      // Predicated region
      $region33: #{post_process_residual.1} parent=11 // pred_check
        %p221 = pneg %p165
      $region34: #{post_process_residual.1} parent=11 // pred_check_branch
        %223 = sbr.rel (%p221) target = $region36
      $region35: #{post_process_residual.1} parent=11 // pred_region
        _
      $region36: #{post_process_residual.1} parent=11 // pred_fallthru
        _
    $region12: #{post_process_residual.1} parent=5 // pred_fallthru
      _
    %p224 = scmp.lt.s32.totalorder %s13, 2
    // Predicated region
    $region37: #{post_process_residual.1} parent=5 // pred_check
      %p225 = pneg %p224
    $region38: #{post_process_residual.1} parent=5 // pred_check_branch
      %227 = sbr.rel (%p225) target = $region40
    $region39: #{post_process_residual.1} parent=5 // pred_region
      // Predicated region
      $region41: #{post_process_residual.1} parent=39 // pred_check
        %p228 = pneg %p33
      $region42: #{post_process_residual.1} parent=39 // pred_check_branch
        %230 = sbr.rel (%p228) target = $region44
      $region43: #{post_process_residual.1} parent=39 // pred_region
        %p231 = scmp.lt.s32.totalorder %s13, 1
        %s232 = scalar_select %p231, %s13, 1
        %s233 = smul.addr %s232, 16
        %s234 = smul.addr %s233, 8
        %s235 = scalar_lea.vmem %s0, %s234
      $region44: #{post_process_residual.1} parent=39 // pred_fallthru
        _
    $region40: #{post_process_residual.1} parent=5 // pred_fallthru
      _
    %p236 = scmp.le.s32.totalorder 1, %s13
    %p237 = scmp.lt.s32.totalorder %s13, 3
    %p238 = pnand %p236, %p237
    %p239 = pneg %p238
    // Predicated region
    $region45: #{post_process_residual.1} parent=5 // pred_check
      _
    $region46: #{post_process_residual.1} parent=5 // pred_check_branch
      %241 = sbr.rel (%p238) target = $region48
    $region47: #{post_process_residual.1} parent=5 // pred_region
      %s242 = ssub.s32 %s13, 1
      %p243 = scmp.lt.s32.totalorder %s18, 1
      %s244 = scalar_select %p243, %s18, 1
      %s245 = smul.addr %s244, 16
      %s246 = smul.addr %s245, 8
      %s247 = scalar_lea.vmem %s0, %s246
      %p248 = pneg %p39
      %p249 = pneg %p36
      %p250 = pneg %p60
      %p251 = pneg %p57
      %p252 = pneg %p81
      %p253 = pneg %p78
      %p254 = pneg %p102
      %p255 = pneg %p99
      %p256 = pneg %p123
      %p257 = pneg %p120
      %p258 = pneg %p144
      %p259 = pneg %p141
      %p260 = pneg %p165
      %p261 = pneg %p162
      %p262 = pneg %p191
      %p263 = pneg %p188
      %p264 = scmp.lt.s32.totalorder %s18, 1
      %s265 = scalar_select %p264, %s18, 1
      %s266 = smul.addr %s265, 16
      %s267 = smul.addr %s266, 8
      %s268 = scalar_lea.vmem %s7, %s267
      %p269 = scmp.lt.s32.totalorder %s18, 1
      %s270 = scalar_select %p269, %s18, 1
      %s271 = smul.addr %s270, 16
      %s272 = smul.addr %s271, 8
      %s273 = scalar_lea.vmem %s0, %s272
      %p274 = scmp.lt.s32.totalorder %s18, 1
      %s275 = scalar_select %p274, %s18, 1
      %s276 = smul.addr %s275, 16
      %s277 = smul.addr %s276, 8
      %s278 = scalar_lea.vmem %s7, %s277
      %v279 = vld [vmem:[%s273] sm:$0xff]
      %v280 = vld [vmem:[%s273 + $0x8] sm:$0xff]
      %v281 = vld [vmem:[%s273 + $0x10] sm:$0xff]
      %v282 = vld [vmem:[%s273 + $0x18] sm:$0xff]
      %v283 = vld [vmem:[%s273 + $0x20] sm:$0xff]
      %v284 = vld [vmem:[%s273 + $0x28] sm:$0xff]
      %v285 = vld [vmem:[%s273 + $0x30] sm:$0xff]
      %v286 = vld [vmem:[%s273 + $0x38] sm:$0xff]
      %v287 = vld [vmem:[%s273 + $0x40] sm:$0xff]
      %v288 = vld [vmem:[%s273 + $0x48] sm:$0xff]
      %v289 = vld [vmem:[%s273 + $0x50] sm:$0xff]
      %v290 = vld [vmem:[%s273 + $0x58] sm:$0xff]
      %v291 = vld [vmem:[%s273 + $0x60] sm:$0xff]
      %v292 = vld [vmem:[%s273 + $0x68] sm:$0xff]
      %v293 = vld [vmem:[%s273 + $0x70] sm:$0xff]
      %v294 = vld [vmem:[%s273 + $0x78] sm:$0xff]
      %295 = vst [vmem:[#allocation2] sm:$0xff] 0.0
      %296 = vst [vmem:[#allocation2 + $0x20] sm:$0xff] 0.0
      %297 = vst [vmem:[#allocation2 + $0x40] sm:$0xff] 0.0
      %298 = vst [vmem:[#allocation2 + $0x60] sm:$0xff] 0.0
      %299 = vst [vmem:[#allocation2 + $0x80] sm:$0xff] 0.0
      %300 = vst [vmem:[#allocation2 + $0xa0] sm:$0xff] 0.0
      %301 = vst [vmem:[#allocation2 + $0xc0] sm:$0xff] 0.0
      %302 = vst [vmem:[#allocation2 + $0xe0] sm:$0xff] 0.0
      %303 = vst [vmem:[#allocation2 + $0x18] sm:$0xff] 0.0
      %304 = vst [vmem:[#allocation2 + $0x38] sm:$0xff] 0.0
      %305 = vst [vmem:[#allocation2 + $0x58] sm:$0xff] 0.0
      %306 = vst [vmem:[#allocation2 + $0x78] sm:$0xff] 0.0
      %307 = vst [vmem:[#allocation2 + $0x98] sm:$0xff] 0.0
      %308 = vst [vmem:[#allocation2 + $0xb8] sm:$0xff] 0.0
      %309 = vst [vmem:[#allocation2 + $0xd8] sm:$0xff] 0.0
      %310 = vst [vmem:[#allocation2 + $0xf8] sm:$0xff] 0.0
      %311 = vst [vmem:[#allocation2 + $0x8] sm:$0xff] %v279
      %312 = vst [vmem:[#allocation2 + $0x10] sm:$0xff] %v280
      %313 = vst [vmem:[#allocation2 + $0x28] sm:$0xff] %v281
      %314 = vst [vmem:[#allocation2 + $0x30] sm:$0xff] %v282
      %315 = vst [vmem:[#allocation2 + $0x48] sm:$0xff] %v283
      %316 = vst [vmem:[#allocation2 + $0x50] sm:$0xff] %v284
      %317 = vst [vmem:[#allocation2 + $0x68] sm:$0xff] %v285
      %318 = vst [vmem:[#allocation2 + $0x70] sm:$0xff] %v286
      %319 = vst [vmem:[#allocation2 + $0x88] sm:$0xff] %v287
      %320 = vst [vmem:[#allocation2 + $0x90] sm:$0xff] %v288
      %321 = vst [vmem:[#allocation2 + $0xa8] sm:$0xff] %v289
      %322 = vst [vmem:[#allocation2 + $0xb0] sm:$0xff] %v290
      %323 = vst [vmem:[#allocation2 + $0xc8] sm:$0xff] %v291
      %324 = vst [vmem:[#allocation2 + $0xd0] sm:$0xff] %v292
      %325 = vst [vmem:[#allocation2 + $0xe8] sm:$0xff] %v293
      %326 = vst [vmem:[#allocation2 + $0xf0] sm:$0xff] %v294
      %v327 = vld [vmem:[#allocation2] sm:$0xff]
      %v328 = vld [vmem:[#allocation2 + $0x8] sm:$0xff]
      %v329 = vld [vmem:[#allocation2 + $0x10] sm:$0xff]
      %v330 = vld [vmem:[#allocation2 + $0x20] sm:$0xff]
      %v331 = vld [vmem:[#allocation2 + $0x28] sm:$0xff]
      %v332 = vld [vmem:[#allocation2 + $0x30] sm:$0xff]
      %v333 = vld [vmem:[#allocation2 + $0x40] sm:$0xff]
      %v334 = vld [vmem:[#allocation2 + $0x48] sm:$0xff]
      %v335 = vld [vmem:[#allocation2 + $0x50] sm:$0xff]
      %v336 = vld [vmem:[#allocation2 + $0x60] sm:$0xff]
      %v337 = vld [vmem:[#allocation2 + $0x68] sm:$0xff]
      %v338 = vld [vmem:[#allocation2 + $0x70] sm:$0xff]
      %v339 = vld [vmem:[#allocation2 + $0x80] sm:$0xff]
      %v340 = vld [vmem:[#allocation2 + $0x88] sm:$0xff]
      %v341 = vld [vmem:[#allocation2 + $0x90] sm:$0xff]
      %v342 = vld [vmem:[#allocation2 + $0xa0] sm:$0xff]
      %v343 = vld [vmem:[#allocation2 + $0xa8] sm:$0xff]
      %v344 = vld [vmem:[#allocation2 + $0xb0] sm:$0xff]
      %v345 = vld [vmem:[#allocation2 + $0xc0] sm:$0xff]
      %v346 = vld [vmem:[#allocation2 + $0xc8] sm:$0xff]
      %v347 = vld [vmem:[#allocation2 + $0xd0] sm:$0xff]
      %v348 = vld [vmem:[#allocation2 + $0xe0] sm:$0xff]
      %v349 = vld [vmem:[#allocation2 + $0xe8] sm:$0xff]
      %v350 = vld [vmem:[#allocation2 + $0xf0] sm:$0xff]
      %v351 = vld [vmem:[%s5] sm:$0x3]
      %v353 = vlaneseq
      %v354 = vshrl.u32 %v353, 7
      %v355 = vsub.s32 0, %v354
      %v356 = vrot.slane %v351, %v355
      %v357 = vlaneseq
      %v358 = vshrl.u32 %v357, 7
      %v359 = vsub.s32 1, %v358
      %v360 = vrot.slane %v351, %v359
      %361 = vrot.lane.b32.xlu0 %v356, 111
      %v362 = vpop.permute.xlu0 %361
      %363 = vrot.lane.b32.xlu0 %v360, 111
      %v364 = vpop.permute.xlu0 %363
      %vm365 = vcmask 908288
      %v366 = vsel %vm365, %v362, %v364
      %v370 = vmul.f32 %v327, %v362
      %v371 = vmul.f32 %v328, %v366
      %v372 = vmul.f32 %v329, %v364
      %v373 = vmul.f32 %v330, %v362
      %v374 = vmul.f32 %v331, %v366
      %v375 = vmul.f32 %v332, %v364
      %v376 = vmul.f32 %v333, %v362
      %v377 = vmul.f32 %v334, %v366
      %v378 = vmul.f32 %v335, %v364
      %v379 = vmul.f32 %v336, %v362
      %v380 = vmul.f32 %v337, %v366
      %v381 = vmul.f32 %v338, %v364
      %v382 = vmul.f32 %v339, %v362
      %v383 = vmul.f32 %v340, %v366
      %v384 = vmul.f32 %v341, %v364
      %v385 = vmul.f32 %v342, %v362
      %v386 = vmul.f32 %v343, %v366
      %v387 = vmul.f32 %v344, %v364
      %v388 = vmul.f32 %v345, %v362
      %v389 = vmul.f32 %v346, %v366
      %v390 = vmul.f32 %v347, %v364
      %v391 = vmul.f32 %v348, %v362
      %v392 = vmul.f32 %v349, %v366
      %v393 = vmul.f32 %v350, %v364
      %v394 = vld [vmem:[%s6] sm:$0x3]
      %v396 = vlaneseq
      %v397 = vshrl.u32 %v396, 7
      %v398 = vsub.s32 0, %v397
      %v399 = vrot.slane %v394, %v398
      %v400 = vlaneseq
      %v401 = vshrl.u32 %v400, 7
      %v402 = vsub.s32 1, %v401
      %v403 = vrot.slane %v394, %v402
      %404 = vrot.lane.b32.xlu0 %v399, 113
      %v405 = vpop.permute.xlu0 %404
      %406 = vrot.lane.b32.xlu0 %v403, 113
      %v407 = vpop.permute.xlu0 %406
      %vm408 = vcmask 924672
      %v409 = vsel %vm408, %v405, %v407
      %v413 = vmul.f32 %v327, %v405
      %v414 = vmul.f32 %v328, %v409
      %v415 = vmul.f32 %v329, %v407
      %v416 = vmul.f32 %v330, %v405
      %v417 = vmul.f32 %v331, %v409
      %v418 = vmul.f32 %v332, %v407
      %v419 = vmul.f32 %v333, %v405
      %v420 = vmul.f32 %v334, %v409
      %v421 = vmul.f32 %v335, %v407
      %v422 = vmul.f32 %v336, %v405
      %v423 = vmul.f32 %v337, %v409
      %v424 = vmul.f32 %v338, %v407
      %v425 = vmul.f32 %v339, %v405
      %v426 = vmul.f32 %v340, %v409
      %v427 = vmul.f32 %v341, %v407
      %v428 = vmul.f32 %v342, %v405
      %v429 = vmul.f32 %v343, %v409
      %v430 = vmul.f32 %v344, %v407
      %v431 = vmul.f32 %v345, %v405
      %v432 = vmul.f32 %v346, %v409
      %v433 = vmul.f32 %v347, %v407
      %v434 = vmul.f32 %v348, %v405
      %v435 = vmul.f32 %v349, %v409
      %v436 = vmul.f32 %v350, %v407
      %437 = vrot.lane.b32.xlu0 %v356, 127
      %v438 = vpop.permute.xlu0 %437
      %439 = vrot.lane.b32.xlu0 %v360, 127
      %v440 = vpop.permute.xlu0 %439
      %vm441 = vcmask 1039360
      %v442 = vsel %vm441, %v438, %v440
      %v446 = vmul.f32 %v327, %v438
      %v447 = vmul.f32 %v328, %v442
      %v448 = vmul.f32 %v329, %v440
      %v449 = vmul.f32 %v330, %v438
      %v450 = vmul.f32 %v331, %v442
      %v451 = vmul.f32 %v332, %v440
      %v452 = vmul.f32 %v333, %v438
      %v453 = vmul.f32 %v334, %v442
      %v454 = vmul.f32 %v335, %v440
      %v455 = vmul.f32 %v336, %v438
      %v456 = vmul.f32 %v337, %v442
      %v457 = vmul.f32 %v338, %v440
      %v458 = vmul.f32 %v339, %v438
      %v459 = vmul.f32 %v340, %v442
      %v460 = vmul.f32 %v341, %v440
      %v461 = vmul.f32 %v342, %v438
      %v462 = vmul.f32 %v343, %v442
      %v463 = vmul.f32 %v344, %v440
      %v464 = vmul.f32 %v345, %v438
      %v465 = vmul.f32 %v346, %v442
      %v466 = vmul.f32 %v347, %v440
      %v467 = vmul.f32 %v348, %v438
      %v468 = vmul.f32 %v349, %v442
      %v469 = vmul.f32 %v350, %v440
      %v470 = vld [vmem:[#allocation2 + $0x8] sm:$0xff]
      %v471 = vld [vmem:[#allocation2 + $0x10] sm:$0xff]
      %v472 = vld [vmem:[#allocation2 + $0x18] sm:$0xff]
      %v473 = vld [vmem:[#allocation2 + $0x28] sm:$0xff]
      %v474 = vld [vmem:[#allocation2 + $0x30] sm:$0xff]
      %v475 = vld [vmem:[#allocation2 + $0x38] sm:$0xff]
      %v476 = vld [vmem:[#allocation2 + $0x48] sm:$0xff]
      %v477 = vld [vmem:[#allocation2 + $0x50] sm:$0xff]
      %v478 = vld [vmem:[#allocation2 + $0x58] sm:$0xff]
      %v479 = vld [vmem:[#allocation2 + $0x68] sm:$0xff]
      %v480 = vld [vmem:[#allocation2 + $0x70] sm:$0xff]
      %v481 = vld [vmem:[#allocation2 + $0x78] sm:$0xff]
      %v482 = vld [vmem:[#allocation2 + $0x88] sm:$0xff]
      %v483 = vld [vmem:[#allocation2 + $0x90] sm:$0xff]
      %v484 = vld [vmem:[#allocation2 + $0x98] sm:$0xff]
      %v485 = vld [vmem:[#allocation2 + $0xa8] sm:$0xff]
      %v486 = vld [vmem:[#allocation2 + $0xb0] sm:$0xff]
      %v487 = vld [vmem:[#allocation2 + $0xb8] sm:$0xff]
      %v488 = vld [vmem:[#allocation2 + $0xc8] sm:$0xff]
      %v489 = vld [vmem:[#allocation2 + $0xd0] sm:$0xff]
      %v490 = vld [vmem:[#allocation2 + $0xd8] sm:$0xff]
      %v491 = vld [vmem:[#allocation2 + $0xe8] sm:$0xff]
      %v492 = vld [vmem:[#allocation2 + $0xf0] sm:$0xff]
      %v493 = vld [vmem:[#allocation2 + $0xf8] sm:$0xff]
      %494 = vrot.lane.b32.xlu0 %v399, 1
      %v495 = vpop.permute.xlu0 %494
      %496 = vrot.lane.b32.xlu0 %v403, 1
      %v497 = vpop.permute.xlu0 %496
      %vm498 = vcmask 7168
      %v499 = vsel %vm498, %v495, %v497
      %v503 = vmul.f32 %v470, %v495
      %v504 = vmul.f32 %v471, %v499
      %v505 = vmul.f32 %v472, %v497
      %v506 = vmul.f32 %v473, %v495
      %v507 = vmul.f32 %v474, %v499
      %v508 = vmul.f32 %v475, %v497
      %v509 = vmul.f32 %v476, %v495
      %v510 = vmul.f32 %v477, %v499
      %v511 = vmul.f32 %v478, %v497
      %v512 = vmul.f32 %v479, %v495
      %v513 = vmul.f32 %v480, %v499
      %v514 = vmul.f32 %v481, %v497
      %v515 = vmul.f32 %v482, %v495
      %v516 = vmul.f32 %v483, %v499
      %v517 = vmul.f32 %v484, %v497
      %v518 = vmul.f32 %v485, %v495
      %v519 = vmul.f32 %v486, %v499
      %v520 = vmul.f32 %v487, %v497
      %v521 = vmul.f32 %v488, %v495
      %v522 = vmul.f32 %v489, %v499
      %v523 = vmul.f32 %v490, %v497
      %v524 = vmul.f32 %v491, %v495
      %v525 = vmul.f32 %v492, %v499
      %v526 = vmul.f32 %v493, %v497
      %527 = vrot.lane.b32.xlu0 %v356, 15
      %v528 = vpop.permute.xlu0 %527
      %529 = vrot.lane.b32.xlu0 %v360, 15
      %v530 = vpop.permute.xlu0 %529
      %vm531 = vcmask 121856
      %v532 = vsel %vm531, %v528, %v530
      %v536 = vmul.f32 %v470, %v528
      %v537 = vmul.f32 %v471, %v532
      %v538 = vmul.f32 %v472, %v530
      %v539 = vmul.f32 %v473, %v528
      %v540 = vmul.f32 %v474, %v532
      %v541 = vmul.f32 %v475, %v530
      %v542 = vmul.f32 %v476, %v528
      %v543 = vmul.f32 %v477, %v532
      %v544 = vmul.f32 %v478, %v530
      %v545 = vmul.f32 %v479, %v528
      %v546 = vmul.f32 %v480, %v532
      %v547 = vmul.f32 %v481, %v530
      %v548 = vmul.f32 %v482, %v528
      %v549 = vmul.f32 %v483, %v532
      %v550 = vmul.f32 %v484, %v530
      %v551 = vmul.f32 %v485, %v528
      %v552 = vmul.f32 %v486, %v532
      %v553 = vmul.f32 %v487, %v530
      %v554 = vmul.f32 %v488, %v528
      %v555 = vmul.f32 %v489, %v532
      %v556 = vmul.f32 %v490, %v530
      %v557 = vmul.f32 %v491, %v528
      %v558 = vmul.f32 %v492, %v532
      %v559 = vmul.f32 %v493, %v530
      %560 = vrot.lane.b32.xlu0 %v399, 17
      %v561 = vpop.permute.xlu0 %560
      %562 = vrot.lane.b32.xlu0 %v403, 17
      %v563 = vpop.permute.xlu0 %562
      %vm564 = vcmask 138240
      %v565 = vsel %vm564, %v561, %v563
      %v569 = vmul.f32 %v470, %v561
      %v570 = vmul.f32 %v471, %v565
      %v571 = vmul.f32 %v472, %v563
      %v572 = vmul.f32 %v473, %v561
      %v573 = vmul.f32 %v474, %v565
      %v574 = vmul.f32 %v475, %v563
      %v575 = vmul.f32 %v476, %v561
      %v576 = vmul.f32 %v477, %v565
      %v577 = vmul.f32 %v478, %v563
      %v578 = vmul.f32 %v479, %v561
      %v579 = vmul.f32 %v480, %v565
      %v580 = vmul.f32 %v481, %v563
      %v581 = vmul.f32 %v482, %v561
      %v582 = vmul.f32 %v483, %v565
      %v583 = vmul.f32 %v484, %v563
      %v584 = vmul.f32 %v485, %v561
      %v585 = vmul.f32 %v486, %v565
      %v586 = vmul.f32 %v487, %v563
      %v587 = vmul.f32 %v488, %v561
      %v588 = vmul.f32 %v489, %v565
      %v589 = vmul.f32 %v490, %v563
      %v590 = vmul.f32 %v491, %v561
      %v591 = vmul.f32 %v492, %v565
      %v592 = vmul.f32 %v493, %v563
      %617 = vrot.lane.b32.xlu0 %v327, 127
      %v618 = vpop.permute.xlu0 %617
      %619 = vrot.lane.b32.xlu0 %v328, 127
      %v620 = vpop.permute.xlu0 %619
      %621 = vrot.lane.b32.xlu0 %v329, 127
      %v622 = vpop.permute.xlu0 %621
      %623 = vrot.lane.b32.xlu0 %v330, 127
      %v624 = vpop.permute.xlu0 %623
      %625 = vrot.lane.b32.xlu0 %v331, 127
      %v626 = vpop.permute.xlu0 %625
      %627 = vrot.lane.b32.xlu0 %v332, 127
      %v628 = vpop.permute.xlu0 %627
      %629 = vrot.lane.b32.xlu0 %v333, 127
      %v630 = vpop.permute.xlu0 %629
      %631 = vrot.lane.b32.xlu0 %v334, 127
      %v632 = vpop.permute.xlu0 %631
      %633 = vrot.lane.b32.xlu0 %v335, 127
      %v634 = vpop.permute.xlu0 %633
      %635 = vrot.lane.b32.xlu0 %v336, 127
      %v636 = vpop.permute.xlu0 %635
      %637 = vrot.lane.b32.xlu0 %v337, 127
      %v638 = vpop.permute.xlu0 %637
      %639 = vrot.lane.b32.xlu0 %v338, 127
      %v640 = vpop.permute.xlu0 %639
      %641 = vrot.lane.b32.xlu0 %v339, 127
      %v642 = vpop.permute.xlu0 %641
      %643 = vrot.lane.b32.xlu0 %v340, 127
      %v644 = vpop.permute.xlu0 %643
      %645 = vrot.lane.b32.xlu0 %v341, 127
      %v646 = vpop.permute.xlu0 %645
      %647 = vrot.lane.b32.xlu0 %v342, 127
      %v648 = vpop.permute.xlu0 %647
      %649 = vrot.lane.b32.xlu0 %v343, 127
      %v650 = vpop.permute.xlu0 %649
      %651 = vrot.lane.b32.xlu0 %v344, 127
      %v652 = vpop.permute.xlu0 %651
      %653 = vrot.lane.b32.xlu0 %v345, 127
      %v654 = vpop.permute.xlu0 %653
      %655 = vrot.lane.b32.xlu0 %v346, 127
      %v656 = vpop.permute.xlu0 %655
      %657 = vrot.lane.b32.xlu0 %v347, 127
      %v658 = vpop.permute.xlu0 %657
      %659 = vrot.lane.b32.xlu0 %v348, 127
      %v660 = vpop.permute.xlu0 %659
      %661 = vrot.lane.b32.xlu0 %v349, 127
      %v662 = vpop.permute.xlu0 %661
      %663 = vrot.lane.b32.xlu0 %v350, 127
      %v664 = vpop.permute.xlu0 %663
      %v665 = vsel %vm441, %v618, %v620
      %v666 = vsel %vm441, %v620, %v622
      %v667 = vsel %vm441, %v624, %v626
      %v668 = vsel %vm441, %v626, %v628
      %v669 = vsel %vm441, %v630, %v632
      %v670 = vsel %vm441, %v632, %v634
      %v671 = vsel %vm441, %v636, %v638
      %v672 = vsel %vm441, %v638, %v640
      %v673 = vsel %vm441, %v642, %v644
      %v674 = vsel %vm441, %v644, %v646
      %v675 = vsel %vm441, %v648, %v650
      %v676 = vsel %vm441, %v650, %v652
      %v677 = vsel %vm441, %v654, %v656
      %v678 = vsel %vm441, %v656, %v658
      %v679 = vsel %vm441, %v660, %v662
      %v680 = vsel %vm441, %v662, %v664
      %705 = vrot.lane.b32.xlu0 %v413, 126
      %v706 = vpop.permute.xlu0 %705
      %707 = vrot.lane.b32.xlu0 %v414, 126
      %v708 = vpop.permute.xlu0 %707
      %709 = vrot.lane.b32.xlu0 %v415, 126
      %v710 = vpop.permute.xlu0 %709
      %711 = vrot.lane.b32.xlu0 %v416, 126
      %v712 = vpop.permute.xlu0 %711
      %713 = vrot.lane.b32.xlu0 %v417, 126
      %v714 = vpop.permute.xlu0 %713
      %715 = vrot.lane.b32.xlu0 %v418, 126
      %v716 = vpop.permute.xlu0 %715
      %717 = vrot.lane.b32.xlu0 %v419, 126
      %v718 = vpop.permute.xlu0 %717
      %719 = vrot.lane.b32.xlu0 %v420, 126
      %v720 = vpop.permute.xlu0 %719
      %721 = vrot.lane.b32.xlu0 %v421, 126
      %v722 = vpop.permute.xlu0 %721
      %723 = vrot.lane.b32.xlu0 %v422, 126
      %v724 = vpop.permute.xlu0 %723
      %725 = vrot.lane.b32.xlu0 %v423, 126
      %v726 = vpop.permute.xlu0 %725
      %727 = vrot.lane.b32.xlu0 %v424, 126
      %v728 = vpop.permute.xlu0 %727
      %729 = vrot.lane.b32.xlu0 %v425, 126
      %v730 = vpop.permute.xlu0 %729
      %731 = vrot.lane.b32.xlu0 %v426, 126
      %v732 = vpop.permute.xlu0 %731
      %733 = vrot.lane.b32.xlu0 %v427, 126
      %v734 = vpop.permute.xlu0 %733
      %735 = vrot.lane.b32.xlu0 %v428, 126
      %v736 = vpop.permute.xlu0 %735
      %737 = vrot.lane.b32.xlu0 %v429, 126
      %v738 = vpop.permute.xlu0 %737
      %739 = vrot.lane.b32.xlu0 %v430, 126
      %v740 = vpop.permute.xlu0 %739
      %741 = vrot.lane.b32.xlu0 %v431, 126
      %v742 = vpop.permute.xlu0 %741
      %743 = vrot.lane.b32.xlu0 %v432, 126
      %v744 = vpop.permute.xlu0 %743
      %745 = vrot.lane.b32.xlu0 %v433, 126
      %v746 = vpop.permute.xlu0 %745
      %747 = vrot.lane.b32.xlu0 %v434, 126
      %v748 = vpop.permute.xlu0 %747
      %749 = vrot.lane.b32.xlu0 %v435, 126
      %v750 = vpop.permute.xlu0 %749
      %751 = vrot.lane.b32.xlu0 %v436, 126
      %v752 = vpop.permute.xlu0 %751
      %vm753 = vcmask 1031168
      %v754 = vsel %vm753, %v706, %v708
      %v755 = vsel %vm753, %v708, %v710
      %v756 = vsel %vm753, %v712, %v714
      %v757 = vsel %vm753, %v714, %v716
      %v758 = vsel %vm753, %v718, %v720
      %v759 = vsel %vm753, %v720, %v722
      %v760 = vsel %vm753, %v724, %v726
      %v761 = vsel %vm753, %v726, %v728
      %v762 = vsel %vm753, %v730, %v732
      %v763 = vsel %vm753, %v732, %v734
      %v764 = vsel %vm753, %v736, %v738
      %v765 = vsel %vm753, %v738, %v740
      %v766 = vsel %vm753, %v742, %v744
      %v767 = vsel %vm753, %v744, %v746
      %v768 = vsel %vm753, %v748, %v750
      %v769 = vsel %vm753, %v750, %v752
      %794 = vrot.lane.b32.xlu0 %v446, 112
      %v795 = vpop.permute.xlu0 %794
      %796 = vrot.lane.b32.xlu0 %v447, 112
      %v797 = vpop.permute.xlu0 %796
      %798 = vrot.lane.b32.xlu0 %v448, 112
      %v799 = vpop.permute.xlu0 %798
      %800 = vrot.lane.b32.xlu0 %v449, 112
      %v801 = vpop.permute.xlu0 %800
      %802 = vrot.lane.b32.xlu0 %v450, 112
      %v803 = vpop.permute.xlu0 %802
      %804 = vrot.lane.b32.xlu0 %v451, 112
      %v805 = vpop.permute.xlu0 %804
      %806 = vrot.lane.b32.xlu0 %v452, 112
      %v807 = vpop.permute.xlu0 %806
      %808 = vrot.lane.b32.xlu0 %v453, 112
      %v809 = vpop.permute.xlu0 %808
      %810 = vrot.lane.b32.xlu0 %v454, 112
      %v811 = vpop.permute.xlu0 %810
      %812 = vrot.lane.b32.xlu0 %v455, 112
      %v813 = vpop.permute.xlu0 %812
      %814 = vrot.lane.b32.xlu0 %v456, 112
      %v815 = vpop.permute.xlu0 %814
      %816 = vrot.lane.b32.xlu0 %v457, 112
      %v817 = vpop.permute.xlu0 %816
      %818 = vrot.lane.b32.xlu0 %v458, 112
      %v819 = vpop.permute.xlu0 %818
      %820 = vrot.lane.b32.xlu0 %v459, 112
      %v821 = vpop.permute.xlu0 %820
      %822 = vrot.lane.b32.xlu0 %v460, 112
      %v823 = vpop.permute.xlu0 %822
      %824 = vrot.lane.b32.xlu0 %v461, 112
      %v825 = vpop.permute.xlu0 %824
      %826 = vrot.lane.b32.xlu0 %v462, 112
      %v827 = vpop.permute.xlu0 %826
      %828 = vrot.lane.b32.xlu0 %v463, 112
      %v829 = vpop.permute.xlu0 %828
      %830 = vrot.lane.b32.xlu0 %v464, 112
      %v831 = vpop.permute.xlu0 %830
      %832 = vrot.lane.b32.xlu0 %v465, 112
      %v833 = vpop.permute.xlu0 %832
      %834 = vrot.lane.b32.xlu0 %v466, 112
      %v835 = vpop.permute.xlu0 %834
      %836 = vrot.lane.b32.xlu0 %v467, 112
      %v837 = vpop.permute.xlu0 %836
      %838 = vrot.lane.b32.xlu0 %v468, 112
      %v839 = vpop.permute.xlu0 %838
      %840 = vrot.lane.b32.xlu0 %v469, 112
      %v841 = vpop.permute.xlu0 %840
      %vm842 = vcmask 916480
      %v843 = vsel %vm842, %v795, %v797
      %v844 = vsel %vm842, %v797, %v799
      %v845 = vsel %vm842, %v801, %v803
      %v846 = vsel %vm842, %v803, %v805
      %v847 = vsel %vm842, %v807, %v809
      %v848 = vsel %vm842, %v809, %v811
      %v849 = vsel %vm842, %v813, %v815
      %v850 = vsel %vm842, %v815, %v817
      %v851 = vsel %vm842, %v819, %v821
      %v852 = vsel %vm842, %v821, %v823
      %v853 = vsel %vm842, %v825, %v827
      %v854 = vsel %vm842, %v827, %v829
      %v855 = vsel %vm842, %v831, %v833
      %v856 = vsel %vm842, %v833, %v835
      %v857 = vsel %vm842, %v837, %v839
      %v858 = vsel %vm842, %v839, %v841
      %859 = vrot.lane.b32.xlu0 %v328, 111
      %v860 = vpop.permute.xlu0 %859
      %861 = vrot.lane.b32.xlu0 %v329, 111
      %v862 = vpop.permute.xlu0 %861
      %863 = vrot.lane.b32.xlu0 %v331, 111
      %v864 = vpop.permute.xlu0 %863
      %865 = vrot.lane.b32.xlu0 %v332, 111
      %v866 = vpop.permute.xlu0 %865
      %867 = vrot.lane.b32.xlu0 %v334, 111
      %v868 = vpop.permute.xlu0 %867
      %869 = vrot.lane.b32.xlu0 %v335, 111
      %v870 = vpop.permute.xlu0 %869
      %871 = vrot.lane.b32.xlu0 %v337, 111
      %v872 = vpop.permute.xlu0 %871
      %873 = vrot.lane.b32.xlu0 %v338, 111
      %v874 = vpop.permute.xlu0 %873
      %875 = vrot.lane.b32.xlu0 %v340, 111
      %v876 = vpop.permute.xlu0 %875
      %877 = vrot.lane.b32.xlu0 %v341, 111
      %v878 = vpop.permute.xlu0 %877
      %879 = vrot.lane.b32.xlu0 %v343, 111
      %v880 = vpop.permute.xlu0 %879
      %881 = vrot.lane.b32.xlu0 %v344, 111
      %v882 = vpop.permute.xlu0 %881
      %883 = vrot.lane.b32.xlu0 %v346, 111
      %v884 = vpop.permute.xlu0 %883
      %885 = vrot.lane.b32.xlu0 %v347, 111
      %v886 = vpop.permute.xlu0 %885
      %887 = vrot.lane.b32.xlu0 %v349, 111
      %v888 = vpop.permute.xlu0 %887
      %889 = vrot.lane.b32.xlu0 %v350, 111
      %v890 = vpop.permute.xlu0 %889
      %v891 = vsel %vm365, %v860, %v862
      %v892 = vsel %vm365, %v864, %v866
      %v893 = vsel %vm365, %v868, %v870
      %v894 = vsel %vm365, %v872, %v874
      %v895 = vsel %vm365, %v876, %v878
      %v896 = vsel %vm365, %v880, %v882
      %v897 = vsel %vm365, %v884, %v886
      %v898 = vsel %vm365, %v888, %v890
      %923 = vrot.lane.b32.xlu0 %v503, 110
      %v924 = vpop.permute.xlu0 %923
      %925 = vrot.lane.b32.xlu0 %v504, 110
      %v926 = vpop.permute.xlu0 %925
      %927 = vrot.lane.b32.xlu0 %v505, 110
      %v928 = vpop.permute.xlu0 %927
      %929 = vrot.lane.b32.xlu0 %v506, 110
      %v930 = vpop.permute.xlu0 %929
      %931 = vrot.lane.b32.xlu0 %v507, 110
      %v932 = vpop.permute.xlu0 %931
      %933 = vrot.lane.b32.xlu0 %v508, 110
      %v934 = vpop.permute.xlu0 %933
      %935 = vrot.lane.b32.xlu0 %v509, 110
      %v936 = vpop.permute.xlu0 %935
      %937 = vrot.lane.b32.xlu0 %v510, 110
      %v938 = vpop.permute.xlu0 %937
      %939 = vrot.lane.b32.xlu0 %v511, 110
      %v940 = vpop.permute.xlu0 %939
      %941 = vrot.lane.b32.xlu0 %v512, 110
      %v942 = vpop.permute.xlu0 %941
      %943 = vrot.lane.b32.xlu0 %v513, 110
      %v944 = vpop.permute.xlu0 %943
      %945 = vrot.lane.b32.xlu0 %v514, 110
      %v946 = vpop.permute.xlu0 %945
      %947 = vrot.lane.b32.xlu0 %v515, 110
      %v948 = vpop.permute.xlu0 %947
      %949 = vrot.lane.b32.xlu0 %v516, 110
      %v950 = vpop.permute.xlu0 %949
      %951 = vrot.lane.b32.xlu0 %v517, 110
      %v952 = vpop.permute.xlu0 %951
      %953 = vrot.lane.b32.xlu0 %v518, 110
      %v954 = vpop.permute.xlu0 %953
      %955 = vrot.lane.b32.xlu0 %v519, 110
      %v956 = vpop.permute.xlu0 %955
      %957 = vrot.lane.b32.xlu0 %v520, 110
      %v958 = vpop.permute.xlu0 %957
      %959 = vrot.lane.b32.xlu0 %v521, 110
      %v960 = vpop.permute.xlu0 %959
      %961 = vrot.lane.b32.xlu0 %v522, 110
      %v962 = vpop.permute.xlu0 %961
      %963 = vrot.lane.b32.xlu0 %v523, 110
      %v964 = vpop.permute.xlu0 %963
      %965 = vrot.lane.b32.xlu0 %v524, 110
      %v966 = vpop.permute.xlu0 %965
      %967 = vrot.lane.b32.xlu0 %v525, 110
      %v968 = vpop.permute.xlu0 %967
      %969 = vrot.lane.b32.xlu0 %v526, 110
      %v970 = vpop.permute.xlu0 %969
      %vm971 = vcmask 900096
      %v972 = vsel %vm971, %v924, %v926
      %v973 = vsel %vm971, %v926, %v928
      %v974 = vsel %vm971, %v930, %v932
      %v975 = vsel %vm971, %v932, %v934
      %v976 = vsel %vm971, %v936, %v938
      %v977 = vsel %vm971, %v938, %v940
      %v978 = vsel %vm971, %v942, %v944
      %v979 = vsel %vm971, %v944, %v946
      %v980 = vsel %vm971, %v948, %v950
      %v981 = vsel %vm971, %v950, %v952
      %v982 = vsel %vm971, %v954, %v956
      %v983 = vsel %vm971, %v956, %v958
      %v984 = vsel %vm971, %v960, %v962
      %v985 = vsel %vm971, %v962, %v964
      %v986 = vsel %vm971, %v966, %v968
      %v987 = vsel %vm971, %v968, %v970
      %1012 = vrot.lane.b32.xlu0 %v536, 96
      %v1013 = vpop.permute.xlu0 %1012
      %1014 = vrot.lane.b32.xlu0 %v537, 96
      %v1015 = vpop.permute.xlu0 %1014
      %1016 = vrot.lane.b32.xlu0 %v538, 96
      %v1017 = vpop.permute.xlu0 %1016
      %1018 = vrot.lane.b32.xlu0 %v539, 96
      %v1019 = vpop.permute.xlu0 %1018
      %1020 = vrot.lane.b32.xlu0 %v540, 96
      %v1021 = vpop.permute.xlu0 %1020
      %1022 = vrot.lane.b32.xlu0 %v541, 96
      %v1023 = vpop.permute.xlu0 %1022
      %1024 = vrot.lane.b32.xlu0 %v542, 96
      %v1025 = vpop.permute.xlu0 %1024
      %1026 = vrot.lane.b32.xlu0 %v543, 96
      %v1027 = vpop.permute.xlu0 %1026
      %1028 = vrot.lane.b32.xlu0 %v544, 96
      %v1029 = vpop.permute.xlu0 %1028
      %1030 = vrot.lane.b32.xlu0 %v545, 96
      %v1031 = vpop.permute.xlu0 %1030
      %1032 = vrot.lane.b32.xlu0 %v546, 96
      %v1033 = vpop.permute.xlu0 %1032
      %1034 = vrot.lane.b32.xlu0 %v547, 96
      %v1035 = vpop.permute.xlu0 %1034
      %1036 = vrot.lane.b32.xlu0 %v548, 96
      %v1037 = vpop.permute.xlu0 %1036
      %1038 = vrot.lane.b32.xlu0 %v549, 96
      %v1039 = vpop.permute.xlu0 %1038
      %1040 = vrot.lane.b32.xlu0 %v550, 96
      %v1041 = vpop.permute.xlu0 %1040
      %1042 = vrot.lane.b32.xlu0 %v551, 96
      %v1043 = vpop.permute.xlu0 %1042
      %1044 = vrot.lane.b32.xlu0 %v552, 96
      %v1045 = vpop.permute.xlu0 %1044
      %1046 = vrot.lane.b32.xlu0 %v553, 96
      %v1047 = vpop.permute.xlu0 %1046
      %1048 = vrot.lane.b32.xlu0 %v554, 96
      %v1049 = vpop.permute.xlu0 %1048
      %1050 = vrot.lane.b32.xlu0 %v555, 96
      %v1051 = vpop.permute.xlu0 %1050
      %1052 = vrot.lane.b32.xlu0 %v556, 96
      %v1053 = vpop.permute.xlu0 %1052
      %1054 = vrot.lane.b32.xlu0 %v557, 96
      %v1055 = vpop.permute.xlu0 %1054
      %1056 = vrot.lane.b32.xlu0 %v558, 96
      %v1057 = vpop.permute.xlu0 %1056
      %1058 = vrot.lane.b32.xlu0 %v559, 96
      %v1059 = vpop.permute.xlu0 %1058
      %vm1060 = vcmask 785408
      %v1061 = vsel %vm1060, %v1013, %v1015
      %v1062 = vsel %vm1060, %v1015, %v1017
      %v1063 = vsel %vm1060, %v1019, %v1021
      %v1064 = vsel %vm1060, %v1021, %v1023
      %v1065 = vsel %vm1060, %v1025, %v1027
      %v1066 = vsel %vm1060, %v1027, %v1029
      %v1067 = vsel %vm1060, %v1031, %v1033
      %v1068 = vsel %vm1060, %v1033, %v1035
      %v1069 = vsel %vm1060, %v1037, %v1039
      %v1070 = vsel %vm1060, %v1039, %v1041
      %v1071 = vsel %vm1060, %v1043, %v1045
      %v1072 = vsel %vm1060, %v1045, %v1047
      %v1073 = vsel %vm1060, %v1049, %v1051
      %v1074 = vsel %vm1060, %v1051, %v1053
      %v1075 = vsel %vm1060, %v1055, %v1057
      %v1076 = vsel %vm1060, %v1057, %v1059
      %1101 = vrot.lane.b32.xlu0 %v470, 95
      %v1102 = vpop.permute.xlu0 %1101
      %1103 = vrot.lane.b32.xlu0 %v471, 95
      %v1104 = vpop.permute.xlu0 %1103
      %1105 = vrot.lane.b32.xlu0 %v472, 95
      %v1106 = vpop.permute.xlu0 %1105
      %1107 = vrot.lane.b32.xlu0 %v473, 95
      %v1108 = vpop.permute.xlu0 %1107
      %1109 = vrot.lane.b32.xlu0 %v474, 95
      %v1110 = vpop.permute.xlu0 %1109
      %1111 = vrot.lane.b32.xlu0 %v475, 95
      %v1112 = vpop.permute.xlu0 %1111
      %1113 = vrot.lane.b32.xlu0 %v476, 95
      %v1114 = vpop.permute.xlu0 %1113
      %1115 = vrot.lane.b32.xlu0 %v477, 95
      %v1116 = vpop.permute.xlu0 %1115
      %1117 = vrot.lane.b32.xlu0 %v478, 95
      %v1118 = vpop.permute.xlu0 %1117
      %1119 = vrot.lane.b32.xlu0 %v479, 95
      %v1120 = vpop.permute.xlu0 %1119
      %1121 = vrot.lane.b32.xlu0 %v480, 95
      %v1122 = vpop.permute.xlu0 %1121
      %1123 = vrot.lane.b32.xlu0 %v481, 95
      %v1124 = vpop.permute.xlu0 %1123
      %1125 = vrot.lane.b32.xlu0 %v482, 95
      %v1126 = vpop.permute.xlu0 %1125
      %1127 = vrot.lane.b32.xlu0 %v483, 95
      %v1128 = vpop.permute.xlu0 %1127
      %1129 = vrot.lane.b32.xlu0 %v484, 95
      %v1130 = vpop.permute.xlu0 %1129
      %1131 = vrot.lane.b32.xlu0 %v485, 95
      %v1132 = vpop.permute.xlu0 %1131
      %1133 = vrot.lane.b32.xlu0 %v486, 95
      %v1134 = vpop.permute.xlu0 %1133
      %1135 = vrot.lane.b32.xlu0 %v487, 95
      %v1136 = vpop.permute.xlu0 %1135
      %1137 = vrot.lane.b32.xlu0 %v488, 95
      %v1138 = vpop.permute.xlu0 %1137
      %1139 = vrot.lane.b32.xlu0 %v489, 95
      %v1140 = vpop.permute.xlu0 %1139
      %1141 = vrot.lane.b32.xlu0 %v490, 95
      %v1142 = vpop.permute.xlu0 %1141
      %1143 = vrot.lane.b32.xlu0 %v491, 95
      %v1144 = vpop.permute.xlu0 %1143
      %1145 = vrot.lane.b32.xlu0 %v492, 95
      %v1146 = vpop.permute.xlu0 %1145
      %1147 = vrot.lane.b32.xlu0 %v493, 95
      %v1148 = vpop.permute.xlu0 %1147
      %vm1149 = vcmask 777216
      %v1150 = vsel %vm1149, %v1102, %v1104
      %v1151 = vsel %vm1149, %v1104, %v1106
      %v1152 = vsel %vm1149, %v1108, %v1110
      %v1153 = vsel %vm1149, %v1110, %v1112
      %v1154 = vsel %vm1149, %v1114, %v1116
      %v1155 = vsel %vm1149, %v1116, %v1118
      %v1156 = vsel %vm1149, %v1120, %v1122
      %v1157 = vsel %vm1149, %v1122, %v1124
      %v1158 = vsel %vm1149, %v1126, %v1128
      %v1159 = vsel %vm1149, %v1128, %v1130
      %v1160 = vsel %vm1149, %v1132, %v1134
      %v1161 = vsel %vm1149, %v1134, %v1136
      %v1162 = vsel %vm1149, %v1138, %v1140
      %v1163 = vsel %vm1149, %v1140, %v1142
      %v1164 = vsel %vm1149, %v1144, %v1146
      %v1165 = vsel %vm1149, %v1146, %v1148
      %1190 = vrot.lane.b32.xlu0 %v569, 94
      %v1191 = vpop.permute.xlu0 %1190
      %1192 = vrot.lane.b32.xlu0 %v570, 94
      %v1193 = vpop.permute.xlu0 %1192
      %1194 = vrot.lane.b32.xlu0 %v571, 94
      %v1195 = vpop.permute.xlu0 %1194
      %1196 = vrot.lane.b32.xlu0 %v572, 94
      %v1197 = vpop.permute.xlu0 %1196
      %1198 = vrot.lane.b32.xlu0 %v573, 94
      %v1199 = vpop.permute.xlu0 %1198
      %1200 = vrot.lane.b32.xlu0 %v574, 94
      %v1201 = vpop.permute.xlu0 %1200
      %1202 = vrot.lane.b32.xlu0 %v575, 94
      %v1203 = vpop.permute.xlu0 %1202
      %1204 = vrot.lane.b32.xlu0 %v576, 94
      %v1205 = vpop.permute.xlu0 %1204
      %1206 = vrot.lane.b32.xlu0 %v577, 94
      %v1207 = vpop.permute.xlu0 %1206
      %1208 = vrot.lane.b32.xlu0 %v578, 94
      %v1209 = vpop.permute.xlu0 %1208
      %1210 = vrot.lane.b32.xlu0 %v579, 94
      %v1211 = vpop.permute.xlu0 %1210
      %1212 = vrot.lane.b32.xlu0 %v580, 94
      %v1213 = vpop.permute.xlu0 %1212
      %1214 = vrot.lane.b32.xlu0 %v581, 94
      %v1215 = vpop.permute.xlu0 %1214
      %1216 = vrot.lane.b32.xlu0 %v582, 94
      %v1217 = vpop.permute.xlu0 %1216
      %1218 = vrot.lane.b32.xlu0 %v583, 94
      %v1219 = vpop.permute.xlu0 %1218
      %1220 = vrot.lane.b32.xlu0 %v584, 94
      %v1221 = vpop.permute.xlu0 %1220
      %1222 = vrot.lane.b32.xlu0 %v585, 94
      %v1223 = vpop.permute.xlu0 %1222
      %1224 = vrot.lane.b32.xlu0 %v586, 94
      %v1225 = vpop.permute.xlu0 %1224
      %1226 = vrot.lane.b32.xlu0 %v587, 94
      %v1227 = vpop.permute.xlu0 %1226
      %1228 = vrot.lane.b32.xlu0 %v588, 94
      %v1229 = vpop.permute.xlu0 %1228
      %1230 = vrot.lane.b32.xlu0 %v589, 94
      %v1231 = vpop.permute.xlu0 %1230
      %1232 = vrot.lane.b32.xlu0 %v590, 94
      %v1233 = vpop.permute.xlu0 %1232
      %1234 = vrot.lane.b32.xlu0 %v591, 94
      %v1235 = vpop.permute.xlu0 %1234
      %1236 = vrot.lane.b32.xlu0 %v592, 94
      %v1237 = vpop.permute.xlu0 %1236
      %vm1238 = vcmask 769024
      %v1239 = vsel %vm1238, %v1191, %v1193
      %v1240 = vsel %vm1238, %v1193, %v1195
      %v1241 = vsel %vm1238, %v1197, %v1199
      %v1242 = vsel %vm1238, %v1199, %v1201
      %v1243 = vsel %vm1238, %v1203, %v1205
      %v1244 = vsel %vm1238, %v1205, %v1207
      %v1245 = vsel %vm1238, %v1209, %v1211
      %v1246 = vsel %vm1238, %v1211, %v1213
      %v1247 = vsel %vm1238, %v1215, %v1217
      %v1248 = vsel %vm1238, %v1217, %v1219
      %v1249 = vsel %vm1238, %v1221, %v1223
      %v1250 = vsel %vm1238, %v1223, %v1225
      %v1251 = vsel %vm1238, %v1227, %v1229
      %v1252 = vsel %vm1238, %v1229, %v1231
      %v1253 = vsel %vm1238, %v1233, %v1235
      %v1254 = vsel %vm1238, %v1235, %v1237
      %v1255 = vld [vmem:[%s1] sm:$0xff]
      %v1256 = vld [vmem:[%s1 + $0x8] sm:$0xff]
      %v1257 = vld [vmem:[%s1 + $0x10] sm:$0xff]
      %v1258 = vld [vmem:[%s1 + $0x18] sm:$0xff]
      %v1259 = vld [vmem:[%s1 + $0x20] sm:$0xff]
      %v1260 = vld [vmem:[%s1 + $0x28] sm:$0xff]
      %v1261 = vld [vmem:[%s1 + $0x30] sm:$0xff]
      %v1262 = vld [vmem:[%s1 + $0x38] sm:$0xff]
      %v1263 = vld [vmem:[%s1 + $0x40] sm:$0xff]
      %v1264 = vld [vmem:[%s1 + $0x48] sm:$0xff]
      %v1265 = vld [vmem:[%s1 + $0x50] sm:$0xff]
      %v1266 = vld [vmem:[%s1 + $0x58] sm:$0xff]
      %v1267 = vld [vmem:[%s1 + $0x60] sm:$0xff]
      %v1268 = vld [vmem:[%s1 + $0x68] sm:$0xff]
      %v1269 = vld [vmem:[%s1 + $0x70] sm:$0xff]
      %v1270 = vld [vmem:[%s1 + $0x78] sm:$0xff]
      %v1271 = vld [vmem:[%s1 + $0x80] sm:$0xff]
      %v1272 = vld [vmem:[%s1 + $0x88] sm:$0xff]
      %v1273 = vld [vmem:[%s1 + $0x90] sm:$0xff]
      %v1274 = vld [vmem:[%s1 + $0x98] sm:$0xff]
      %v1275 = vld [vmem:[%s1 + $0xa0] sm:$0xff]
      %v1276 = vld [vmem:[%s1 + $0xa8] sm:$0xff]
      %v1277 = vld [vmem:[%s1 + $0xb0] sm:$0xff]
      %v1278 = vld [vmem:[%s1 + $0xb8] sm:$0xff]
      %v1279 = vld [vmem:[%s1 + $0xc0] sm:$0xff]
      %v1280 = vld [vmem:[%s1 + $0xc8] sm:$0xff]
      %v1281 = vld [vmem:[%s1 + $0xd0] sm:$0xff]
      %v1282 = vld [vmem:[%s1 + $0xd8] sm:$0xff]
      %v1283 = vld [vmem:[%s1 + $0xe0] sm:$0xff]
      %v1284 = vld [vmem:[%s1 + $0xe8] sm:$0xff]
      %v1285 = vld [vmem:[%s1 + $0xf0] sm:$0xff]
      %v1286 = vld [vmem:[%s1 + $0xf8] sm:$0xff]
      %v1287 = vld [vmem:[%s1 + $0x100] sm:$0xff]
      %v1288 = vld [vmem:[%s1 + $0x108] sm:$0xff]
      %v1289 = vld [vmem:[%s1 + $0x110] sm:$0xff]
      %v1290 = vld [vmem:[%s1 + $0x118] sm:$0xff]
      %v1291 = vld [vmem:[%s1 + $0x120] sm:$0xff]
      %v1292 = vld [vmem:[%s1 + $0x128] sm:$0xff]
      %v1293 = vld [vmem:[%s1 + $0x130] sm:$0xff]
      %v1294 = vld [vmem:[%s1 + $0x138] sm:$0xff]
      %v1295 = vld [vmem:[%s2] sm:$0xff]
      %v1296 = vld [vmem:[%s2 + $0x8] sm:$0xff]
      %v1297 = vld [vmem:[%s2 + $0x10] sm:$0xff]
      %v1298 = vld [vmem:[%s2 + $0x18] sm:$0xff]
      %v1299 = vld [vmem:[%s2 + $0x20] sm:$0xff]
      %v1300 = vld [vmem:[%s2 + $0x28] sm:$0xff]
      %v1301 = vld [vmem:[%s2 + $0x30] sm:$0xff]
      %v1302 = vld [vmem:[%s2 + $0x38] sm:$0xff]
      %1304 = vset.pattern.permute.xlu0 0
      %1305 = vperm.xlu0 %1304, %v1295
      %v1306 = vpop.permute.xlu0 %1305
      %1309 = vset.pattern.permute.xlu0 0
      %1310 = vperm.xlu0 %1309, %v1296
      %v1311 = vpop.permute.xlu0 %1310
      %1314 = vset.pattern.permute.xlu0 0
      %1315 = vperm.xlu0 %1314, %v1297
      %v1316 = vpop.permute.xlu0 %1315
      %1319 = vset.pattern.permute.xlu0 0
      %1320 = vperm.xlu0 %1319, %v1298
      %v1321 = vpop.permute.xlu0 %1320
      %1324 = vset.pattern.permute.xlu0 0
      %1325 = vperm.xlu0 %1324, %v1299
      %v1326 = vpop.permute.xlu0 %1325
      %1329 = vset.pattern.permute.xlu0 0
      %1330 = vperm.xlu0 %1329, %v1300
      %v1331 = vpop.permute.xlu0 %1330
      %1334 = vset.pattern.permute.xlu0 0
      %1335 = vperm.xlu0 %1334, %v1301
      %v1336 = vpop.permute.xlu0 %1335
      %1339 = vset.pattern.permute.xlu0 0
      %1340 = vperm.xlu0 %1339, %v1302
      %v1341 = vpop.permute.xlu0 %1340
      %1367 = vrot.lane.b32.xlu0 %v370, 17
      %v1368 = vpop.permute.xlu0 %1367
      %1369 = vrot.lane.b32.xlu0 %v371, 17
      %v1370 = vpop.permute.xlu0 %1369
      %1371 = vrot.lane.b32.xlu0 %v372, 17
      %v1372 = vpop.permute.xlu0 %1371
      %1373 = vrot.lane.b32.xlu0 %v373, 17
      %v1374 = vpop.permute.xlu0 %1373
      %1375 = vrot.lane.b32.xlu0 %v374, 17
      %v1376 = vpop.permute.xlu0 %1375
      %1377 = vrot.lane.b32.xlu0 %v375, 17
      %v1378 = vpop.permute.xlu0 %1377
      %1379 = vrot.lane.b32.xlu0 %v376, 17
      %v1380 = vpop.permute.xlu0 %1379
      %1381 = vrot.lane.b32.xlu0 %v377, 17
      %v1382 = vpop.permute.xlu0 %1381
      %1383 = vrot.lane.b32.xlu0 %v378, 17
      %v1384 = vpop.permute.xlu0 %1383
      %1385 = vrot.lane.b32.xlu0 %v379, 17
      %v1386 = vpop.permute.xlu0 %1385
      %1387 = vrot.lane.b32.xlu0 %v380, 17
      %v1388 = vpop.permute.xlu0 %1387
      %1389 = vrot.lane.b32.xlu0 %v381, 17
      %v1390 = vpop.permute.xlu0 %1389
      %1391 = vrot.lane.b32.xlu0 %v382, 17
      %v1392 = vpop.permute.xlu0 %1391
      %1393 = vrot.lane.b32.xlu0 %v383, 17
      %v1394 = vpop.permute.xlu0 %1393
      %1395 = vrot.lane.b32.xlu0 %v384, 17
      %v1396 = vpop.permute.xlu0 %1395
      %1397 = vrot.lane.b32.xlu0 %v385, 17
      %v1398 = vpop.permute.xlu0 %1397
      %1399 = vrot.lane.b32.xlu0 %v386, 17
      %v1400 = vpop.permute.xlu0 %1399
      %1401 = vrot.lane.b32.xlu0 %v387, 17
      %v1402 = vpop.permute.xlu0 %1401
      %1403 = vrot.lane.b32.xlu0 %v388, 17
      %v1404 = vpop.permute.xlu0 %1403
      %1405 = vrot.lane.b32.xlu0 %v389, 17
      %v1406 = vpop.permute.xlu0 %1405
      %1407 = vrot.lane.b32.xlu0 %v390, 17
      %v1408 = vpop.permute.xlu0 %1407
      %1409 = vrot.lane.b32.xlu0 %v391, 17
      %v1410 = vpop.permute.xlu0 %1409
      %1411 = vrot.lane.b32.xlu0 %v392, 17
      %v1412 = vpop.permute.xlu0 %1411
      %1413 = vrot.lane.b32.xlu0 %v393, 17
      %v1414 = vpop.permute.xlu0 %1413
      %1415 = vrot.lane.b32.xlu0 %v665, 17
      %v1416 = vpop.permute.xlu0 %1415
      %1417 = vrot.lane.b32.xlu0 %v666, 17
      %v1418 = vpop.permute.xlu0 %1417
      %1419 = vrot.lane.b32.xlu0 %v622, 17
      %v1420 = vpop.permute.xlu0 %1419
      %1421 = vrot.lane.b32.xlu0 %v667, 17
      %v1422 = vpop.permute.xlu0 %1421
      %1423 = vrot.lane.b32.xlu0 %v668, 17
      %v1424 = vpop.permute.xlu0 %1423
      %1425 = vrot.lane.b32.xlu0 %v628, 17
      %v1426 = vpop.permute.xlu0 %1425
      %1427 = vrot.lane.b32.xlu0 %v669, 17
      %v1428 = vpop.permute.xlu0 %1427
      %1429 = vrot.lane.b32.xlu0 %v670, 17
      %v1430 = vpop.permute.xlu0 %1429
      %1431 = vrot.lane.b32.xlu0 %v634, 17
      %v1432 = vpop.permute.xlu0 %1431
      %1433 = vrot.lane.b32.xlu0 %v671, 17
      %v1434 = vpop.permute.xlu0 %1433
      %1435 = vrot.lane.b32.xlu0 %v672, 17
      %v1436 = vpop.permute.xlu0 %1435
      %1437 = vrot.lane.b32.xlu0 %v640, 17
      %v1438 = vpop.permute.xlu0 %1437
      %1439 = vrot.lane.b32.xlu0 %v673, 17
      %v1440 = vpop.permute.xlu0 %1439
      %1441 = vrot.lane.b32.xlu0 %v674, 17
      %v1442 = vpop.permute.xlu0 %1441
      %1443 = vrot.lane.b32.xlu0 %v646, 17
      %v1444 = vpop.permute.xlu0 %1443
      %1445 = vrot.lane.b32.xlu0 %v675, 17
      %v1446 = vpop.permute.xlu0 %1445
      %1447 = vrot.lane.b32.xlu0 %v676, 17
      %v1448 = vpop.permute.xlu0 %1447
      %1449 = vrot.lane.b32.xlu0 %v652, 17
      %v1450 = vpop.permute.xlu0 %1449
      %1451 = vrot.lane.b32.xlu0 %v677, 17
      %v1452 = vpop.permute.xlu0 %1451
      %1453 = vrot.lane.b32.xlu0 %v678, 17
      %v1454 = vpop.permute.xlu0 %1453
      %1455 = vrot.lane.b32.xlu0 %v658, 17
      %v1456 = vpop.permute.xlu0 %1455
      %1457 = vrot.lane.b32.xlu0 %v679, 17
      %v1458 = vpop.permute.xlu0 %1457
      %1459 = vrot.lane.b32.xlu0 %v680, 17
      %v1460 = vpop.permute.xlu0 %1459
      %1461 = vrot.lane.b32.xlu0 %v664, 17
      %v1462 = vpop.permute.xlu0 %1461
      %1463 = vrot.lane.b32.xlu0 %v754, 17
      %v1464 = vpop.permute.xlu0 %1463
      %1465 = vrot.lane.b32.xlu0 %v755, 17
      %v1466 = vpop.permute.xlu0 %1465
      %1467 = vrot.lane.b32.xlu0 %v710, 17
      %v1468 = vpop.permute.xlu0 %1467
      %1469 = vrot.lane.b32.xlu0 %v756, 17
      %v1470 = vpop.permute.xlu0 %1469
      %1471 = vrot.lane.b32.xlu0 %v757, 17
      %v1472 = vpop.permute.xlu0 %1471
      %1473 = vrot.lane.b32.xlu0 %v716, 17
      %v1474 = vpop.permute.xlu0 %1473
      %1475 = vrot.lane.b32.xlu0 %v758, 17
      %v1476 = vpop.permute.xlu0 %1475
      %1477 = vrot.lane.b32.xlu0 %v759, 17
      %v1478 = vpop.permute.xlu0 %1477
      %1479 = vrot.lane.b32.xlu0 %v722, 17
      %v1480 = vpop.permute.xlu0 %1479
      %1481 = vrot.lane.b32.xlu0 %v760, 17
      %v1482 = vpop.permute.xlu0 %1481
      %1483 = vrot.lane.b32.xlu0 %v761, 17
      %v1484 = vpop.permute.xlu0 %1483
      %1485 = vrot.lane.b32.xlu0 %v728, 17
      %v1486 = vpop.permute.xlu0 %1485
      %1487 = vrot.lane.b32.xlu0 %v762, 17
      %v1488 = vpop.permute.xlu0 %1487
      %1489 = vrot.lane.b32.xlu0 %v763, 17
      %v1490 = vpop.permute.xlu0 %1489
      %1491 = vrot.lane.b32.xlu0 %v734, 17
      %v1492 = vpop.permute.xlu0 %1491
      %1493 = vrot.lane.b32.xlu0 %v764, 17
      %v1494 = vpop.permute.xlu0 %1493
      %1495 = vrot.lane.b32.xlu0 %v765, 17
      %v1496 = vpop.permute.xlu0 %1495
      %1497 = vrot.lane.b32.xlu0 %v740, 17
      %v1498 = vpop.permute.xlu0 %1497
      %1499 = vrot.lane.b32.xlu0 %v766, 17
      %v1500 = vpop.permute.xlu0 %1499
      %1501 = vrot.lane.b32.xlu0 %v767, 17
      %v1502 = vpop.permute.xlu0 %1501
      %1503 = vrot.lane.b32.xlu0 %v746, 17
      %v1504 = vpop.permute.xlu0 %1503
      %1505 = vrot.lane.b32.xlu0 %v768, 17
      %v1506 = vpop.permute.xlu0 %1505
      %1507 = vrot.lane.b32.xlu0 %v769, 17
      %v1508 = vpop.permute.xlu0 %1507
      %1509 = vrot.lane.b32.xlu0 %v752, 17
      %v1510 = vpop.permute.xlu0 %1509
      %1511 = vrot.lane.b32.xlu0 %v843, 17
      %v1512 = vpop.permute.xlu0 %1511
      %1513 = vrot.lane.b32.xlu0 %v844, 17
      %v1514 = vpop.permute.xlu0 %1513
      %1515 = vrot.lane.b32.xlu0 %v799, 17
      %v1516 = vpop.permute.xlu0 %1515
      %1517 = vrot.lane.b32.xlu0 %v845, 17
      %v1518 = vpop.permute.xlu0 %1517
      %1519 = vrot.lane.b32.xlu0 %v846, 17
      %v1520 = vpop.permute.xlu0 %1519
      %1521 = vrot.lane.b32.xlu0 %v805, 17
      %v1522 = vpop.permute.xlu0 %1521
      %1523 = vrot.lane.b32.xlu0 %v847, 17
      %v1524 = vpop.permute.xlu0 %1523
      %1525 = vrot.lane.b32.xlu0 %v848, 17
      %v1526 = vpop.permute.xlu0 %1525
      %1527 = vrot.lane.b32.xlu0 %v811, 17
      %v1528 = vpop.permute.xlu0 %1527
      %1529 = vrot.lane.b32.xlu0 %v849, 17
      %v1530 = vpop.permute.xlu0 %1529
      %1531 = vrot.lane.b32.xlu0 %v850, 17
      %v1532 = vpop.permute.xlu0 %1531
      %1533 = vrot.lane.b32.xlu0 %v817, 17
      %v1534 = vpop.permute.xlu0 %1533
      %1535 = vrot.lane.b32.xlu0 %v851, 17
      %v1536 = vpop.permute.xlu0 %1535
      %1537 = vrot.lane.b32.xlu0 %v852, 17
      %v1538 = vpop.permute.xlu0 %1537
      %1539 = vrot.lane.b32.xlu0 %v823, 17
      %v1540 = vpop.permute.xlu0 %1539
      %1541 = vrot.lane.b32.xlu0 %v853, 17
      %v1542 = vpop.permute.xlu0 %1541
      %1543 = vrot.lane.b32.xlu0 %v854, 17
      %v1544 = vpop.permute.xlu0 %1543
      %1545 = vrot.lane.b32.xlu0 %v829, 17
      %v1546 = vpop.permute.xlu0 %1545
      %1547 = vrot.lane.b32.xlu0 %v855, 17
      %v1548 = vpop.permute.xlu0 %1547
      %1549 = vrot.lane.b32.xlu0 %v856, 17
      %v1550 = vpop.permute.xlu0 %1549
      %1551 = vrot.lane.b32.xlu0 %v835, 17
      %v1552 = vpop.permute.xlu0 %1551
      %1553 = vrot.lane.b32.xlu0 %v857, 17
      %v1554 = vpop.permute.xlu0 %1553
      %1555 = vrot.lane.b32.xlu0 %v858, 17
      %v1556 = vpop.permute.xlu0 %1555
      %1557 = vrot.lane.b32.xlu0 %v841, 17
      %v1558 = vpop.permute.xlu0 %1557
      %1559 = vrot.lane.b32.xlu0 %v860, 17
      %v1560 = vpop.permute.xlu0 %1559
      %1561 = vrot.lane.b32.xlu0 %v891, 17
      %v1562 = vpop.permute.xlu0 %1561
      %1563 = vrot.lane.b32.xlu0 %v862, 17
      %v1564 = vpop.permute.xlu0 %1563
      %1565 = vrot.lane.b32.xlu0 %v864, 17
      %v1566 = vpop.permute.xlu0 %1565
      %1567 = vrot.lane.b32.xlu0 %v892, 17
      %v1568 = vpop.permute.xlu0 %1567
      %1569 = vrot.lane.b32.xlu0 %v866, 17
      %v1570 = vpop.permute.xlu0 %1569
      %1571 = vrot.lane.b32.xlu0 %v868, 17
      %v1572 = vpop.permute.xlu0 %1571
      %1573 = vrot.lane.b32.xlu0 %v893, 17
      %v1574 = vpop.permute.xlu0 %1573
      %1575 = vrot.lane.b32.xlu0 %v870, 17
      %v1576 = vpop.permute.xlu0 %1575
      %1577 = vrot.lane.b32.xlu0 %v872, 17
      %v1578 = vpop.permute.xlu0 %1577
      %1579 = vrot.lane.b32.xlu0 %v894, 17
      %v1580 = vpop.permute.xlu0 %1579
      %1581 = vrot.lane.b32.xlu0 %v874, 17
      %v1582 = vpop.permute.xlu0 %1581
      %1583 = vrot.lane.b32.xlu0 %v876, 17
      %v1584 = vpop.permute.xlu0 %1583
      %1585 = vrot.lane.b32.xlu0 %v895, 17
      %v1586 = vpop.permute.xlu0 %1585
      %1587 = vrot.lane.b32.xlu0 %v878, 17
      %v1588 = vpop.permute.xlu0 %1587
      %1589 = vrot.lane.b32.xlu0 %v880, 17
      %v1590 = vpop.permute.xlu0 %1589
      %1591 = vrot.lane.b32.xlu0 %v896, 17
      %v1592 = vpop.permute.xlu0 %1591
      %1593 = vrot.lane.b32.xlu0 %v882, 17
      %v1594 = vpop.permute.xlu0 %1593
      %1595 = vrot.lane.b32.xlu0 %v884, 17
      %v1596 = vpop.permute.xlu0 %1595
      %1597 = vrot.lane.b32.xlu0 %v897, 17
      %v1598 = vpop.permute.xlu0 %1597
      %1599 = vrot.lane.b32.xlu0 %v886, 17
      %v1600 = vpop.permute.xlu0 %1599
      %1601 = vrot.lane.b32.xlu0 %v888, 17
      %v1602 = vpop.permute.xlu0 %1601
      %1603 = vrot.lane.b32.xlu0 %v898, 17
      %v1604 = vpop.permute.xlu0 %1603
      %1605 = vrot.lane.b32.xlu0 %v890, 17
      %v1606 = vpop.permute.xlu0 %1605
      %1607 = vrot.lane.b32.xlu0 %v924, 17
      %v1608 = vpop.permute.xlu0 %1607
      %1609 = vrot.lane.b32.xlu0 %v972, 17
      %v1610 = vpop.permute.xlu0 %1609
      %1611 = vrot.lane.b32.xlu0 %v973, 17
      %v1612 = vpop.permute.xlu0 %1611
      %1613 = vrot.lane.b32.xlu0 %v930, 17
      %v1614 = vpop.permute.xlu0 %1613
      %1615 = vrot.lane.b32.xlu0 %v974, 17
      %v1616 = vpop.permute.xlu0 %1615
      %1617 = vrot.lane.b32.xlu0 %v975, 17
      %v1618 = vpop.permute.xlu0 %1617
      %1619 = vrot.lane.b32.xlu0 %v936, 17
      %v1620 = vpop.permute.xlu0 %1619
      %1621 = vrot.lane.b32.xlu0 %v976, 17
      %v1622 = vpop.permute.xlu0 %1621
      %1623 = vrot.lane.b32.xlu0 %v977, 17
      %v1624 = vpop.permute.xlu0 %1623
      %1625 = vrot.lane.b32.xlu0 %v942, 17
      %v1626 = vpop.permute.xlu0 %1625
      %1627 = vrot.lane.b32.xlu0 %v978, 17
      %v1628 = vpop.permute.xlu0 %1627
      %1629 = vrot.lane.b32.xlu0 %v979, 17
      %v1630 = vpop.permute.xlu0 %1629
      %1631 = vrot.lane.b32.xlu0 %v948, 17
      %v1632 = vpop.permute.xlu0 %1631
      %1633 = vrot.lane.b32.xlu0 %v980, 17
      %v1634 = vpop.permute.xlu0 %1633
      %1635 = vrot.lane.b32.xlu0 %v981, 17
      %v1636 = vpop.permute.xlu0 %1635
      %1637 = vrot.lane.b32.xlu0 %v954, 17
      %v1638 = vpop.permute.xlu0 %1637
      %1639 = vrot.lane.b32.xlu0 %v982, 17
      %v1640 = vpop.permute.xlu0 %1639
      %1641 = vrot.lane.b32.xlu0 %v983, 17
      %v1642 = vpop.permute.xlu0 %1641
      %1643 = vrot.lane.b32.xlu0 %v960, 17
      %v1644 = vpop.permute.xlu0 %1643
      %1645 = vrot.lane.b32.xlu0 %v984, 17
      %v1646 = vpop.permute.xlu0 %1645
      %1647 = vrot.lane.b32.xlu0 %v985, 17
      %v1648 = vpop.permute.xlu0 %1647
      %1649 = vrot.lane.b32.xlu0 %v966, 17
      %v1650 = vpop.permute.xlu0 %1649
      %1651 = vrot.lane.b32.xlu0 %v986, 17
      %v1652 = vpop.permute.xlu0 %1651
      %1653 = vrot.lane.b32.xlu0 %v987, 17
      %v1654 = vpop.permute.xlu0 %1653
      %1655 = vrot.lane.b32.xlu0 %v1013, 17
      %v1656 = vpop.permute.xlu0 %1655
      %1657 = vrot.lane.b32.xlu0 %v1061, 17
      %v1658 = vpop.permute.xlu0 %1657
      %1659 = vrot.lane.b32.xlu0 %v1062, 17
      %v1660 = vpop.permute.xlu0 %1659
      %1661 = vrot.lane.b32.xlu0 %v1019, 17
      %v1662 = vpop.permute.xlu0 %1661
      %1663 = vrot.lane.b32.xlu0 %v1063, 17
      %v1664 = vpop.permute.xlu0 %1663
      %1665 = vrot.lane.b32.xlu0 %v1064, 17
      %v1666 = vpop.permute.xlu0 %1665
      %1667 = vrot.lane.b32.xlu0 %v1025, 17
      %v1668 = vpop.permute.xlu0 %1667
      %1669 = vrot.lane.b32.xlu0 %v1065, 17
      %v1670 = vpop.permute.xlu0 %1669
      %1671 = vrot.lane.b32.xlu0 %v1066, 17
      %v1672 = vpop.permute.xlu0 %1671
      %1673 = vrot.lane.b32.xlu0 %v1031, 17
      %v1674 = vpop.permute.xlu0 %1673
      %1675 = vrot.lane.b32.xlu0 %v1067, 17
      %v1676 = vpop.permute.xlu0 %1675
      %1677 = vrot.lane.b32.xlu0 %v1068, 17
      %v1678 = vpop.permute.xlu0 %1677
      %1679 = vrot.lane.b32.xlu0 %v1037, 17
      %v1680 = vpop.permute.xlu0 %1679
      %1681 = vrot.lane.b32.xlu0 %v1069, 17
      %v1682 = vpop.permute.xlu0 %1681
      %1683 = vrot.lane.b32.xlu0 %v1070, 17
      %v1684 = vpop.permute.xlu0 %1683
      %1685 = vrot.lane.b32.xlu0 %v1043, 17
      %v1686 = vpop.permute.xlu0 %1685
      %1687 = vrot.lane.b32.xlu0 %v1071, 17
      %v1688 = vpop.permute.xlu0 %1687
      %1689 = vrot.lane.b32.xlu0 %v1072, 17
      %v1690 = vpop.permute.xlu0 %1689
      %1691 = vrot.lane.b32.xlu0 %v1049, 17
      %v1692 = vpop.permute.xlu0 %1691
      %1693 = vrot.lane.b32.xlu0 %v1073, 17
      %v1694 = vpop.permute.xlu0 %1693
      %1695 = vrot.lane.b32.xlu0 %v1074, 17
      %v1696 = vpop.permute.xlu0 %1695
      %1697 = vrot.lane.b32.xlu0 %v1055, 17
      %v1698 = vpop.permute.xlu0 %1697
      %1699 = vrot.lane.b32.xlu0 %v1075, 17
      %v1700 = vpop.permute.xlu0 %1699
      %1701 = vrot.lane.b32.xlu0 %v1076, 17
      %v1702 = vpop.permute.xlu0 %1701
      %1703 = vrot.lane.b32.xlu0 %v1102, 17
      %v1704 = vpop.permute.xlu0 %1703
      %1705 = vrot.lane.b32.xlu0 %v1150, 17
      %v1706 = vpop.permute.xlu0 %1705
      %1707 = vrot.lane.b32.xlu0 %v1151, 17
      %v1708 = vpop.permute.xlu0 %1707
      %1709 = vrot.lane.b32.xlu0 %v1108, 17
      %v1710 = vpop.permute.xlu0 %1709
      %1711 = vrot.lane.b32.xlu0 %v1152, 17
      %v1712 = vpop.permute.xlu0 %1711
      %1713 = vrot.lane.b32.xlu0 %v1153, 17
      %v1714 = vpop.permute.xlu0 %1713
      %1715 = vrot.lane.b32.xlu0 %v1114, 17
      %v1716 = vpop.permute.xlu0 %1715
      %1717 = vrot.lane.b32.xlu0 %v1154, 17
      %v1718 = vpop.permute.xlu0 %1717
      %1719 = vrot.lane.b32.xlu0 %v1155, 17
      %v1720 = vpop.permute.xlu0 %1719
      %1721 = vrot.lane.b32.xlu0 %v1120, 17
      %v1722 = vpop.permute.xlu0 %1721
      %1723 = vrot.lane.b32.xlu0 %v1156, 17
      %v1724 = vpop.permute.xlu0 %1723
      %1725 = vrot.lane.b32.xlu0 %v1157, 17
      %v1726 = vpop.permute.xlu0 %1725
      %1727 = vrot.lane.b32.xlu0 %v1126, 17
      %v1728 = vpop.permute.xlu0 %1727
      %1729 = vrot.lane.b32.xlu0 %v1158, 17
      %v1730 = vpop.permute.xlu0 %1729
      %1731 = vrot.lane.b32.xlu0 %v1159, 17
      %v1732 = vpop.permute.xlu0 %1731
      %1733 = vrot.lane.b32.xlu0 %v1132, 17
      %v1734 = vpop.permute.xlu0 %1733
      %1735 = vrot.lane.b32.xlu0 %v1160, 17
      %v1736 = vpop.permute.xlu0 %1735
      %1737 = vrot.lane.b32.xlu0 %v1161, 17
      %v1738 = vpop.permute.xlu0 %1737
      %1739 = vrot.lane.b32.xlu0 %v1138, 17
      %v1740 = vpop.permute.xlu0 %1739
      %1741 = vrot.lane.b32.xlu0 %v1162, 17
      %v1742 = vpop.permute.xlu0 %1741
      %1743 = vrot.lane.b32.xlu0 %v1163, 17
      %v1744 = vpop.permute.xlu0 %1743
      %1745 = vrot.lane.b32.xlu0 %v1144, 17
      %v1746 = vpop.permute.xlu0 %1745
      %1747 = vrot.lane.b32.xlu0 %v1164, 17
      %v1748 = vpop.permute.xlu0 %1747
      %1749 = vrot.lane.b32.xlu0 %v1165, 17
      %v1750 = vpop.permute.xlu0 %1749
      %1751 = vrot.lane.b32.xlu0 %v1191, 17
      %v1752 = vpop.permute.xlu0 %1751
      %1753 = vrot.lane.b32.xlu0 %v1239, 17
      %v1754 = vpop.permute.xlu0 %1753
      %1755 = vrot.lane.b32.xlu0 %v1240, 17
      %v1756 = vpop.permute.xlu0 %1755
      %1757 = vrot.lane.b32.xlu0 %v1197, 17
      %v1758 = vpop.permute.xlu0 %1757
      %1759 = vrot.lane.b32.xlu0 %v1241, 17
      %v1760 = vpop.permute.xlu0 %1759
      %1761 = vrot.lane.b32.xlu0 %v1242, 17
      %v1762 = vpop.permute.xlu0 %1761
      %1763 = vrot.lane.b32.xlu0 %v1203, 17
      %v1764 = vpop.permute.xlu0 %1763
      %1765 = vrot.lane.b32.xlu0 %v1243, 17
      %v1766 = vpop.permute.xlu0 %1765
      %1767 = vrot.lane.b32.xlu0 %v1244, 17
      %v1768 = vpop.permute.xlu0 %1767
      %1769 = vrot.lane.b32.xlu0 %v1209, 17
      %v1770 = vpop.permute.xlu0 %1769
      %1771 = vrot.lane.b32.xlu0 %v1245, 17
      %v1772 = vpop.permute.xlu0 %1771
      %1773 = vrot.lane.b32.xlu0 %v1246, 17
      %v1774 = vpop.permute.xlu0 %1773
      %1775 = vrot.lane.b32.xlu0 %v1215, 17
      %v1776 = vpop.permute.xlu0 %1775
      %1777 = vrot.lane.b32.xlu0 %v1247, 17
      %v1778 = vpop.permute.xlu0 %1777
      %1779 = vrot.lane.b32.xlu0 %v1248, 17
      %v1780 = vpop.permute.xlu0 %1779
      %1781 = vrot.lane.b32.xlu0 %v1221, 17
      %v1782 = vpop.permute.xlu0 %1781
      %1783 = vrot.lane.b32.xlu0 %v1249, 17
      %v1784 = vpop.permute.xlu0 %1783
      %1785 = vrot.lane.b32.xlu0 %v1250, 17
      %v1786 = vpop.permute.xlu0 %1785
      %1787 = vrot.lane.b32.xlu0 %v1227, 17
      %v1788 = vpop.permute.xlu0 %1787
      %1789 = vrot.lane.b32.xlu0 %v1251, 17
      %v1790 = vpop.permute.xlu0 %1789
      %1791 = vrot.lane.b32.xlu0 %v1252, 17
      %v1792 = vpop.permute.xlu0 %1791
      %1793 = vrot.lane.b32.xlu0 %v1233, 17
      %v1794 = vpop.permute.xlu0 %1793
      %1795 = vrot.lane.b32.xlu0 %v1253, 17
      %v1796 = vpop.permute.xlu0 %1795
      %1797 = vrot.lane.b32.xlu0 %v1254, 17
      %v1798 = vpop.permute.xlu0 %1797
      %v1799 = vsel %vm564, %v1368, %v1370
      %v1800 = vsel %vm564, %v1370, %v1372
      %v1801 = vsel %vm564, %v1374, %v1376
      %v1802 = vsel %vm564, %v1376, %v1378
      %v1803 = vsel %vm564, %v1380, %v1382
      %v1804 = vsel %vm564, %v1382, %v1384
      %v1805 = vsel %vm564, %v1386, %v1388
      %v1806 = vsel %vm564, %v1388, %v1390
      %v1807 = vsel %vm564, %v1392, %v1394
      %v1808 = vsel %vm564, %v1394, %v1396
      %v1809 = vsel %vm564, %v1398, %v1400
      %v1810 = vsel %vm564, %v1400, %v1402
      %v1811 = vsel %vm564, %v1404, %v1406
      %v1812 = vsel %vm564, %v1406, %v1408
      %v1813 = vsel %vm564, %v1410, %v1412
      %v1814 = vsel %vm564, %v1412, %v1414
      %v1815 = vsel %vm564, %v1416, %v1418
      %v1816 = vsel %vm564, %v1418, %v1420
      %v1817 = vsel %vm564, %v1422, %v1424
      %v1818 = vsel %vm564, %v1424, %v1426
      %v1819 = vsel %vm564, %v1428, %v1430
      %v1820 = vsel %vm564, %v1430, %v1432
      %v1821 = vsel %vm564, %v1434, %v1436
      %v1822 = vsel %vm564, %v1436, %v1438
      %v1823 = vsel %vm564, %v1440, %v1442
      %v1824 = vsel %vm564, %v1442, %v1444
      %v1825 = vsel %vm564, %v1446, %v1448
      %v1826 = vsel %vm564, %v1448, %v1450
      %v1827 = vsel %vm564, %v1452, %v1454
      %v1828 = vsel %vm564, %v1454, %v1456
      %v1829 = vsel %vm564, %v1458, %v1460
      %v1830 = vsel %vm564, %v1460, %v1462
      %v1831 = vsel %vm564, %v1464, %v1466
      %v1832 = vsel %vm564, %v1466, %v1468
      %v1833 = vsel %vm564, %v1470, %v1472
      %v1834 = vsel %vm564, %v1472, %v1474
      %v1835 = vsel %vm564, %v1476, %v1478
      %v1836 = vsel %vm564, %v1478, %v1480
      %v1837 = vsel %vm564, %v1482, %v1484
      %v1838 = vsel %vm564, %v1484, %v1486
      %v1839 = vsel %vm564, %v1488, %v1490
      %v1840 = vsel %vm564, %v1490, %v1492
      %v1841 = vsel %vm564, %v1494, %v1496
      %v1842 = vsel %vm564, %v1496, %v1498
      %v1843 = vsel %vm564, %v1500, %v1502
      %v1844 = vsel %vm564, %v1502, %v1504
      %v1845 = vsel %vm564, %v1506, %v1508
      %v1846 = vsel %vm564, %v1508, %v1510
      %v1847 = vsel %vm564, %v1512, %v1514
      %v1848 = vsel %vm564, %v1514, %v1516
      %v1849 = vsel %vm564, %v1518, %v1520
      %v1850 = vsel %vm564, %v1520, %v1522
      %v1851 = vsel %vm564, %v1524, %v1526
      %v1852 = vsel %vm564, %v1526, %v1528
      %v1853 = vsel %vm564, %v1530, %v1532
      %v1854 = vsel %vm564, %v1532, %v1534
      %v1855 = vsel %vm564, %v1536, %v1538
      %v1856 = vsel %vm564, %v1538, %v1540
      %v1857 = vsel %vm564, %v1542, %v1544
      %v1858 = vsel %vm564, %v1544, %v1546
      %v1859 = vsel %vm564, %v1548, %v1550
      %v1860 = vsel %vm564, %v1550, %v1552
      %v1861 = vsel %vm564, %v1554, %v1556
      %v1862 = vsel %vm564, %v1556, %v1558
      %v1863 = vsel %vm564, %v1560, %v1562
      %v1864 = vsel %vm564, %v1562, %v1564
      %v1865 = vsel %vm564, %v1566, %v1568
      %v1866 = vsel %vm564, %v1568, %v1570
      %v1867 = vsel %vm564, %v1572, %v1574
      %v1868 = vsel %vm564, %v1574, %v1576
      %v1869 = vsel %vm564, %v1578, %v1580
      %v1870 = vsel %vm564, %v1580, %v1582
      %v1871 = vsel %vm564, %v1584, %v1586
      %v1872 = vsel %vm564, %v1586, %v1588
      %v1873 = vsel %vm564, %v1590, %v1592
      %v1874 = vsel %vm564, %v1592, %v1594
      %v1875 = vsel %vm564, %v1596, %v1598
      %v1876 = vsel %vm564, %v1598, %v1600
      %v1877 = vsel %vm564, %v1602, %v1604
      %v1878 = vsel %vm564, %v1604, %v1606
      %v1879 = vsel %vm564, %v1608, %v1610
      %v1880 = vsel %vm564, %v1610, %v1612
      %v1881 = vsel %vm564, %v1614, %v1616
      %v1882 = vsel %vm564, %v1616, %v1618
      %v1883 = vsel %vm564, %v1620, %v1622
      %v1884 = vsel %vm564, %v1622, %v1624
      %v1885 = vsel %vm564, %v1626, %v1628
      %v1886 = vsel %vm564, %v1628, %v1630
      %v1887 = vsel %vm564, %v1632, %v1634
      %v1888 = vsel %vm564, %v1634, %v1636
      %v1889 = vsel %vm564, %v1638, %v1640
      %v1890 = vsel %vm564, %v1640, %v1642
      %v1891 = vsel %vm564, %v1644, %v1646
      %v1892 = vsel %vm564, %v1646, %v1648
      %v1893 = vsel %vm564, %v1650, %v1652
      %v1894 = vsel %vm564, %v1652, %v1654
      %v1895 = vsel %vm564, %v1656, %v1658
      %v1896 = vsel %vm564, %v1658, %v1660
      %v1897 = vsel %vm564, %v1662, %v1664
      %v1898 = vsel %vm564, %v1664, %v1666
      %v1899 = vsel %vm564, %v1668, %v1670
      %v1900 = vsel %vm564, %v1670, %v1672
      %v1901 = vsel %vm564, %v1674, %v1676
      %v1902 = vsel %vm564, %v1676, %v1678
      %v1903 = vsel %vm564, %v1680, %v1682
      %v1904 = vsel %vm564, %v1682, %v1684
      %v1905 = vsel %vm564, %v1686, %v1688
      %v1906 = vsel %vm564, %v1688, %v1690
      %v1907 = vsel %vm564, %v1692, %v1694
      %v1908 = vsel %vm564, %v1694, %v1696
      %v1909 = vsel %vm564, %v1698, %v1700
      %v1910 = vsel %vm564, %v1700, %v1702
      %v1911 = vsel %vm564, %v1704, %v1706
      %v1912 = vsel %vm564, %v1706, %v1708
      %v1913 = vsel %vm564, %v1710, %v1712
      %v1914 = vsel %vm564, %v1712, %v1714
      %v1915 = vsel %vm564, %v1716, %v1718
      %v1916 = vsel %vm564, %v1718, %v1720
      %v1917 = vsel %vm564, %v1722, %v1724
      %v1918 = vsel %vm564, %v1724, %v1726
      %v1919 = vsel %vm564, %v1728, %v1730
      %v1920 = vsel %vm564, %v1730, %v1732
      %v1921 = vsel %vm564, %v1734, %v1736
      %v1922 = vsel %vm564, %v1736, %v1738
      %v1923 = vsel %vm564, %v1740, %v1742
      %v1924 = vsel %vm564, %v1742, %v1744
      %v1925 = vsel %vm564, %v1746, %v1748
      %v1926 = vsel %vm564, %v1748, %v1750
      %v1927 = vsel %vm564, %v1752, %v1754
      %v1928 = vsel %vm564, %v1754, %v1756
      %v1929 = vsel %vm564, %v1758, %v1760
      %v1930 = vsel %vm564, %v1760, %v1762
      %v1931 = vsel %vm564, %v1764, %v1766
      %v1932 = vsel %vm564, %v1766, %v1768
      %v1933 = vsel %vm564, %v1770, %v1772
      %v1934 = vsel %vm564, %v1772, %v1774
      %v1935 = vsel %vm564, %v1776, %v1778
      %v1936 = vsel %vm564, %v1778, %v1780
      %v1937 = vsel %vm564, %v1782, %v1784
      %v1938 = vsel %vm564, %v1784, %v1786
      %v1939 = vsel %vm564, %v1788, %v1790
      %v1940 = vsel %vm564, %v1790, %v1792
      %v1941 = vsel %vm564, %v1794, %v1796
      %v1942 = vsel %vm564, %v1796, %v1798
      %vm2087 = vcmask 523264
      %v2089 = vsel %vm2087, %v1259, 0
      %v2092 = vsel %vm2087, %v1264, 0
      %v2095 = vsel %vm2087, %v1269, 0
      %v2098 = vsel %vm2087, %v1274, 0
      %v2101 = vsel %vm2087, %v1279, 0
      %v2104 = vsel %vm2087, %v1284, 0
      %v2107 = vsel %vm2087, %v1289, 0
      %v2110 = vsel %vm2087, %v1294, 0
      %2112 = vmatprep.subr.mxu0 %v1830
      %2113 = vmatpush1.msra.mxu0 %v1829
      %2114 = vmatprep.subr.mxu0 %v1828
      %2115 = vmatpush1.msra.mxu0 %v1827
      %2116 = vmatprep.subr.mxu0 %v1826
      %2117 = vmatpush1.msra.mxu0 %v1825
      %2118 = vmatprep.subr.mxu0 %v1824
      %2119 = vmatpush1.msra.mxu0 %v1823
      %2120 = vmatprep.subr.mxu0 %v1822
      %2121 = vmatpush1.msra.mxu0 %v1821
      %2122 = vmatprep.subr.mxu0 %v1820
      %2123 = vmatpush1.msra.mxu0 %v1819
      %2124 = vmatprep.subr.mxu0 %v1818
      %2125 = vmatpush1.msra.mxu0 %v1817
      %2126 = vmatprep.subr.mxu0 %v1816
      %2127 = vmatpush1.msra.mxu0 %v1815
      %2128 = vmatprep.subr.mxu0 %v1814
      %2129 = vmatpush1.msra.mxu0 %v1813
      %2130 = vmatprep.subr.mxu0 %v1812
      %2131 = vmatpush1.msra.mxu0 %v1811
      %2132 = vmatprep.subr.mxu0 %v1810
      %2133 = vmatpush1.msra.mxu0 %v1809
      %2134 = vmatprep.subr.mxu0 %v1808
      %2135 = vmatpush1.msra.mxu0 %v1807
      %2136 = vmatprep.subr.mxu0 %v1806
      %2137 = vmatpush1.msra.mxu0 %v1805
      %2138 = vmatprep.subr.mxu0 %v1804
      %2139 = vmatpush1.msra.mxu0 %v1803
      %2140 = vmatprep.subr.mxu0 %v1802
      %2141 = vmatpush1.msra.mxu0 %v1801
      %2142 = vmatprep.subr.mxu0 %v1800
      %2143 = vmatpush1.msra.mxu0 %v1799
      %2144 = vmatprep.subr.mxu0 %v1862
      %2145 = vmatpush2.msra.mxu0 %v1861
      %2146 = vmatprep.subr.mxu0 %v1860
      %2147 = vmatpush2.msra.mxu0 %v1859
      %2148 = vmatprep.subr.mxu0 %v1858
      %2149 = vmatpush2.msra.mxu0 %v1857
      %2150 = vmatprep.subr.mxu0 %v1856
      %2151 = vmatpush2.msra.mxu0 %v1855
      %2152 = vmatprep.subr.mxu0 %v1854
      %2153 = vmatpush2.msra.mxu0 %v1853
      %2154 = vmatprep.subr.mxu0 %v1852
      %2155 = vmatpush2.msra.mxu0 %v1851
      %2156 = vmatprep.subr.mxu0 %v1850
      %2157 = vmatpush2.msra.mxu0 %v1849
      %2158 = vmatprep.subr.mxu0 %v1848
      %2159 = vmatpush2.msra.mxu0 %v1847
      %2160 = vmatprep.subr.mxu0 %v1846
      %2161 = vmatpush2.msra.mxu0 %v1845
      %2162 = vmatprep.subr.mxu0 %v1844
      %2163 = vmatpush2.msra.mxu0 %v1843
      %2164 = vmatprep.subr.mxu0 %v1842
      %2165 = vmatpush2.msra.mxu0 %v1841
      %2166 = vmatprep.subr.mxu0 %v1840
      %2167 = vmatpush2.msra.mxu0 %v1839
      %2168 = vmatprep.subr.mxu0 %v1838
      %2169 = vmatpush2.msra.mxu0 %v1837
      %2170 = vmatprep.subr.mxu0 %v1836
      %2171 = vmatpush2.msra.mxu0 %v1835
      %2172 = vmatprep.subr.mxu0 %v1834
      %2173 = vmatpush2.msra.mxu0 %v1833
      %2174 = vmatprep.subr.mxu0 %v1832
      %2175 = vmatpush2.msra.mxu0 %v1831
      %2176 = vmatprep.mubr.f32.mxu0 %v1256
      %2177 = vmatmul.mubr.f32.gmra.mxu0 %v1255
      %v2178 = vpop.f32.mrf.mxu0
      %v2179 = vadd.f32 %v1306, %v2178
      %v2180 = vpop.f32.mrf.mxu0
      %v2181 = vadd.f32 %v1306, %v2180
      %2182 = vmatprep.mubr.f32.mxu0 %v1261
      %2183 = vmatmul.mubr.f32.gmra.mxu0 %v1260
      %v2184 = vpop.f32.mrf.mxu0
      %v2185 = vadd.f32 %v1311, %v2184
      %v2186 = vpop.f32.mrf.mxu0
      %v2187 = vadd.f32 %v1311, %v2186
      %2188 = vmatprep.mubr.f32.mxu0 %v1266
      %2189 = vmatmul.mubr.f32.gmra.mxu0 %v1265
      %v2190 = vpop.f32.mrf.mxu0
      %v2191 = vadd.f32 %v1316, %v2190
      %v2192 = vpop.f32.mrf.mxu0
      %v2193 = vadd.f32 %v1316, %v2192
      %2194 = vmatprep.mubr.f32.mxu0 %v1271
      %2195 = vmatmul.mubr.f32.gmra.mxu0 %v1270
      %v2196 = vpop.f32.mrf.mxu0
      %v2197 = vadd.f32 %v1321, %v2196
      %v2198 = vpop.f32.mrf.mxu0
      %v2199 = vadd.f32 %v1321, %v2198
      %2200 = vmatprep.mubr.f32.mxu0 %v1276
      %2201 = vmatmul.mubr.f32.gmra.mxu0 %v1275
      %v2202 = vpop.f32.mrf.mxu0
      %v2203 = vadd.f32 %v1326, %v2202
      %v2204 = vpop.f32.mrf.mxu0
      %v2205 = vadd.f32 %v1326, %v2204
      %2206 = vmatprep.mubr.f32.mxu0 %v1281
      %2207 = vmatmul.mubr.f32.gmra.mxu0 %v1280
      %v2208 = vpop.f32.mrf.mxu0
      %v2209 = vadd.f32 %v1331, %v2208
      %v2210 = vpop.f32.mrf.mxu0
      %v2211 = vadd.f32 %v1331, %v2210
      %2212 = vmatprep.mubr.f32.mxu0 %v1286
      %2213 = vmatmul.mubr.f32.gmra.mxu0 %v1285
      %v2214 = vpop.f32.mrf.mxu0
      %v2215 = vadd.f32 %v1336, %v2214
      %v2216 = vpop.f32.mrf.mxu0
      %v2217 = vadd.f32 %v1336, %v2216
      %2218 = vmatprep.mubr.f32.mxu0 %v1291
      %2219 = vmatmul.mubr.f32.gmra.mxu0 %v1290
      %v2220 = vpop.f32.mrf.mxu0
      %v2221 = vadd.f32 %v1341, %v2220
      %v2222 = vpop.f32.mrf.mxu0
      %v2223 = vadd.f32 %v1341, %v2222
      %2224 = vdwg.mxu0
      %2225 = vmatprep.subr.mxu0 %v1894
      %2226 = vmatpush1.msra.mxu0 %v1893
      %2227 = vmatprep.subr.mxu0 %v1892
      %2228 = vmatpush1.msra.mxu0 %v1891
      %2229 = vmatprep.subr.mxu0 %v1890
      %2230 = vmatpush1.msra.mxu0 %v1889
      %2231 = vmatprep.subr.mxu0 %v1888
      %2232 = vmatpush1.msra.mxu0 %v1887
      %2233 = vmatprep.subr.mxu0 %v1886
      %2234 = vmatpush1.msra.mxu0 %v1885
      %2235 = vmatprep.subr.mxu0 %v1884
      %2236 = vmatpush1.msra.mxu0 %v1883
      %2237 = vmatprep.subr.mxu0 %v1882
      %2238 = vmatpush1.msra.mxu0 %v1881
      %2239 = vmatprep.subr.mxu0 %v1880
      %2240 = vmatpush1.msra.mxu0 %v1879
      %2241 = vmatprep.subr.mxu0 %v1878
      %2242 = vmatpush1.msra.mxu0 %v1877
      %2243 = vmatprep.subr.mxu0 %v1876
      %2244 = vmatpush1.msra.mxu0 %v1875
      %2245 = vmatprep.subr.mxu0 %v1874
      %2246 = vmatpush1.msra.mxu0 %v1873
      %2247 = vmatprep.subr.mxu0 %v1872
      %2248 = vmatpush1.msra.mxu0 %v1871
      %2249 = vmatprep.subr.mxu0 %v1870
      %2250 = vmatpush1.msra.mxu0 %v1869
      %2251 = vmatprep.subr.mxu0 %v1868
      %2252 = vmatpush1.msra.mxu0 %v1867
      %2253 = vmatprep.subr.mxu0 %v1866
      %2254 = vmatpush1.msra.mxu0 %v1865
      %2255 = vmatprep.subr.mxu0 %v1864
      %2256 = vmatpush1.msra.mxu0 %v1863
      %2257 = vmatprep.subr.mxu0 %v1926
      %2258 = vmatpush2.msra.mxu0 %v1925
      %2259 = vmatprep.subr.mxu0 %v1924
      %2260 = vmatpush2.msra.mxu0 %v1923
      %2261 = vmatprep.subr.mxu0 %v1922
      %2262 = vmatpush2.msra.mxu0 %v1921
      %2263 = vmatprep.subr.mxu0 %v1920
      %2264 = vmatpush2.msra.mxu0 %v1919
      %2265 = vmatprep.subr.mxu0 %v1918
      %2266 = vmatpush2.msra.mxu0 %v1917
      %2267 = vmatprep.subr.mxu0 %v1916
      %2268 = vmatpush2.msra.mxu0 %v1915
      %2269 = vmatprep.subr.mxu0 %v1914
      %2270 = vmatpush2.msra.mxu0 %v1913
      %2271 = vmatprep.subr.mxu0 %v1912
      %2272 = vmatpush2.msra.mxu0 %v1911
      %2273 = vmatprep.subr.mxu0 %v1910
      %2274 = vmatpush2.msra.mxu0 %v1909
      %2275 = vmatprep.subr.mxu0 %v1908
      %2276 = vmatpush2.msra.mxu0 %v1907
      %2277 = vmatprep.subr.mxu0 %v1906
      %2278 = vmatpush2.msra.mxu0 %v1905
      %2279 = vmatprep.subr.mxu0 %v1904
      %2280 = vmatpush2.msra.mxu0 %v1903
      %2281 = vmatprep.subr.mxu0 %v1902
      %2282 = vmatpush2.msra.mxu0 %v1901
      %2283 = vmatprep.subr.mxu0 %v1900
      %2284 = vmatpush2.msra.mxu0 %v1899
      %2285 = vmatprep.subr.mxu0 %v1898
      %2286 = vmatpush2.msra.mxu0 %v1897
      %2287 = vmatprep.subr.mxu0 %v1896
      %2288 = vmatpush2.msra.mxu0 %v1895
      %2289 = vmatprep.mubr.f32.mxu0 %v1258
      %2290 = vmatmul.mubr.f32.gmra.mxu0 %v1257
      %v2291 = vpop.f32.mrf.mxu0
      %v2292 = vadd.f32 %v2179, %v2291
      %v2293 = vpop.f32.mrf.mxu0
      %v2294 = vadd.f32 %v2181, %v2293
      %2295 = vmatprep.mubr.f32.mxu0 %v1263
      %2296 = vmatmul.mubr.f32.gmra.mxu0 %v1262
      %v2297 = vpop.f32.mrf.mxu0
      %v2298 = vadd.f32 %v2185, %v2297
      %v2299 = vpop.f32.mrf.mxu0
      %v2300 = vadd.f32 %v2187, %v2299
      %2301 = vmatprep.mubr.f32.mxu0 %v1268
      %2302 = vmatmul.mubr.f32.gmra.mxu0 %v1267
      %v2303 = vpop.f32.mrf.mxu0
      %v2304 = vadd.f32 %v2191, %v2303
      %v2305 = vpop.f32.mrf.mxu0
      %v2306 = vadd.f32 %v2193, %v2305
      %2307 = vmatprep.mubr.f32.mxu0 %v1273
      %2308 = vmatmul.mubr.f32.gmra.mxu0 %v1272
      %v2309 = vpop.f32.mrf.mxu0
      %v2310 = vadd.f32 %v2197, %v2309
      %v2311 = vpop.f32.mrf.mxu0
      %v2312 = vadd.f32 %v2199, %v2311
      %2313 = vmatprep.mubr.f32.mxu0 %v1278
      %2314 = vmatmul.mubr.f32.gmra.mxu0 %v1277
      %v2315 = vpop.f32.mrf.mxu0
      %v2316 = vadd.f32 %v2203, %v2315
      %v2317 = vpop.f32.mrf.mxu0
      %v2318 = vadd.f32 %v2205, %v2317
      %2319 = vmatprep.mubr.f32.mxu0 %v1283
      %2320 = vmatmul.mubr.f32.gmra.mxu0 %v1282
      %v2321 = vpop.f32.mrf.mxu0
      %v2322 = vadd.f32 %v2209, %v2321
      %v2323 = vpop.f32.mrf.mxu0
      %v2324 = vadd.f32 %v2211, %v2323
      %2325 = vmatprep.mubr.f32.mxu0 %v1288
      %2326 = vmatmul.mubr.f32.gmra.mxu0 %v1287
      %v2327 = vpop.f32.mrf.mxu0
      %v2328 = vadd.f32 %v2215, %v2327
      %v2329 = vpop.f32.mrf.mxu0
      %v2330 = vadd.f32 %v2217, %v2329
      %2331 = vmatprep.mubr.f32.mxu0 %v1293
      %2332 = vmatmul.mubr.f32.gmra.mxu0 %v1292
      %v2333 = vpop.f32.mrf.mxu0
      %v2334 = vadd.f32 %v2221, %v2333
      %v2335 = vpop.f32.mrf.mxu0
      %v2336 = vadd.f32 %v2223, %v2335
      %2337 = vdwg.mxu0
      %2338 = vmatprep.subr.mxu0 0.0
      %2339 = vmatpush1.msra.mxu0 0.0
      %2340 = vmatprep.subr.mxu0 0.0
      %2341 = vmatpush1.msra.mxu0 0.0
      %2342 = vmatprep.subr.mxu0 0.0
      %2343 = vmatpush1.msra.mxu0 0.0
      %2344 = vmatprep.subr.mxu0 0.0
      %2345 = vmatpush1.msra.mxu0 0.0
      %2346 = vmatprep.subr.mxu0 0.0
      %2347 = vmatpush1.msra.mxu0 0.0
      %2348 = vmatprep.subr.mxu0 0.0
      %2349 = vmatpush1.msra.mxu0 0.0
      %2350 = vmatprep.subr.mxu0 0.0
      %2351 = vmatpush1.msra.mxu0 0.0
      %2352 = vmatprep.subr.mxu0 0.0
      %2353 = vmatpush1.msra.mxu0 0.0
      %2354 = vmatprep.subr.mxu0 %v1942
      %2355 = vmatpush1.msra.mxu0 %v1941
      %2356 = vmatprep.subr.mxu0 %v1940
      %2357 = vmatpush1.msra.mxu0 %v1939
      %2358 = vmatprep.subr.mxu0 %v1938
      %2359 = vmatpush1.msra.mxu0 %v1937
      %2360 = vmatprep.subr.mxu0 %v1936
      %2361 = vmatpush1.msra.mxu0 %v1935
      %2362 = vmatprep.subr.mxu0 %v1934
      %2363 = vmatpush1.msra.mxu0 %v1933
      %2364 = vmatprep.subr.mxu0 %v1932
      %2365 = vmatpush1.msra.mxu0 %v1931
      %2366 = vmatprep.subr.mxu0 %v1930
      %2367 = vmatpush1.msra.mxu0 %v1929
      %2368 = vmatprep.subr.mxu0 %v1928
      %2369 = vmatpush1.msra.mxu0 %v1927
      %2370 = vmatprep.subr.mxu0 0.0
      %2371 = vmatpush2.msra.mxu0 0.0
      %2372 = vmatprep.subr.mxu0 0.0
      %2373 = vmatpush2.msra.mxu0 0.0
      %2374 = vmatprep.subr.mxu0 0.0
      %2375 = vmatpush2.msra.mxu0 0.0
      %2376 = vmatprep.subr.mxu0 0.0
      %2377 = vmatpush2.msra.mxu0 0.0
      %2378 = vmatprep.subr.mxu0 0.0
      %2379 = vmatpush2.msra.mxu0 0.0
      %2380 = vmatprep.subr.mxu0 0.0
      %2381 = vmatpush2.msra.mxu0 0.0
      %2382 = vmatprep.subr.mxu0 0.0
      %2383 = vmatpush2.msra.mxu0 0.0
      %2384 = vmatprep.subr.mxu0 0.0
      %2385 = vmatpush2.msra.mxu0 0.0
      %2386 = vmatprep.subr.mxu0 0.0
      %2387 = vmatpush2.msra.mxu0 0.0
      %2388 = vmatprep.subr.mxu0 0.0
      %2389 = vmatpush2.msra.mxu0 0.0
      %2390 = vmatprep.subr.mxu0 0.0
      %2391 = vmatpush2.msra.mxu0 0.0
      %2392 = vmatprep.subr.mxu0 0.0
      %2393 = vmatpush2.msra.mxu0 0.0
      %2394 = vmatprep.subr.mxu0 0.0
      %2395 = vmatpush2.msra.mxu0 0.0
      %2396 = vmatprep.subr.mxu0 0.0
      %2397 = vmatpush2.msra.mxu0 0.0
      %2398 = vmatprep.subr.mxu0 0.0
      %2399 = vmatpush2.msra.mxu0 0.0
      %2400 = vmatprep.subr.mxu0 0.0
      %2401 = vmatpush2.msra.mxu0 0.0
      %2402 = vmatprep.mubr.f32.mxu0 0.0
      %2403 = vmatmul.mubr.f32.gmra.mxu0 %v2089
      %v2404 = vpop.f32.mrf.mxu0
      %v2405 = vadd.f32 %v2292, %v2404
      %v2406 = vpop.f32.mrf.mxu0
      %v2407 = vadd.f32 %v2294, %v2406
      %2408 = vmatprep.mubr.f32.mxu0 0.0
      %2409 = vmatmul.mubr.f32.gmra.mxu0 %v2092
      %v2410 = vpop.f32.mrf.mxu0
      %v2411 = vadd.f32 %v2298, %v2410
      %v2412 = vpop.f32.mrf.mxu0
      %v2413 = vadd.f32 %v2300, %v2412
      %2414 = vmatprep.mubr.f32.mxu0 0.0
      %2415 = vmatmul.mubr.f32.gmra.mxu0 %v2095
      %v2416 = vpop.f32.mrf.mxu0
      %v2417 = vadd.f32 %v2304, %v2416
      %v2418 = vpop.f32.mrf.mxu0
      %v2419 = vadd.f32 %v2306, %v2418
      %2420 = vmatprep.mubr.f32.mxu0 0.0
      %2421 = vmatmul.mubr.f32.gmra.mxu0 %v2098
      %v2422 = vpop.f32.mrf.mxu0
      %v2423 = vadd.f32 %v2310, %v2422
      %v2424 = vpop.f32.mrf.mxu0
      %v2425 = vadd.f32 %v2312, %v2424
      %2426 = vmatprep.mubr.f32.mxu0 0.0
      %2427 = vmatmul.mubr.f32.gmra.mxu0 %v2101
      %v2428 = vpop.f32.mrf.mxu0
      %v2429 = vadd.f32 %v2316, %v2428
      %v2430 = vpop.f32.mrf.mxu0
      %v2431 = vadd.f32 %v2318, %v2430
      %2432 = vmatprep.mubr.f32.mxu0 0.0
      %2433 = vmatmul.mubr.f32.gmra.mxu0 %v2104
      %v2434 = vpop.f32.mrf.mxu0
      %v2435 = vadd.f32 %v2322, %v2434
      %v2436 = vpop.f32.mrf.mxu0
      %v2437 = vadd.f32 %v2324, %v2436
      %2438 = vmatprep.mubr.f32.mxu0 0.0
      %2439 = vmatmul.mubr.f32.gmra.mxu0 %v2107
      %v2440 = vpop.f32.mrf.mxu0
      %v2441 = vadd.f32 %v2328, %v2440
      %v2442 = vpop.f32.mrf.mxu0
      %v2443 = vadd.f32 %v2330, %v2442
      %2444 = vmatprep.mubr.f32.mxu0 0.0
      %2445 = vmatmul.mubr.f32.gmra.mxu0 %v2110
      %v2446 = vpop.f32.mrf.mxu0
      %v2447 = vadd.f32 %v2334, %v2446
      %v2448 = vpop.f32.mrf.mxu0
      %v2449 = vadd.f32 %v2336, %v2448
      %2450 = vdwg.mxu0
      %v2451 = vmax.f32 %v2405, 0.0
      %v2452 = vmax.f32 %v2407, 0.0
      %v2453 = vmax.f32 %v2411, 0.0
      %v2454 = vmax.f32 %v2413, 0.0
      %v2455 = vmax.f32 %v2417, 0.0
      %v2456 = vmax.f32 %v2419, 0.0
      %v2457 = vmax.f32 %v2423, 0.0
      %v2458 = vmax.f32 %v2425, 0.0
      %v2459 = vmax.f32 %v2429, 0.0
      %v2460 = vmax.f32 %v2431, 0.0
      %v2461 = vmax.f32 %v2435, 0.0
      %v2462 = vmax.f32 %v2437, 0.0
      %v2463 = vmax.f32 %v2441, 0.0
      %v2464 = vmax.f32 %v2443, 0.0
      %v2465 = vmax.f32 %v2447, 0.0
      %v2466 = vmax.f32 %v2449, 0.0
      %2467 = vst [vmem:[#allocation2 + $0x8] sm:$0xff] %v2451
      %2468 = vst [vmem:[#allocation2 + $0x10] sm:$0xff] %v2452
      %2469 = vst [vmem:[#allocation2 + $0x28] sm:$0xff] %v2453
      %2470 = vst [vmem:[#allocation2 + $0x30] sm:$0xff] %v2454
      %2471 = vst [vmem:[#allocation2 + $0x48] sm:$0xff] %v2455
      %2472 = vst [vmem:[#allocation2 + $0x50] sm:$0xff] %v2456
      %2473 = vst [vmem:[#allocation2 + $0x68] sm:$0xff] %v2457
      %2474 = vst [vmem:[#allocation2 + $0x70] sm:$0xff] %v2458
      %2475 = vst [vmem:[#allocation2 + $0x88] sm:$0xff] %v2459
      %2476 = vst [vmem:[#allocation2 + $0x90] sm:$0xff] %v2460
      %2477 = vst [vmem:[#allocation2 + $0xa8] sm:$0xff] %v2461
      %2478 = vst [vmem:[#allocation2 + $0xb0] sm:$0xff] %v2462
      %2479 = vst [vmem:[#allocation2 + $0xc8] sm:$0xff] %v2463
      %2480 = vst [vmem:[#allocation2 + $0xd0] sm:$0xff] %v2464
      %2481 = vst [vmem:[#allocation2 + $0xe8] sm:$0xff] %v2465
      %2482 = vst [vmem:[#allocation2 + $0xf0] sm:$0xff] %v2466
      %v2483 = vld [vmem:[#allocation2] sm:$0xff]
      %v2484 = vld [vmem:[#allocation2 + $0x8] sm:$0xff]
      %v2485 = vld [vmem:[#allocation2 + $0x10] sm:$0xff]
      %v2486 = vld [vmem:[#allocation2 + $0x20] sm:$0xff]
      %v2487 = vld [vmem:[#allocation2 + $0x28] sm:$0xff]
      %v2488 = vld [vmem:[#allocation2 + $0x30] sm:$0xff]
      %v2489 = vld [vmem:[#allocation2 + $0x40] sm:$0xff]
      %v2490 = vld [vmem:[#allocation2 + $0x48] sm:$0xff]
      %v2491 = vld [vmem:[#allocation2 + $0x50] sm:$0xff]
      %v2492 = vld [vmem:[#allocation2 + $0x60] sm:$0xff]
      %v2493 = vld [vmem:[#allocation2 + $0x68] sm:$0xff]
      %v2494 = vld [vmem:[#allocation2 + $0x70] sm:$0xff]
      %v2495 = vld [vmem:[#allocation2 + $0x80] sm:$0xff]
      %v2496 = vld [vmem:[#allocation2 + $0x88] sm:$0xff]
      %v2497 = vld [vmem:[#allocation2 + $0x90] sm:$0xff]
      %v2498 = vld [vmem:[#allocation2 + $0xa0] sm:$0xff]
      %v2499 = vld [vmem:[#allocation2 + $0xa8] sm:$0xff]
      %v2500 = vld [vmem:[#allocation2 + $0xb0] sm:$0xff]
      %v2501 = vld [vmem:[#allocation2 + $0xc0] sm:$0xff]
      %v2502 = vld [vmem:[#allocation2 + $0xc8] sm:$0xff]
      %v2503 = vld [vmem:[#allocation2 + $0xd0] sm:$0xff]
      %v2504 = vld [vmem:[#allocation2 + $0xe0] sm:$0xff]
      %v2505 = vld [vmem:[#allocation2 + $0xe8] sm:$0xff]
      %v2506 = vld [vmem:[#allocation2 + $0xf0] sm:$0xff]
      %v2507 = vld [vmem:[%s5] sm:$0x3]
      %v2509 = vlaneseq
      %v2510 = vshrl.u32 %v2509, 7
      %v2511 = vsub.s32 0, %v2510
      %v2512 = vrot.slane %v2507, %v2511
      %v2513 = vlaneseq
      %v2514 = vshrl.u32 %v2513, 7
      %v2515 = vsub.s32 1, %v2514
      %v2516 = vrot.slane %v2507, %v2515
      %2517 = vrot.lane.b32.xlu0 %v2512, 111
      %v2518 = vpop.permute.xlu0 %2517
      %2519 = vrot.lane.b32.xlu0 %v2516, 111
      %v2520 = vpop.permute.xlu0 %2519
      %v2521 = vsel %vm365, %v2518, %v2520
      %v2525 = vmul.f32 %v2483, %v2518
      %v2526 = vmul.f32 %v2484, %v2521
      %v2527 = vmul.f32 %v2485, %v2520
      %v2528 = vmul.f32 %v2486, %v2518
      %v2529 = vmul.f32 %v2487, %v2521
      %v2530 = vmul.f32 %v2488, %v2520
      %v2531 = vmul.f32 %v2489, %v2518
      %v2532 = vmul.f32 %v2490, %v2521
      %v2533 = vmul.f32 %v2491, %v2520
      %v2534 = vmul.f32 %v2492, %v2518
      %v2535 = vmul.f32 %v2493, %v2521
      %v2536 = vmul.f32 %v2494, %v2520
      %v2537 = vmul.f32 %v2495, %v2518
      %v2538 = vmul.f32 %v2496, %v2521
      %v2539 = vmul.f32 %v2497, %v2520
      %v2540 = vmul.f32 %v2498, %v2518
      %v2541 = vmul.f32 %v2499, %v2521
      %v2542 = vmul.f32 %v2500, %v2520
      %v2543 = vmul.f32 %v2501, %v2518
      %v2544 = vmul.f32 %v2502, %v2521
      %v2545 = vmul.f32 %v2503, %v2520
      %v2546 = vmul.f32 %v2504, %v2518
      %v2547 = vmul.f32 %v2505, %v2521
      %v2548 = vmul.f32 %v2506, %v2520
      %v2549 = vld [vmem:[%s6] sm:$0x3]
      %v2551 = vlaneseq
      %v2552 = vshrl.u32 %v2551, 7
      %v2553 = vsub.s32 0, %v2552
      %v2554 = vrot.slane %v2549, %v2553
      %v2555 = vlaneseq
      %v2556 = vshrl.u32 %v2555, 7
      %v2557 = vsub.s32 1, %v2556
      %v2558 = vrot.slane %v2549, %v2557
      %2559 = vrot.lane.b32.xlu0 %v2554, 113
      %v2560 = vpop.permute.xlu0 %2559
      %2561 = vrot.lane.b32.xlu0 %v2558, 113
      %v2562 = vpop.permute.xlu0 %2561
      %v2563 = vsel %vm408, %v2560, %v2562
      %v2567 = vmul.f32 %v2483, %v2560
      %v2568 = vmul.f32 %v2484, %v2563
      %v2569 = vmul.f32 %v2485, %v2562
      %v2570 = vmul.f32 %v2486, %v2560
      %v2571 = vmul.f32 %v2487, %v2563
      %v2572 = vmul.f32 %v2488, %v2562
      %v2573 = vmul.f32 %v2489, %v2560
      %v2574 = vmul.f32 %v2490, %v2563
      %v2575 = vmul.f32 %v2491, %v2562
      %v2576 = vmul.f32 %v2492, %v2560
      %v2577 = vmul.f32 %v2493, %v2563
      %v2578 = vmul.f32 %v2494, %v2562
      %v2579 = vmul.f32 %v2495, %v2560
      %v2580 = vmul.f32 %v2496, %v2563
      %v2581 = vmul.f32 %v2497, %v2562
      %v2582 = vmul.f32 %v2498, %v2560
      %v2583 = vmul.f32 %v2499, %v2563
      %v2584 = vmul.f32 %v2500, %v2562
      %v2585 = vmul.f32 %v2501, %v2560
      %v2586 = vmul.f32 %v2502, %v2563
      %v2587 = vmul.f32 %v2503, %v2562
      %v2588 = vmul.f32 %v2504, %v2560
      %v2589 = vmul.f32 %v2505, %v2563
      %v2590 = vmul.f32 %v2506, %v2562
      %2591 = vrot.lane.b32.xlu0 %v2512, 127
      %v2592 = vpop.permute.xlu0 %2591
      %2593 = vrot.lane.b32.xlu0 %v2516, 127
      %v2594 = vpop.permute.xlu0 %2593
      %v2595 = vsel %vm441, %v2592, %v2594
      %v2599 = vmul.f32 %v2483, %v2592
      %v2600 = vmul.f32 %v2484, %v2595
      %v2601 = vmul.f32 %v2485, %v2594
      %v2602 = vmul.f32 %v2486, %v2592
      %v2603 = vmul.f32 %v2487, %v2595
      %v2604 = vmul.f32 %v2488, %v2594
      %v2605 = vmul.f32 %v2489, %v2592
      %v2606 = vmul.f32 %v2490, %v2595
      %v2607 = vmul.f32 %v2491, %v2594
      %v2608 = vmul.f32 %v2492, %v2592
      %v2609 = vmul.f32 %v2493, %v2595
      %v2610 = vmul.f32 %v2494, %v2594
      %v2611 = vmul.f32 %v2495, %v2592
      %v2612 = vmul.f32 %v2496, %v2595
      %v2613 = vmul.f32 %v2497, %v2594
      %v2614 = vmul.f32 %v2498, %v2592
      %v2615 = vmul.f32 %v2499, %v2595
      %v2616 = vmul.f32 %v2500, %v2594
      %v2617 = vmul.f32 %v2501, %v2592
      %v2618 = vmul.f32 %v2502, %v2595
      %v2619 = vmul.f32 %v2503, %v2594
      %v2620 = vmul.f32 %v2504, %v2592
      %v2621 = vmul.f32 %v2505, %v2595
      %v2622 = vmul.f32 %v2506, %v2594
      %v2623 = vld [vmem:[#allocation2 + $0x8] sm:$0xff]
      %v2624 = vld [vmem:[#allocation2 + $0x10] sm:$0xff]
      %v2625 = vld [vmem:[#allocation2 + $0x18] sm:$0xff]
      %v2626 = vld [vmem:[#allocation2 + $0x28] sm:$0xff]
      %v2627 = vld [vmem:[#allocation2 + $0x30] sm:$0xff]
      %v2628 = vld [vmem:[#allocation2 + $0x38] sm:$0xff]
      %v2629 = vld [vmem:[#allocation2 + $0x48] sm:$0xff]
      %v2630 = vld [vmem:[#allocation2 + $0x50] sm:$0xff]
      %v2631 = vld [vmem:[#allocation2 + $0x58] sm:$0xff]
      %v2632 = vld [vmem:[#allocation2 + $0x68] sm:$0xff]
      %v2633 = vld [vmem:[#allocation2 + $0x70] sm:$0xff]
      %v2634 = vld [vmem:[#allocation2 + $0x78] sm:$0xff]
      %v2635 = vld [vmem:[#allocation2 + $0x88] sm:$0xff]
      %v2636 = vld [vmem:[#allocation2 + $0x90] sm:$0xff]
      %v2637 = vld [vmem:[#allocation2 + $0x98] sm:$0xff]
      %v2638 = vld [vmem:[#allocation2 + $0xa8] sm:$0xff]
      %v2639 = vld [vmem:[#allocation2 + $0xb0] sm:$0xff]
      %v2640 = vld [vmem:[#allocation2 + $0xb8] sm:$0xff]
      %v2641 = vld [vmem:[#allocation2 + $0xc8] sm:$0xff]
      %v2642 = vld [vmem:[#allocation2 + $0xd0] sm:$0xff]
      %v2643 = vld [vmem:[#allocation2 + $0xd8] sm:$0xff]
      %v2644 = vld [vmem:[#allocation2 + $0xe8] sm:$0xff]
      %v2645 = vld [vmem:[#allocation2 + $0xf0] sm:$0xff]
      %v2646 = vld [vmem:[#allocation2 + $0xf8] sm:$0xff]
      %2647 = vrot.lane.b32.xlu0 %v2554, 1
      %v2648 = vpop.permute.xlu0 %2647
      %2649 = vrot.lane.b32.xlu0 %v2558, 1
      %v2650 = vpop.permute.xlu0 %2649
      %v2651 = vsel %vm498, %v2648, %v2650
      %v2655 = vmul.f32 %v2623, %v2648
      %v2656 = vmul.f32 %v2624, %v2651
      %v2657 = vmul.f32 %v2625, %v2650
      %v2658 = vmul.f32 %v2626, %v2648
      %v2659 = vmul.f32 %v2627, %v2651
      %v2660 = vmul.f32 %v2628, %v2650
      %v2661 = vmul.f32 %v2629, %v2648
      %v2662 = vmul.f32 %v2630, %v2651
      %v2663 = vmul.f32 %v2631, %v2650
      %v2664 = vmul.f32 %v2632, %v2648
      %v2665 = vmul.f32 %v2633, %v2651
      %v2666 = vmul.f32 %v2634, %v2650
      %v2667 = vmul.f32 %v2635, %v2648
      %v2668 = vmul.f32 %v2636, %v2651
      %v2669 = vmul.f32 %v2637, %v2650
      %v2670 = vmul.f32 %v2638, %v2648
      %v2671 = vmul.f32 %v2639, %v2651
      %v2672 = vmul.f32 %v2640, %v2650
      %v2673 = vmul.f32 %v2641, %v2648
      %v2674 = vmul.f32 %v2642, %v2651
      %v2675 = vmul.f32 %v2643, %v2650
      %v2676 = vmul.f32 %v2644, %v2648
      %v2677 = vmul.f32 %v2645, %v2651
      %v2678 = vmul.f32 %v2646, %v2650
      %2679 = vrot.lane.b32.xlu0 %v2512, 15
      %v2680 = vpop.permute.xlu0 %2679
      %2681 = vrot.lane.b32.xlu0 %v2516, 15
      %v2682 = vpop.permute.xlu0 %2681
      %v2683 = vsel %vm531, %v2680, %v2682
      %v2687 = vmul.f32 %v2623, %v2680
      %v2688 = vmul.f32 %v2624, %v2683
      %v2689 = vmul.f32 %v2625, %v2682
      %v2690 = vmul.f32 %v2626, %v2680
      %v2691 = vmul.f32 %v2627, %v2683
      %v2692 = vmul.f32 %v2628, %v2682
      %v2693 = vmul.f32 %v2629, %v2680
      %v2694 = vmul.f32 %v2630, %v2683
      %v2695 = vmul.f32 %v2631, %v2682
      %v2696 = vmul.f32 %v2632, %v2680
      %v2697 = vmul.f32 %v2633, %v2683
      %v2698 = vmul.f32 %v2634, %v2682
      %v2699 = vmul.f32 %v2635, %v2680
      %v2700 = vmul.f32 %v2636, %v2683
      %v2701 = vmul.f32 %v2637, %v2682
      %v2702 = vmul.f32 %v2638, %v2680
      %v2703 = vmul.f32 %v2639, %v2683
      %v2704 = vmul.f32 %v2640, %v2682
      %v2705 = vmul.f32 %v2641, %v2680
      %v2706 = vmul.f32 %v2642, %v2683
      %v2707 = vmul.f32 %v2643, %v2682
      %v2708 = vmul.f32 %v2644, %v2680
      %v2709 = vmul.f32 %v2645, %v2683
      %v2710 = vmul.f32 %v2646, %v2682
      %2711 = vrot.lane.b32.xlu0 %v2554, 17
      %v2712 = vpop.permute.xlu0 %2711
      %2713 = vrot.lane.b32.xlu0 %v2558, 17
      %v2714 = vpop.permute.xlu0 %2713
      %v2715 = vsel %vm564, %v2712, %v2714
      %v2719 = vmul.f32 %v2623, %v2712
      %v2720 = vmul.f32 %v2624, %v2715
      %v2721 = vmul.f32 %v2625, %v2714
      %v2722 = vmul.f32 %v2626, %v2712
      %v2723 = vmul.f32 %v2627, %v2715
      %v2724 = vmul.f32 %v2628, %v2714
      %v2725 = vmul.f32 %v2629, %v2712
      %v2726 = vmul.f32 %v2630, %v2715
      %v2727 = vmul.f32 %v2631, %v2714
      %v2728 = vmul.f32 %v2632, %v2712
      %v2729 = vmul.f32 %v2633, %v2715
      %v2730 = vmul.f32 %v2634, %v2714
      %v2731 = vmul.f32 %v2635, %v2712
      %v2732 = vmul.f32 %v2636, %v2715
      %v2733 = vmul.f32 %v2637, %v2714
      %v2734 = vmul.f32 %v2638, %v2712
      %v2735 = vmul.f32 %v2639, %v2715
      %v2736 = vmul.f32 %v2640, %v2714
      %v2737 = vmul.f32 %v2641, %v2712
      %v2738 = vmul.f32 %v2642, %v2715
      %v2739 = vmul.f32 %v2643, %v2714
      %v2740 = vmul.f32 %v2644, %v2712
      %v2741 = vmul.f32 %v2645, %v2715
      %v2742 = vmul.f32 %v2646, %v2714
      %2767 = vrot.lane.b32.xlu0 %v2483, 127
      %v2768 = vpop.permute.xlu0 %2767
      %2769 = vrot.lane.b32.xlu0 %v2484, 127
      %v2770 = vpop.permute.xlu0 %2769
      %2771 = vrot.lane.b32.xlu0 %v2485, 127
      %v2772 = vpop.permute.xlu0 %2771
      %2773 = vrot.lane.b32.xlu0 %v2486, 127
      %v2774 = vpop.permute.xlu0 %2773
      %2775 = vrot.lane.b32.xlu0 %v2487, 127
      %v2776 = vpop.permute.xlu0 %2775
      %2777 = vrot.lane.b32.xlu0 %v2488, 127
      %v2778 = vpop.permute.xlu0 %2777
      %2779 = vrot.lane.b32.xlu0 %v2489, 127
      %v2780 = vpop.permute.xlu0 %2779
      %2781 = vrot.lane.b32.xlu0 %v2490, 127
      %v2782 = vpop.permute.xlu0 %2781
      %2783 = vrot.lane.b32.xlu0 %v2491, 127
      %v2784 = vpop.permute.xlu0 %2783
      %2785 = vrot.lane.b32.xlu0 %v2492, 127
      %v2786 = vpop.permute.xlu0 %2785
      %2787 = vrot.lane.b32.xlu0 %v2493, 127
      %v2788 = vpop.permute.xlu0 %2787
      %2789 = vrot.lane.b32.xlu0 %v2494, 127
      %v2790 = vpop.permute.xlu0 %2789
      %2791 = vrot.lane.b32.xlu0 %v2495, 127
      %v2792 = vpop.permute.xlu0 %2791
      %2793 = vrot.lane.b32.xlu0 %v2496, 127
      %v2794 = vpop.permute.xlu0 %2793
      %2795 = vrot.lane.b32.xlu0 %v2497, 127
      %v2796 = vpop.permute.xlu0 %2795
      %2797 = vrot.lane.b32.xlu0 %v2498, 127
      %v2798 = vpop.permute.xlu0 %2797
      %2799 = vrot.lane.b32.xlu0 %v2499, 127
      %v2800 = vpop.permute.xlu0 %2799
      %2801 = vrot.lane.b32.xlu0 %v2500, 127
      %v2802 = vpop.permute.xlu0 %2801
      %2803 = vrot.lane.b32.xlu0 %v2501, 127
      %v2804 = vpop.permute.xlu0 %2803
      %2805 = vrot.lane.b32.xlu0 %v2502, 127
      %v2806 = vpop.permute.xlu0 %2805
      %2807 = vrot.lane.b32.xlu0 %v2503, 127
      %v2808 = vpop.permute.xlu0 %2807
      %2809 = vrot.lane.b32.xlu0 %v2504, 127
      %v2810 = vpop.permute.xlu0 %2809
      %2811 = vrot.lane.b32.xlu0 %v2505, 127
      %v2812 = vpop.permute.xlu0 %2811
      %2813 = vrot.lane.b32.xlu0 %v2506, 127
      %v2814 = vpop.permute.xlu0 %2813
      %v2815 = vsel %vm441, %v2768, %v2770
      %v2816 = vsel %vm441, %v2770, %v2772
      %v2817 = vsel %vm441, %v2774, %v2776
      %v2818 = vsel %vm441, %v2776, %v2778
      %v2819 = vsel %vm441, %v2780, %v2782
      %v2820 = vsel %vm441, %v2782, %v2784
      %v2821 = vsel %vm441, %v2786, %v2788
      %v2822 = vsel %vm441, %v2788, %v2790
      %v2823 = vsel %vm441, %v2792, %v2794
      %v2824 = vsel %vm441, %v2794, %v2796
      %v2825 = vsel %vm441, %v2798, %v2800
      %v2826 = vsel %vm441, %v2800, %v2802
      %v2827 = vsel %vm441, %v2804, %v2806
      %v2828 = vsel %vm441, %v2806, %v2808
      %v2829 = vsel %vm441, %v2810, %v2812
      %v2830 = vsel %vm441, %v2812, %v2814
      %2855 = vrot.lane.b32.xlu0 %v2567, 126
      %v2856 = vpop.permute.xlu0 %2855
      %2857 = vrot.lane.b32.xlu0 %v2568, 126
      %v2858 = vpop.permute.xlu0 %2857
      %2859 = vrot.lane.b32.xlu0 %v2569, 126
      %v2860 = vpop.permute.xlu0 %2859
      %2861 = vrot.lane.b32.xlu0 %v2570, 126
      %v2862 = vpop.permute.xlu0 %2861
      %2863 = vrot.lane.b32.xlu0 %v2571, 126
      %v2864 = vpop.permute.xlu0 %2863
      %2865 = vrot.lane.b32.xlu0 %v2572, 126
      %v2866 = vpop.permute.xlu0 %2865
      %2867 = vrot.lane.b32.xlu0 %v2573, 126
      %v2868 = vpop.permute.xlu0 %2867
      %2869 = vrot.lane.b32.xlu0 %v2574, 126
      %v2870 = vpop.permute.xlu0 %2869
      %2871 = vrot.lane.b32.xlu0 %v2575, 126
      %v2872 = vpop.permute.xlu0 %2871
      %2873 = vrot.lane.b32.xlu0 %v2576, 126
      %v2874 = vpop.permute.xlu0 %2873
      %2875 = vrot.lane.b32.xlu0 %v2577, 126
      %v2876 = vpop.permute.xlu0 %2875
      %2877 = vrot.lane.b32.xlu0 %v2578, 126
      %v2878 = vpop.permute.xlu0 %2877
      %2879 = vrot.lane.b32.xlu0 %v2579, 126
      %v2880 = vpop.permute.xlu0 %2879
      %2881 = vrot.lane.b32.xlu0 %v2580, 126
      %v2882 = vpop.permute.xlu0 %2881
      %2883 = vrot.lane.b32.xlu0 %v2581, 126
      %v2884 = vpop.permute.xlu0 %2883
      %2885 = vrot.lane.b32.xlu0 %v2582, 126
      %v2886 = vpop.permute.xlu0 %2885
      %2887 = vrot.lane.b32.xlu0 %v2583, 126
      %v2888 = vpop.permute.xlu0 %2887
      %2889 = vrot.lane.b32.xlu0 %v2584, 126
      %v2890 = vpop.permute.xlu0 %2889
      %2891 = vrot.lane.b32.xlu0 %v2585, 126
      %v2892 = vpop.permute.xlu0 %2891
      %2893 = vrot.lane.b32.xlu0 %v2586, 126
      %v2894 = vpop.permute.xlu0 %2893
      %2895 = vrot.lane.b32.xlu0 %v2587, 126
      %v2896 = vpop.permute.xlu0 %2895
      %2897 = vrot.lane.b32.xlu0 %v2588, 126
      %v2898 = vpop.permute.xlu0 %2897
      %2899 = vrot.lane.b32.xlu0 %v2589, 126
      %v2900 = vpop.permute.xlu0 %2899
      %2901 = vrot.lane.b32.xlu0 %v2590, 126
      %v2902 = vpop.permute.xlu0 %2901
      %v2903 = vsel %vm753, %v2856, %v2858
      %v2904 = vsel %vm753, %v2858, %v2860
      %v2905 = vsel %vm753, %v2862, %v2864
      %v2906 = vsel %vm753, %v2864, %v2866
      %v2907 = vsel %vm753, %v2868, %v2870
      %v2908 = vsel %vm753, %v2870, %v2872
      %v2909 = vsel %vm753, %v2874, %v2876
      %v2910 = vsel %vm753, %v2876, %v2878
      %v2911 = vsel %vm753, %v2880, %v2882
      %v2912 = vsel %vm753, %v2882, %v2884
      %v2913 = vsel %vm753, %v2886, %v2888
      %v2914 = vsel %vm753, %v2888, %v2890
      %v2915 = vsel %vm753, %v2892, %v2894
      %v2916 = vsel %vm753, %v2894, %v2896
      %v2917 = vsel %vm753, %v2898, %v2900
      %v2918 = vsel %vm753, %v2900, %v2902
      %2943 = vrot.lane.b32.xlu0 %v2599, 112
      %v2944 = vpop.permute.xlu0 %2943
      %2945 = vrot.lane.b32.xlu0 %v2600, 112
      %v2946 = vpop.permute.xlu0 %2945
      %2947 = vrot.lane.b32.xlu0 %v2601, 112
      %v2948 = vpop.permute.xlu0 %2947
      %2949 = vrot.lane.b32.xlu0 %v2602, 112
      %v2950 = vpop.permute.xlu0 %2949
      %2951 = vrot.lane.b32.xlu0 %v2603, 112
      %v2952 = vpop.permute.xlu0 %2951
      %2953 = vrot.lane.b32.xlu0 %v2604, 112
      %v2954 = vpop.permute.xlu0 %2953
      %2955 = vrot.lane.b32.xlu0 %v2605, 112
      %v2956 = vpop.permute.xlu0 %2955
      %2957 = vrot.lane.b32.xlu0 %v2606, 112
      %v2958 = vpop.permute.xlu0 %2957
      %2959 = vrot.lane.b32.xlu0 %v2607, 112
      %v2960 = vpop.permute.xlu0 %2959
      %2961 = vrot.lane.b32.xlu0 %v2608, 112
      %v2962 = vpop.permute.xlu0 %2961
      %2963 = vrot.lane.b32.xlu0 %v2609, 112
      %v2964 = vpop.permute.xlu0 %2963
      %2965 = vrot.lane.b32.xlu0 %v2610, 112
      %v2966 = vpop.permute.xlu0 %2965
      %2967 = vrot.lane.b32.xlu0 %v2611, 112
      %v2968 = vpop.permute.xlu0 %2967
      %2969 = vrot.lane.b32.xlu0 %v2612, 112
      %v2970 = vpop.permute.xlu0 %2969
      %2971 = vrot.lane.b32.xlu0 %v2613, 112
      %v2972 = vpop.permute.xlu0 %2971
      %2973 = vrot.lane.b32.xlu0 %v2614, 112
      %v2974 = vpop.permute.xlu0 %2973
      %2975 = vrot.lane.b32.xlu0 %v2615, 112
      %v2976 = vpop.permute.xlu0 %2975
      %2977 = vrot.lane.b32.xlu0 %v2616, 112
      %v2978 = vpop.permute.xlu0 %2977
      %2979 = vrot.lane.b32.xlu0 %v2617, 112
      %v2980 = vpop.permute.xlu0 %2979
      %2981 = vrot.lane.b32.xlu0 %v2618, 112
      %v2982 = vpop.permute.xlu0 %2981
      %2983 = vrot.lane.b32.xlu0 %v2619, 112
      %v2984 = vpop.permute.xlu0 %2983
      %2985 = vrot.lane.b32.xlu0 %v2620, 112
      %v2986 = vpop.permute.xlu0 %2985
      %2987 = vrot.lane.b32.xlu0 %v2621, 112
      %v2988 = vpop.permute.xlu0 %2987
      %2989 = vrot.lane.b32.xlu0 %v2622, 112
      %v2990 = vpop.permute.xlu0 %2989
      %v2991 = vsel %vm842, %v2944, %v2946
      %v2992 = vsel %vm842, %v2946, %v2948
      %v2993 = vsel %vm842, %v2950, %v2952
      %v2994 = vsel %vm842, %v2952, %v2954
      %v2995 = vsel %vm842, %v2956, %v2958
      %v2996 = vsel %vm842, %v2958, %v2960
      %v2997 = vsel %vm842, %v2962, %v2964
      %v2998 = vsel %vm842, %v2964, %v2966
      %v2999 = vsel %vm842, %v2968, %v2970
      %v3000 = vsel %vm842, %v2970, %v2972
      %v3001 = vsel %vm842, %v2974, %v2976
      %v3002 = vsel %vm842, %v2976, %v2978
      %v3003 = vsel %vm842, %v2980, %v2982
      %v3004 = vsel %vm842, %v2982, %v2984
      %v3005 = vsel %vm842, %v2986, %v2988
      %v3006 = vsel %vm842, %v2988, %v2990
      %3007 = vrot.lane.b32.xlu0 %v2484, 111
      %v3008 = vpop.permute.xlu0 %3007
      %3009 = vrot.lane.b32.xlu0 %v2485, 111
      %v3010 = vpop.permute.xlu0 %3009
      %3011 = vrot.lane.b32.xlu0 %v2487, 111
      %v3012 = vpop.permute.xlu0 %3011
      %3013 = vrot.lane.b32.xlu0 %v2488, 111
      %v3014 = vpop.permute.xlu0 %3013
      %3015 = vrot.lane.b32.xlu0 %v2490, 111
      %v3016 = vpop.permute.xlu0 %3015
      %3017 = vrot.lane.b32.xlu0 %v2491, 111
      %v3018 = vpop.permute.xlu0 %3017
      %3019 = vrot.lane.b32.xlu0 %v2493, 111
      %v3020 = vpop.permute.xlu0 %3019
      %3021 = vrot.lane.b32.xlu0 %v2494, 111
      %v3022 = vpop.permute.xlu0 %3021
      %3023 = vrot.lane.b32.xlu0 %v2496, 111
      %v3024 = vpop.permute.xlu0 %3023
      %3025 = vrot.lane.b32.xlu0 %v2497, 111
      %v3026 = vpop.permute.xlu0 %3025
      %3027 = vrot.lane.b32.xlu0 %v2499, 111
      %v3028 = vpop.permute.xlu0 %3027
      %3029 = vrot.lane.b32.xlu0 %v2500, 111
      %v3030 = vpop.permute.xlu0 %3029
      %3031 = vrot.lane.b32.xlu0 %v2502, 111
      %v3032 = vpop.permute.xlu0 %3031
      %3033 = vrot.lane.b32.xlu0 %v2503, 111
      %v3034 = vpop.permute.xlu0 %3033
      %3035 = vrot.lane.b32.xlu0 %v2505, 111
      %v3036 = vpop.permute.xlu0 %3035
      %3037 = vrot.lane.b32.xlu0 %v2506, 111
      %v3038 = vpop.permute.xlu0 %3037
      %v3039 = vsel %vm365, %v3008, %v3010
      %v3040 = vsel %vm365, %v3012, %v3014
      %v3041 = vsel %vm365, %v3016, %v3018
      %v3042 = vsel %vm365, %v3020, %v3022
      %v3043 = vsel %vm365, %v3024, %v3026
      %v3044 = vsel %vm365, %v3028, %v3030
      %v3045 = vsel %vm365, %v3032, %v3034
      %v3046 = vsel %vm365, %v3036, %v3038
      %3071 = vrot.lane.b32.xlu0 %v2655, 110
      %v3072 = vpop.permute.xlu0 %3071
      %3073 = vrot.lane.b32.xlu0 %v2656, 110
      %v3074 = vpop.permute.xlu0 %3073
      %3075 = vrot.lane.b32.xlu0 %v2657, 110
      %v3076 = vpop.permute.xlu0 %3075
      %3077 = vrot.lane.b32.xlu0 %v2658, 110
      %v3078 = vpop.permute.xlu0 %3077
      %3079 = vrot.lane.b32.xlu0 %v2659, 110
      %v3080 = vpop.permute.xlu0 %3079
      %3081 = vrot.lane.b32.xlu0 %v2660, 110
      %v3082 = vpop.permute.xlu0 %3081
      %3083 = vrot.lane.b32.xlu0 %v2661, 110
      %v3084 = vpop.permute.xlu0 %3083
      %3085 = vrot.lane.b32.xlu0 %v2662, 110
      %v3086 = vpop.permute.xlu0 %3085
      %3087 = vrot.lane.b32.xlu0 %v2663, 110
      %v3088 = vpop.permute.xlu0 %3087
      %3089 = vrot.lane.b32.xlu0 %v2664, 110
      %v3090 = vpop.permute.xlu0 %3089
      %3091 = vrot.lane.b32.xlu0 %v2665, 110
      %v3092 = vpop.permute.xlu0 %3091
      %3093 = vrot.lane.b32.xlu0 %v2666, 110
      %v3094 = vpop.permute.xlu0 %3093
      %3095 = vrot.lane.b32.xlu0 %v2667, 110
      %v3096 = vpop.permute.xlu0 %3095
      %3097 = vrot.lane.b32.xlu0 %v2668, 110
      %v3098 = vpop.permute.xlu0 %3097
      %3099 = vrot.lane.b32.xlu0 %v2669, 110
      %v3100 = vpop.permute.xlu0 %3099
      %3101 = vrot.lane.b32.xlu0 %v2670, 110
      %v3102 = vpop.permute.xlu0 %3101
      %3103 = vrot.lane.b32.xlu0 %v2671, 110
      %v3104 = vpop.permute.xlu0 %3103
      %3105 = vrot.lane.b32.xlu0 %v2672, 110
      %v3106 = vpop.permute.xlu0 %3105
      %3107 = vrot.lane.b32.xlu0 %v2673, 110
      %v3108 = vpop.permute.xlu0 %3107
      %3109 = vrot.lane.b32.xlu0 %v2674, 110
      %v3110 = vpop.permute.xlu0 %3109
      %3111 = vrot.lane.b32.xlu0 %v2675, 110
      %v3112 = vpop.permute.xlu0 %3111
      %3113 = vrot.lane.b32.xlu0 %v2676, 110
      %v3114 = vpop.permute.xlu0 %3113
      %3115 = vrot.lane.b32.xlu0 %v2677, 110
      %v3116 = vpop.permute.xlu0 %3115
      %3117 = vrot.lane.b32.xlu0 %v2678, 110
      %v3118 = vpop.permute.xlu0 %3117
      %v3119 = vsel %vm971, %v3072, %v3074
      %v3120 = vsel %vm971, %v3074, %v3076
      %v3121 = vsel %vm971, %v3078, %v3080
      %v3122 = vsel %vm971, %v3080, %v3082
      %v3123 = vsel %vm971, %v3084, %v3086
      %v3124 = vsel %vm971, %v3086, %v3088
      %v3125 = vsel %vm971, %v3090, %v3092
      %v3126 = vsel %vm971, %v3092, %v3094
      %v3127 = vsel %vm971, %v3096, %v3098
      %v3128 = vsel %vm971, %v3098, %v3100
      %v3129 = vsel %vm971, %v3102, %v3104
      %v3130 = vsel %vm971, %v3104, %v3106
      %v3131 = vsel %vm971, %v3108, %v3110
      %v3132 = vsel %vm971, %v3110, %v3112
      %v3133 = vsel %vm971, %v3114, %v3116
      %v3134 = vsel %vm971, %v3116, %v3118
      %3159 = vrot.lane.b32.xlu0 %v2687, 96
      %v3160 = vpop.permute.xlu0 %3159
      %3161 = vrot.lane.b32.xlu0 %v2688, 96
      %v3162 = vpop.permute.xlu0 %3161
      %3163 = vrot.lane.b32.xlu0 %v2689, 96
      %v3164 = vpop.permute.xlu0 %3163
      %3165 = vrot.lane.b32.xlu0 %v2690, 96
      %v3166 = vpop.permute.xlu0 %3165
      %3167 = vrot.lane.b32.xlu0 %v2691, 96
      %v3168 = vpop.permute.xlu0 %3167
      %3169 = vrot.lane.b32.xlu0 %v2692, 96
      %v3170 = vpop.permute.xlu0 %3169
      %3171 = vrot.lane.b32.xlu0 %v2693, 96
      %v3172 = vpop.permute.xlu0 %3171
      %3173 = vrot.lane.b32.xlu0 %v2694, 96
      %v3174 = vpop.permute.xlu0 %3173
      %3175 = vrot.lane.b32.xlu0 %v2695, 96
      %v3176 = vpop.permute.xlu0 %3175
      %3177 = vrot.lane.b32.xlu0 %v2696, 96
      %v3178 = vpop.permute.xlu0 %3177
      %3179 = vrot.lane.b32.xlu0 %v2697, 96
      %v3180 = vpop.permute.xlu0 %3179
      %3181 = vrot.lane.b32.xlu0 %v2698, 96
      %v3182 = vpop.permute.xlu0 %3181
      %3183 = vrot.lane.b32.xlu0 %v2699, 96
      %v3184 = vpop.permute.xlu0 %3183
      %3185 = vrot.lane.b32.xlu0 %v2700, 96
      %v3186 = vpop.permute.xlu0 %3185
      %3187 = vrot.lane.b32.xlu0 %v2701, 96
      %v3188 = vpop.permute.xlu0 %3187
      %3189 = vrot.lane.b32.xlu0 %v2702, 96
      %v3190 = vpop.permute.xlu0 %3189
      %3191 = vrot.lane.b32.xlu0 %v2703, 96
      %v3192 = vpop.permute.xlu0 %3191
      %3193 = vrot.lane.b32.xlu0 %v2704, 96
      %v3194 = vpop.permute.xlu0 %3193
      %3195 = vrot.lane.b32.xlu0 %v2705, 96
      %v3196 = vpop.permute.xlu0 %3195
      %3197 = vrot.lane.b32.xlu0 %v2706, 96
      %v3198 = vpop.permute.xlu0 %3197
      %3199 = vrot.lane.b32.xlu0 %v2707, 96
      %v3200 = vpop.permute.xlu0 %3199
      %3201 = vrot.lane.b32.xlu0 %v2708, 96
      %v3202 = vpop.permute.xlu0 %3201
      %3203 = vrot.lane.b32.xlu0 %v2709, 96
      %v3204 = vpop.permute.xlu0 %3203
      %3205 = vrot.lane.b32.xlu0 %v2710, 96
      %v3206 = vpop.permute.xlu0 %3205
      %v3207 = vsel %vm1060, %v3160, %v3162
      %v3208 = vsel %vm1060, %v3162, %v3164
      %v3209 = vsel %vm1060, %v3166, %v3168
      %v3210 = vsel %vm1060, %v3168, %v3170
      %v3211 = vsel %vm1060, %v3172, %v3174
      %v3212 = vsel %vm1060, %v3174, %v3176
      %v3213 = vsel %vm1060, %v3178, %v3180
      %v3214 = vsel %vm1060, %v3180, %v3182
      %v3215 = vsel %vm1060, %v3184, %v3186
      %v3216 = vsel %vm1060, %v3186, %v3188
      %v3217 = vsel %vm1060, %v3190, %v3192
      %v3218 = vsel %vm1060, %v3192, %v3194
      %v3219 = vsel %vm1060, %v3196, %v3198
      %v3220 = vsel %vm1060, %v3198, %v3200
      %v3221 = vsel %vm1060, %v3202, %v3204
      %v3222 = vsel %vm1060, %v3204, %v3206
      %3247 = vrot.lane.b32.xlu0 %v2623, 95
      %v3248 = vpop.permute.xlu0 %3247
      %3249 = vrot.lane.b32.xlu0 %v2624, 95
      %v3250 = vpop.permute.xlu0 %3249
      %3251 = vrot.lane.b32.xlu0 %v2625, 95
      %v3252 = vpop.permute.xlu0 %3251
      %3253 = vrot.lane.b32.xlu0 %v2626, 95
      %v3254 = vpop.permute.xlu0 %3253
      %3255 = vrot.lane.b32.xlu0 %v2627, 95
      %v3256 = vpop.permute.xlu0 %3255
      %3257 = vrot.lane.b32.xlu0 %v2628, 95
      %v3258 = vpop.permute.xlu0 %3257
      %3259 = vrot.lane.b32.xlu0 %v2629, 95
      %v3260 = vpop.permute.xlu0 %3259
      %3261 = vrot.lane.b32.xlu0 %v2630, 95
      %v3262 = vpop.permute.xlu0 %3261
      %3263 = vrot.lane.b32.xlu0 %v2631, 95
      %v3264 = vpop.permute.xlu0 %3263
      %3265 = vrot.lane.b32.xlu0 %v2632, 95
      %v3266 = vpop.permute.xlu0 %3265
      %3267 = vrot.lane.b32.xlu0 %v2633, 95
      %v3268 = vpop.permute.xlu0 %3267
      %3269 = vrot.lane.b32.xlu0 %v2634, 95
      %v3270 = vpop.permute.xlu0 %3269
      %3271 = vrot.lane.b32.xlu0 %v2635, 95
      %v3272 = vpop.permute.xlu0 %3271
      %3273 = vrot.lane.b32.xlu0 %v2636, 95
      %v3274 = vpop.permute.xlu0 %3273
      %3275 = vrot.lane.b32.xlu0 %v2637, 95
      %v3276 = vpop.permute.xlu0 %3275
      %3277 = vrot.lane.b32.xlu0 %v2638, 95
      %v3278 = vpop.permute.xlu0 %3277
      %3279 = vrot.lane.b32.xlu0 %v2639, 95
      %v3280 = vpop.permute.xlu0 %3279
      %3281 = vrot.lane.b32.xlu0 %v2640, 95
      %v3282 = vpop.permute.xlu0 %3281
      %3283 = vrot.lane.b32.xlu0 %v2641, 95
      %v3284 = vpop.permute.xlu0 %3283
      %3285 = vrot.lane.b32.xlu0 %v2642, 95
      %v3286 = vpop.permute.xlu0 %3285
      %3287 = vrot.lane.b32.xlu0 %v2643, 95
      %v3288 = vpop.permute.xlu0 %3287
      %3289 = vrot.lane.b32.xlu0 %v2644, 95
      %v3290 = vpop.permute.xlu0 %3289
      %3291 = vrot.lane.b32.xlu0 %v2645, 95
      %v3292 = vpop.permute.xlu0 %3291
      %3293 = vrot.lane.b32.xlu0 %v2646, 95
      %v3294 = vpop.permute.xlu0 %3293
      %v3295 = vsel %vm1149, %v3248, %v3250
      %v3296 = vsel %vm1149, %v3250, %v3252
      %v3297 = vsel %vm1149, %v3254, %v3256
      %v3298 = vsel %vm1149, %v3256, %v3258
      %v3299 = vsel %vm1149, %v3260, %v3262
      %v3300 = vsel %vm1149, %v3262, %v3264
      %v3301 = vsel %vm1149, %v3266, %v3268
      %v3302 = vsel %vm1149, %v3268, %v3270
      %v3303 = vsel %vm1149, %v3272, %v3274
      %v3304 = vsel %vm1149, %v3274, %v3276
      %v3305 = vsel %vm1149, %v3278, %v3280
      %v3306 = vsel %vm1149, %v3280, %v3282
      %v3307 = vsel %vm1149, %v3284, %v3286
      %v3308 = vsel %vm1149, %v3286, %v3288
      %v3309 = vsel %vm1149, %v3290, %v3292
      %v3310 = vsel %vm1149, %v3292, %v3294
      %3335 = vrot.lane.b32.xlu0 %v2719, 94
      %v3336 = vpop.permute.xlu0 %3335
      %3337 = vrot.lane.b32.xlu0 %v2720, 94
      %v3338 = vpop.permute.xlu0 %3337
      %3339 = vrot.lane.b32.xlu0 %v2721, 94
      %v3340 = vpop.permute.xlu0 %3339
      %3341 = vrot.lane.b32.xlu0 %v2722, 94
      %v3342 = vpop.permute.xlu0 %3341
      %3343 = vrot.lane.b32.xlu0 %v2723, 94
      %v3344 = vpop.permute.xlu0 %3343
      %3345 = vrot.lane.b32.xlu0 %v2724, 94
      %v3346 = vpop.permute.xlu0 %3345
      %3347 = vrot.lane.b32.xlu0 %v2725, 94
      %v3348 = vpop.permute.xlu0 %3347
      %3349 = vrot.lane.b32.xlu0 %v2726, 94
      %v3350 = vpop.permute.xlu0 %3349
      %3351 = vrot.lane.b32.xlu0 %v2727, 94
      %v3352 = vpop.permute.xlu0 %3351
      %3353 = vrot.lane.b32.xlu0 %v2728, 94
      %v3354 = vpop.permute.xlu0 %3353
      %3355 = vrot.lane.b32.xlu0 %v2729, 94
      %v3356 = vpop.permute.xlu0 %3355
      %3357 = vrot.lane.b32.xlu0 %v2730, 94
      %v3358 = vpop.permute.xlu0 %3357
      %3359 = vrot.lane.b32.xlu0 %v2731, 94
      %v3360 = vpop.permute.xlu0 %3359
      %3361 = vrot.lane.b32.xlu0 %v2732, 94
      %v3362 = vpop.permute.xlu0 %3361
      %3363 = vrot.lane.b32.xlu0 %v2733, 94
      %v3364 = vpop.permute.xlu0 %3363
      %3365 = vrot.lane.b32.xlu0 %v2734, 94
      %v3366 = vpop.permute.xlu0 %3365
      %3367 = vrot.lane.b32.xlu0 %v2735, 94
      %v3368 = vpop.permute.xlu0 %3367
      %3369 = vrot.lane.b32.xlu0 %v2736, 94
      %v3370 = vpop.permute.xlu0 %3369
      %3371 = vrot.lane.b32.xlu0 %v2737, 94
      %v3372 = vpop.permute.xlu0 %3371
      %3373 = vrot.lane.b32.xlu0 %v2738, 94
      %v3374 = vpop.permute.xlu0 %3373
      %3375 = vrot.lane.b32.xlu0 %v2739, 94
      %v3376 = vpop.permute.xlu0 %3375
      %3377 = vrot.lane.b32.xlu0 %v2740, 94
      %v3378 = vpop.permute.xlu0 %3377
      %3379 = vrot.lane.b32.xlu0 %v2741, 94
      %v3380 = vpop.permute.xlu0 %3379
      %3381 = vrot.lane.b32.xlu0 %v2742, 94
      %v3382 = vpop.permute.xlu0 %3381
      %v3383 = vsel %vm1238, %v3336, %v3338
      %v3384 = vsel %vm1238, %v3338, %v3340
      %v3385 = vsel %vm1238, %v3342, %v3344
      %v3386 = vsel %vm1238, %v3344, %v3346
      %v3387 = vsel %vm1238, %v3348, %v3350
      %v3388 = vsel %vm1238, %v3350, %v3352
      %v3389 = vsel %vm1238, %v3354, %v3356
      %v3390 = vsel %vm1238, %v3356, %v3358
      %v3391 = vsel %vm1238, %v3360, %v3362
      %v3392 = vsel %vm1238, %v3362, %v3364
      %v3393 = vsel %vm1238, %v3366, %v3368
      %v3394 = vsel %vm1238, %v3368, %v3370
      %v3395 = vsel %vm1238, %v3372, %v3374
      %v3396 = vsel %vm1238, %v3374, %v3376
      %v3397 = vsel %vm1238, %v3378, %v3380
      %v3398 = vsel %vm1238, %v3380, %v3382
      %v3399 = vld [vmem:[%s3] sm:$0xff]
      %v3400 = vld [vmem:[%s3 + $0x8] sm:$0xff]
      %v3401 = vld [vmem:[%s3 + $0x10] sm:$0xff]
      %v3402 = vld [vmem:[%s3 + $0x18] sm:$0xff]
      %v3403 = vld [vmem:[%s3 + $0x20] sm:$0xff]
      %v3404 = vld [vmem:[%s3 + $0x28] sm:$0xff]
      %v3405 = vld [vmem:[%s3 + $0x30] sm:$0xff]
      %v3406 = vld [vmem:[%s3 + $0x38] sm:$0xff]
      %v3407 = vld [vmem:[%s3 + $0x40] sm:$0xff]
      %v3408 = vld [vmem:[%s3 + $0x48] sm:$0xff]
      %v3409 = vld [vmem:[%s3 + $0x50] sm:$0xff]
      %v3410 = vld [vmem:[%s3 + $0x58] sm:$0xff]
      %v3411 = vld [vmem:[%s3 + $0x60] sm:$0xff]
      %v3412 = vld [vmem:[%s3 + $0x68] sm:$0xff]
      %v3413 = vld [vmem:[%s3 + $0x70] sm:$0xff]
      %v3414 = vld [vmem:[%s3 + $0x78] sm:$0xff]
      %v3415 = vld [vmem:[%s3 + $0x80] sm:$0xff]
      %v3416 = vld [vmem:[%s3 + $0x88] sm:$0xff]
      %v3417 = vld [vmem:[%s3 + $0x90] sm:$0xff]
      %v3418 = vld [vmem:[%s3 + $0x98] sm:$0xff]
      %v3419 = vld [vmem:[%s3 + $0xa0] sm:$0xff]
      %v3420 = vld [vmem:[%s3 + $0xa8] sm:$0xff]
      %v3421 = vld [vmem:[%s3 + $0xb0] sm:$0xff]
      %v3422 = vld [vmem:[%s3 + $0xb8] sm:$0xff]
      %v3423 = vld [vmem:[%s3 + $0xc0] sm:$0xff]
      %v3424 = vld [vmem:[%s3 + $0xc8] sm:$0xff]
      %v3425 = vld [vmem:[%s3 + $0xd0] sm:$0xff]
      %v3426 = vld [vmem:[%s3 + $0xd8] sm:$0xff]
      %v3427 = vld [vmem:[%s3 + $0xe0] sm:$0xff]
      %v3428 = vld [vmem:[%s3 + $0xe8] sm:$0xff]
      %v3429 = vld [vmem:[%s3 + $0xf0] sm:$0xff]
      %v3430 = vld [vmem:[%s3 + $0xf8] sm:$0xff]
      %v3431 = vld [vmem:[%s3 + $0x100] sm:$0xff]
      %v3432 = vld [vmem:[%s3 + $0x108] sm:$0xff]
      %v3433 = vld [vmem:[%s3 + $0x110] sm:$0xff]
      %v3434 = vld [vmem:[%s3 + $0x118] sm:$0xff]
      %v3435 = vld [vmem:[%s3 + $0x120] sm:$0xff]
      %v3436 = vld [vmem:[%s3 + $0x128] sm:$0xff]
      %v3437 = vld [vmem:[%s3 + $0x130] sm:$0xff]
      %v3438 = vld [vmem:[%s3 + $0x138] sm:$0xff]
      %v3439 = vld [vmem:[%s4] sm:$0xff]
      %v3440 = vld [vmem:[%s4 + $0x8] sm:$0xff]
      %v3441 = vld [vmem:[%s4 + $0x10] sm:$0xff]
      %v3442 = vld [vmem:[%s4 + $0x18] sm:$0xff]
      %v3443 = vld [vmem:[%s4 + $0x20] sm:$0xff]
      %v3444 = vld [vmem:[%s4 + $0x28] sm:$0xff]
      %v3445 = vld [vmem:[%s4 + $0x30] sm:$0xff]
      %v3446 = vld [vmem:[%s4 + $0x38] sm:$0xff]
      %3448 = vset.pattern.permute.xlu0 0
      %3449 = vperm.xlu0 %3448, %v3439
      %v3450 = vpop.permute.xlu0 %3449
      %3453 = vset.pattern.permute.xlu0 0
      %3454 = vperm.xlu0 %3453, %v3440
      %v3455 = vpop.permute.xlu0 %3454
      %3458 = vset.pattern.permute.xlu0 0
      %3459 = vperm.xlu0 %3458, %v3441
      %v3460 = vpop.permute.xlu0 %3459
      %3463 = vset.pattern.permute.xlu0 0
      %3464 = vperm.xlu0 %3463, %v3442
      %v3465 = vpop.permute.xlu0 %3464
      %3468 = vset.pattern.permute.xlu0 0
      %3469 = vperm.xlu0 %3468, %v3443
      %v3470 = vpop.permute.xlu0 %3469
      %3473 = vset.pattern.permute.xlu0 0
      %3474 = vperm.xlu0 %3473, %v3444
      %v3475 = vpop.permute.xlu0 %3474
      %3478 = vset.pattern.permute.xlu0 0
      %3479 = vperm.xlu0 %3478, %v3445
      %v3480 = vpop.permute.xlu0 %3479
      %3483 = vset.pattern.permute.xlu0 0
      %3484 = vperm.xlu0 %3483, %v3446
      %v3485 = vpop.permute.xlu0 %3484
      %3511 = vrot.lane.b32.xlu0 %v2525, 17
      %v3512 = vpop.permute.xlu0 %3511
      %3513 = vrot.lane.b32.xlu0 %v2526, 17
      %v3514 = vpop.permute.xlu0 %3513
      %3515 = vrot.lane.b32.xlu0 %v2527, 17
      %v3516 = vpop.permute.xlu0 %3515
      %3517 = vrot.lane.b32.xlu0 %v2528, 17
      %v3518 = vpop.permute.xlu0 %3517
      %3519 = vrot.lane.b32.xlu0 %v2529, 17
      %v3520 = vpop.permute.xlu0 %3519
      %3521 = vrot.lane.b32.xlu0 %v2530, 17
      %v3522 = vpop.permute.xlu0 %3521
      %3523 = vrot.lane.b32.xlu0 %v2531, 17
      %v3524 = vpop.permute.xlu0 %3523
      %3525 = vrot.lane.b32.xlu0 %v2532, 17
      %v3526 = vpop.permute.xlu0 %3525
      %3527 = vrot.lane.b32.xlu0 %v2533, 17
      %v3528 = vpop.permute.xlu0 %3527
      %3529 = vrot.lane.b32.xlu0 %v2534, 17
      %v3530 = vpop.permute.xlu0 %3529
      %3531 = vrot.lane.b32.xlu0 %v2535, 17
      %v3532 = vpop.permute.xlu0 %3531
      %3533 = vrot.lane.b32.xlu0 %v2536, 17
      %v3534 = vpop.permute.xlu0 %3533
      %3535 = vrot.lane.b32.xlu0 %v2537, 17
      %v3536 = vpop.permute.xlu0 %3535
      %3537 = vrot.lane.b32.xlu0 %v2538, 17
      %v3538 = vpop.permute.xlu0 %3537
      %3539 = vrot.lane.b32.xlu0 %v2539, 17
      %v3540 = vpop.permute.xlu0 %3539
      %3541 = vrot.lane.b32.xlu0 %v2540, 17
      %v3542 = vpop.permute.xlu0 %3541
      %3543 = vrot.lane.b32.xlu0 %v2541, 17
      %v3544 = vpop.permute.xlu0 %3543
      %3545 = vrot.lane.b32.xlu0 %v2542, 17
      %v3546 = vpop.permute.xlu0 %3545
      %3547 = vrot.lane.b32.xlu0 %v2543, 17
      %v3548 = vpop.permute.xlu0 %3547
      %3549 = vrot.lane.b32.xlu0 %v2544, 17
      %v3550 = vpop.permute.xlu0 %3549
      %3551 = vrot.lane.b32.xlu0 %v2545, 17
      %v3552 = vpop.permute.xlu0 %3551
      %3553 = vrot.lane.b32.xlu0 %v2546, 17
      %v3554 = vpop.permute.xlu0 %3553
      %3555 = vrot.lane.b32.xlu0 %v2547, 17
      %v3556 = vpop.permute.xlu0 %3555
      %3557 = vrot.lane.b32.xlu0 %v2548, 17
      %v3558 = vpop.permute.xlu0 %3557
      %3559 = vrot.lane.b32.xlu0 %v2815, 17
      %v3560 = vpop.permute.xlu0 %3559
      %3561 = vrot.lane.b32.xlu0 %v2816, 17
      %v3562 = vpop.permute.xlu0 %3561
      %3563 = vrot.lane.b32.xlu0 %v2772, 17
      %v3564 = vpop.permute.xlu0 %3563
      %3565 = vrot.lane.b32.xlu0 %v2817, 17
      %v3566 = vpop.permute.xlu0 %3565
      %3567 = vrot.lane.b32.xlu0 %v2818, 17
      %v3568 = vpop.permute.xlu0 %3567
      %3569 = vrot.lane.b32.xlu0 %v2778, 17
      %v3570 = vpop.permute.xlu0 %3569
      %3571 = vrot.lane.b32.xlu0 %v2819, 17
      %v3572 = vpop.permute.xlu0 %3571
      %3573 = vrot.lane.b32.xlu0 %v2820, 17
      %v3574 = vpop.permute.xlu0 %3573
      %3575 = vrot.lane.b32.xlu0 %v2784, 17
      %v3576 = vpop.permute.xlu0 %3575
      %3577 = vrot.lane.b32.xlu0 %v2821, 17
      %v3578 = vpop.permute.xlu0 %3577
      %3579 = vrot.lane.b32.xlu0 %v2822, 17
      %v3580 = vpop.permute.xlu0 %3579
      %3581 = vrot.lane.b32.xlu0 %v2790, 17
      %v3582 = vpop.permute.xlu0 %3581
      %3583 = vrot.lane.b32.xlu0 %v2823, 17
      %v3584 = vpop.permute.xlu0 %3583
      %3585 = vrot.lane.b32.xlu0 %v2824, 17
      %v3586 = vpop.permute.xlu0 %3585
      %3587 = vrot.lane.b32.xlu0 %v2796, 17
      %v3588 = vpop.permute.xlu0 %3587
      %3589 = vrot.lane.b32.xlu0 %v2825, 17
      %v3590 = vpop.permute.xlu0 %3589
      %3591 = vrot.lane.b32.xlu0 %v2826, 17
      %v3592 = vpop.permute.xlu0 %3591
      %3593 = vrot.lane.b32.xlu0 %v2802, 17
      %v3594 = vpop.permute.xlu0 %3593
      %3595 = vrot.lane.b32.xlu0 %v2827, 17
      %v3596 = vpop.permute.xlu0 %3595
      %3597 = vrot.lane.b32.xlu0 %v2828, 17
      %v3598 = vpop.permute.xlu0 %3597
      %3599 = vrot.lane.b32.xlu0 %v2808, 17
      %v3600 = vpop.permute.xlu0 %3599
      %3601 = vrot.lane.b32.xlu0 %v2829, 17
      %v3602 = vpop.permute.xlu0 %3601
      %3603 = vrot.lane.b32.xlu0 %v2830, 17
      %v3604 = vpop.permute.xlu0 %3603
      %3605 = vrot.lane.b32.xlu0 %v2814, 17
      %v3606 = vpop.permute.xlu0 %3605
      %3607 = vrot.lane.b32.xlu0 %v2903, 17
      %v3608 = vpop.permute.xlu0 %3607
      %3609 = vrot.lane.b32.xlu0 %v2904, 17
      %v3610 = vpop.permute.xlu0 %3609
      %3611 = vrot.lane.b32.xlu0 %v2860, 17
      %v3612 = vpop.permute.xlu0 %3611
      %3613 = vrot.lane.b32.xlu0 %v2905, 17
      %v3614 = vpop.permute.xlu0 %3613
      %3615 = vrot.lane.b32.xlu0 %v2906, 17
      %v3616 = vpop.permute.xlu0 %3615
      %3617 = vrot.lane.b32.xlu0 %v2866, 17
      %v3618 = vpop.permute.xlu0 %3617
      %3619 = vrot.lane.b32.xlu0 %v2907, 17
      %v3620 = vpop.permute.xlu0 %3619
      %3621 = vrot.lane.b32.xlu0 %v2908, 17
      %v3622 = vpop.permute.xlu0 %3621
      %3623 = vrot.lane.b32.xlu0 %v2872, 17
      %v3624 = vpop.permute.xlu0 %3623
      %3625 = vrot.lane.b32.xlu0 %v2909, 17
      %v3626 = vpop.permute.xlu0 %3625
      %3627 = vrot.lane.b32.xlu0 %v2910, 17
      %v3628 = vpop.permute.xlu0 %3627
      %3629 = vrot.lane.b32.xlu0 %v2878, 17
      %v3630 = vpop.permute.xlu0 %3629
      %3631 = vrot.lane.b32.xlu0 %v2911, 17
      %v3632 = vpop.permute.xlu0 %3631
      %3633 = vrot.lane.b32.xlu0 %v2912, 17
      %v3634 = vpop.permute.xlu0 %3633
      %3635 = vrot.lane.b32.xlu0 %v2884, 17
      %v3636 = vpop.permute.xlu0 %3635
      %3637 = vrot.lane.b32.xlu0 %v2913, 17
      %v3638 = vpop.permute.xlu0 %3637
      %3639 = vrot.lane.b32.xlu0 %v2914, 17
      %v3640 = vpop.permute.xlu0 %3639
      %3641 = vrot.lane.b32.xlu0 %v2890, 17
      %v3642 = vpop.permute.xlu0 %3641
      %3643 = vrot.lane.b32.xlu0 %v2915, 17
      %v3644 = vpop.permute.xlu0 %3643
      %3645 = vrot.lane.b32.xlu0 %v2916, 17
      %v3646 = vpop.permute.xlu0 %3645
      %3647 = vrot.lane.b32.xlu0 %v2896, 17
      %v3648 = vpop.permute.xlu0 %3647
      %3649 = vrot.lane.b32.xlu0 %v2917, 17
      %v3650 = vpop.permute.xlu0 %3649
      %3651 = vrot.lane.b32.xlu0 %v2918, 17
      %v3652 = vpop.permute.xlu0 %3651
      %3653 = vrot.lane.b32.xlu0 %v2902, 17
      %v3654 = vpop.permute.xlu0 %3653
      %3655 = vrot.lane.b32.xlu0 %v2991, 17
      %v3656 = vpop.permute.xlu0 %3655
      %3657 = vrot.lane.b32.xlu0 %v2992, 17
      %v3658 = vpop.permute.xlu0 %3657
      %3659 = vrot.lane.b32.xlu0 %v2948, 17
      %v3660 = vpop.permute.xlu0 %3659
      %3661 = vrot.lane.b32.xlu0 %v2993, 17
      %v3662 = vpop.permute.xlu0 %3661
      %3663 = vrot.lane.b32.xlu0 %v2994, 17
      %v3664 = vpop.permute.xlu0 %3663
      %3665 = vrot.lane.b32.xlu0 %v2954, 17
      %v3666 = vpop.permute.xlu0 %3665
      %3667 = vrot.lane.b32.xlu0 %v2995, 17
      %v3668 = vpop.permute.xlu0 %3667
      %3669 = vrot.lane.b32.xlu0 %v2996, 17
      %v3670 = vpop.permute.xlu0 %3669
      %3671 = vrot.lane.b32.xlu0 %v2960, 17
      %v3672 = vpop.permute.xlu0 %3671
      %3673 = vrot.lane.b32.xlu0 %v2997, 17
      %v3674 = vpop.permute.xlu0 %3673
      %3675 = vrot.lane.b32.xlu0 %v2998, 17
      %v3676 = vpop.permute.xlu0 %3675
      %3677 = vrot.lane.b32.xlu0 %v2966, 17
      %v3678 = vpop.permute.xlu0 %3677
      %3679 = vrot.lane.b32.xlu0 %v2999, 17
      %v3680 = vpop.permute.xlu0 %3679
      %3681 = vrot.lane.b32.xlu0 %v3000, 17
      %v3682 = vpop.permute.xlu0 %3681
      %3683 = vrot.lane.b32.xlu0 %v2972, 17
      %v3684 = vpop.permute.xlu0 %3683
      %3685 = vrot.lane.b32.xlu0 %v3001, 17
      %v3686 = vpop.permute.xlu0 %3685
      %3687 = vrot.lane.b32.xlu0 %v3002, 17
      %v3688 = vpop.permute.xlu0 %3687
      %3689 = vrot.lane.b32.xlu0 %v2978, 17
      %v3690 = vpop.permute.xlu0 %3689
      %3691 = vrot.lane.b32.xlu0 %v3003, 17
      %v3692 = vpop.permute.xlu0 %3691
      %3693 = vrot.lane.b32.xlu0 %v3004, 17
      %v3694 = vpop.permute.xlu0 %3693
      %3695 = vrot.lane.b32.xlu0 %v2984, 17
      %v3696 = vpop.permute.xlu0 %3695
      %3697 = vrot.lane.b32.xlu0 %v3005, 17
      %v3698 = vpop.permute.xlu0 %3697
      %3699 = vrot.lane.b32.xlu0 %v3006, 17
      %v3700 = vpop.permute.xlu0 %3699
      %3701 = vrot.lane.b32.xlu0 %v2990, 17
      %v3702 = vpop.permute.xlu0 %3701
      %3703 = vrot.lane.b32.xlu0 %v3008, 17
      %v3704 = vpop.permute.xlu0 %3703
      %3705 = vrot.lane.b32.xlu0 %v3039, 17
      %v3706 = vpop.permute.xlu0 %3705
      %3707 = vrot.lane.b32.xlu0 %v3010, 17
      %v3708 = vpop.permute.xlu0 %3707
      %3709 = vrot.lane.b32.xlu0 %v3012, 17
      %v3710 = vpop.permute.xlu0 %3709
      %3711 = vrot.lane.b32.xlu0 %v3040, 17
      %v3712 = vpop.permute.xlu0 %3711
      %3713 = vrot.lane.b32.xlu0 %v3014, 17
      %v3714 = vpop.permute.xlu0 %3713
      %3715 = vrot.lane.b32.xlu0 %v3016, 17
      %v3716 = vpop.permute.xlu0 %3715
      %3717 = vrot.lane.b32.xlu0 %v3041, 17
      %v3718 = vpop.permute.xlu0 %3717
      %3719 = vrot.lane.b32.xlu0 %v3018, 17
      %v3720 = vpop.permute.xlu0 %3719
      %3721 = vrot.lane.b32.xlu0 %v3020, 17
      %v3722 = vpop.permute.xlu0 %3721
      %3723 = vrot.lane.b32.xlu0 %v3042, 17
      %v3724 = vpop.permute.xlu0 %3723
      %3725 = vrot.lane.b32.xlu0 %v3022, 17
      %v3726 = vpop.permute.xlu0 %3725
      %3727 = vrot.lane.b32.xlu0 %v3024, 17
      %v3728 = vpop.permute.xlu0 %3727
      %3729 = vrot.lane.b32.xlu0 %v3043, 17
      %v3730 = vpop.permute.xlu0 %3729
      %3731 = vrot.lane.b32.xlu0 %v3026, 17
      %v3732 = vpop.permute.xlu0 %3731
      %3733 = vrot.lane.b32.xlu0 %v3028, 17
      %v3734 = vpop.permute.xlu0 %3733
      %3735 = vrot.lane.b32.xlu0 %v3044, 17
      %v3736 = vpop.permute.xlu0 %3735
      %3737 = vrot.lane.b32.xlu0 %v3030, 17
      %v3738 = vpop.permute.xlu0 %3737
      %3739 = vrot.lane.b32.xlu0 %v3032, 17
      %v3740 = vpop.permute.xlu0 %3739
      %3741 = vrot.lane.b32.xlu0 %v3045, 17
      %v3742 = vpop.permute.xlu0 %3741
      %3743 = vrot.lane.b32.xlu0 %v3034, 17
      %v3744 = vpop.permute.xlu0 %3743
      %3745 = vrot.lane.b32.xlu0 %v3036, 17
      %v3746 = vpop.permute.xlu0 %3745
      %3747 = vrot.lane.b32.xlu0 %v3046, 17
      %v3748 = vpop.permute.xlu0 %3747
      %3749 = vrot.lane.b32.xlu0 %v3038, 17
      %v3750 = vpop.permute.xlu0 %3749
      %3751 = vrot.lane.b32.xlu0 %v3072, 17
      %v3752 = vpop.permute.xlu0 %3751
      %3753 = vrot.lane.b32.xlu0 %v3119, 17
      %v3754 = vpop.permute.xlu0 %3753
      %3755 = vrot.lane.b32.xlu0 %v3120, 17
      %v3756 = vpop.permute.xlu0 %3755
      %3757 = vrot.lane.b32.xlu0 %v3078, 17
      %v3758 = vpop.permute.xlu0 %3757
      %3759 = vrot.lane.b32.xlu0 %v3121, 17
      %v3760 = vpop.permute.xlu0 %3759
      %3761 = vrot.lane.b32.xlu0 %v3122, 17
      %v3762 = vpop.permute.xlu0 %3761
      %3763 = vrot.lane.b32.xlu0 %v3084, 17
      %v3764 = vpop.permute.xlu0 %3763
      %3765 = vrot.lane.b32.xlu0 %v3123, 17
      %v3766 = vpop.permute.xlu0 %3765
      %3767 = vrot.lane.b32.xlu0 %v3124, 17
      %v3768 = vpop.permute.xlu0 %3767
      %3769 = vrot.lane.b32.xlu0 %v3090, 17
      %v3770 = vpop.permute.xlu0 %3769
      %3771 = vrot.lane.b32.xlu0 %v3125, 17
      %v3772 = vpop.permute.xlu0 %3771
      %3773 = vrot.lane.b32.xlu0 %v3126, 17
      %v3774 = vpop.permute.xlu0 %3773
      %3775 = vrot.lane.b32.xlu0 %v3096, 17
      %v3776 = vpop.permute.xlu0 %3775
      %3777 = vrot.lane.b32.xlu0 %v3127, 17
      %v3778 = vpop.permute.xlu0 %3777
      %3779 = vrot.lane.b32.xlu0 %v3128, 17
      %v3780 = vpop.permute.xlu0 %3779
      %3781 = vrot.lane.b32.xlu0 %v3102, 17
      %v3782 = vpop.permute.xlu0 %3781
      %3783 = vrot.lane.b32.xlu0 %v3129, 17
      %v3784 = vpop.permute.xlu0 %3783
      %3785 = vrot.lane.b32.xlu0 %v3130, 17
      %v3786 = vpop.permute.xlu0 %3785
      %3787 = vrot.lane.b32.xlu0 %v3108, 17
      %v3788 = vpop.permute.xlu0 %3787
      %3789 = vrot.lane.b32.xlu0 %v3131, 17
      %v3790 = vpop.permute.xlu0 %3789
      %3791 = vrot.lane.b32.xlu0 %v3132, 17
      %v3792 = vpop.permute.xlu0 %3791
      %3793 = vrot.lane.b32.xlu0 %v3114, 17
      %v3794 = vpop.permute.xlu0 %3793
      %3795 = vrot.lane.b32.xlu0 %v3133, 17
      %v3796 = vpop.permute.xlu0 %3795
      %3797 = vrot.lane.b32.xlu0 %v3134, 17
      %v3798 = vpop.permute.xlu0 %3797
      %3799 = vrot.lane.b32.xlu0 %v3160, 17
      %v3800 = vpop.permute.xlu0 %3799
      %3801 = vrot.lane.b32.xlu0 %v3207, 17
      %v3802 = vpop.permute.xlu0 %3801
      %3803 = vrot.lane.b32.xlu0 %v3208, 17
      %v3804 = vpop.permute.xlu0 %3803
      %3805 = vrot.lane.b32.xlu0 %v3166, 17
      %v3806 = vpop.permute.xlu0 %3805
      %3807 = vrot.lane.b32.xlu0 %v3209, 17
      %v3808 = vpop.permute.xlu0 %3807
      %3809 = vrot.lane.b32.xlu0 %v3210, 17
      %v3810 = vpop.permute.xlu0 %3809
      %3811 = vrot.lane.b32.xlu0 %v3172, 17
      %v3812 = vpop.permute.xlu0 %3811
      %3813 = vrot.lane.b32.xlu0 %v3211, 17
      %v3814 = vpop.permute.xlu0 %3813
      %3815 = vrot.lane.b32.xlu0 %v3212, 17
      %v3816 = vpop.permute.xlu0 %3815
      %3817 = vrot.lane.b32.xlu0 %v3178, 17
      %v3818 = vpop.permute.xlu0 %3817
      %3819 = vrot.lane.b32.xlu0 %v3213, 17
      %v3820 = vpop.permute.xlu0 %3819
      %3821 = vrot.lane.b32.xlu0 %v3214, 17
      %v3822 = vpop.permute.xlu0 %3821
      %3823 = vrot.lane.b32.xlu0 %v3184, 17
      %v3824 = vpop.permute.xlu0 %3823
      %3825 = vrot.lane.b32.xlu0 %v3215, 17
      %v3826 = vpop.permute.xlu0 %3825
      %3827 = vrot.lane.b32.xlu0 %v3216, 17
      %v3828 = vpop.permute.xlu0 %3827
      %3829 = vrot.lane.b32.xlu0 %v3190, 17
      %v3830 = vpop.permute.xlu0 %3829
      %3831 = vrot.lane.b32.xlu0 %v3217, 17
      %v3832 = vpop.permute.xlu0 %3831
      %3833 = vrot.lane.b32.xlu0 %v3218, 17
      %v3834 = vpop.permute.xlu0 %3833
      %3835 = vrot.lane.b32.xlu0 %v3196, 17
      %v3836 = vpop.permute.xlu0 %3835
      %3837 = vrot.lane.b32.xlu0 %v3219, 17
      %v3838 = vpop.permute.xlu0 %3837
      %3839 = vrot.lane.b32.xlu0 %v3220, 17
      %v3840 = vpop.permute.xlu0 %3839
      %3841 = vrot.lane.b32.xlu0 %v3202, 17
      %v3842 = vpop.permute.xlu0 %3841
      %3843 = vrot.lane.b32.xlu0 %v3221, 17
      %v3844 = vpop.permute.xlu0 %3843
      %3845 = vrot.lane.b32.xlu0 %v3222, 17
      %v3846 = vpop.permute.xlu0 %3845
      %3847 = vrot.lane.b32.xlu0 %v3248, 17
      %v3848 = vpop.permute.xlu0 %3847
      %3849 = vrot.lane.b32.xlu0 %v3295, 17
      %v3850 = vpop.permute.xlu0 %3849
      %3851 = vrot.lane.b32.xlu0 %v3296, 17
      %v3852 = vpop.permute.xlu0 %3851
      %3853 = vrot.lane.b32.xlu0 %v3254, 17
      %v3854 = vpop.permute.xlu0 %3853
      %3855 = vrot.lane.b32.xlu0 %v3297, 17
      %v3856 = vpop.permute.xlu0 %3855
      %3857 = vrot.lane.b32.xlu0 %v3298, 17
      %v3858 = vpop.permute.xlu0 %3857
      %3859 = vrot.lane.b32.xlu0 %v3260, 17
      %v3860 = vpop.permute.xlu0 %3859
      %3861 = vrot.lane.b32.xlu0 %v3299, 17
      %v3862 = vpop.permute.xlu0 %3861
      %3863 = vrot.lane.b32.xlu0 %v3300, 17
      %v3864 = vpop.permute.xlu0 %3863
      %3865 = vrot.lane.b32.xlu0 %v3266, 17
      %v3866 = vpop.permute.xlu0 %3865
      %3867 = vrot.lane.b32.xlu0 %v3301, 17
      %v3868 = vpop.permute.xlu0 %3867
      %3869 = vrot.lane.b32.xlu0 %v3302, 17
      %v3870 = vpop.permute.xlu0 %3869
      %3871 = vrot.lane.b32.xlu0 %v3272, 17
      %v3872 = vpop.permute.xlu0 %3871
      %3873 = vrot.lane.b32.xlu0 %v3303, 17
      %v3874 = vpop.permute.xlu0 %3873
      %3875 = vrot.lane.b32.xlu0 %v3304, 17
      %v3876 = vpop.permute.xlu0 %3875
      %3877 = vrot.lane.b32.xlu0 %v3278, 17
      %v3878 = vpop.permute.xlu0 %3877
      %3879 = vrot.lane.b32.xlu0 %v3305, 17
      %v3880 = vpop.permute.xlu0 %3879
      %3881 = vrot.lane.b32.xlu0 %v3306, 17
      %v3882 = vpop.permute.xlu0 %3881
      %3883 = vrot.lane.b32.xlu0 %v3284, 17
      %v3884 = vpop.permute.xlu0 %3883
      %3885 = vrot.lane.b32.xlu0 %v3307, 17
      %v3886 = vpop.permute.xlu0 %3885
      %3887 = vrot.lane.b32.xlu0 %v3308, 17
      %v3888 = vpop.permute.xlu0 %3887
      %3889 = vrot.lane.b32.xlu0 %v3290, 17
      %v3890 = vpop.permute.xlu0 %3889
      %3891 = vrot.lane.b32.xlu0 %v3309, 17
      %v3892 = vpop.permute.xlu0 %3891
      %3893 = vrot.lane.b32.xlu0 %v3310, 17
      %v3894 = vpop.permute.xlu0 %3893
      %3895 = vrot.lane.b32.xlu0 %v3336, 17
      %v3896 = vpop.permute.xlu0 %3895
      %3897 = vrot.lane.b32.xlu0 %v3383, 17
      %v3898 = vpop.permute.xlu0 %3897
      %3899 = vrot.lane.b32.xlu0 %v3384, 17
      %v3900 = vpop.permute.xlu0 %3899
      %3901 = vrot.lane.b32.xlu0 %v3342, 17
      %v3902 = vpop.permute.xlu0 %3901
      %3903 = vrot.lane.b32.xlu0 %v3385, 17
      %v3904 = vpop.permute.xlu0 %3903
      %3905 = vrot.lane.b32.xlu0 %v3386, 17
      %v3906 = vpop.permute.xlu0 %3905
      %3907 = vrot.lane.b32.xlu0 %v3348, 17
      %v3908 = vpop.permute.xlu0 %3907
      %3909 = vrot.lane.b32.xlu0 %v3387, 17
      %v3910 = vpop.permute.xlu0 %3909
      %3911 = vrot.lane.b32.xlu0 %v3388, 17
      %v3912 = vpop.permute.xlu0 %3911
      %3913 = vrot.lane.b32.xlu0 %v3354, 17
      %v3914 = vpop.permute.xlu0 %3913
      %3915 = vrot.lane.b32.xlu0 %v3389, 17
      %v3916 = vpop.permute.xlu0 %3915
      %3917 = vrot.lane.b32.xlu0 %v3390, 17
      %v3918 = vpop.permute.xlu0 %3917
      %3919 = vrot.lane.b32.xlu0 %v3360, 17
      %v3920 = vpop.permute.xlu0 %3919
      %3921 = vrot.lane.b32.xlu0 %v3391, 17
      %v3922 = vpop.permute.xlu0 %3921
      %3923 = vrot.lane.b32.xlu0 %v3392, 17
      %v3924 = vpop.permute.xlu0 %3923
      %3925 = vrot.lane.b32.xlu0 %v3366, 17
      %v3926 = vpop.permute.xlu0 %3925
      %3927 = vrot.lane.b32.xlu0 %v3393, 17
      %v3928 = vpop.permute.xlu0 %3927
      %3929 = vrot.lane.b32.xlu0 %v3394, 17
      %v3930 = vpop.permute.xlu0 %3929
      %3931 = vrot.lane.b32.xlu0 %v3372, 17
      %v3932 = vpop.permute.xlu0 %3931
      %3933 = vrot.lane.b32.xlu0 %v3395, 17
      %v3934 = vpop.permute.xlu0 %3933
      %3935 = vrot.lane.b32.xlu0 %v3396, 17
      %v3936 = vpop.permute.xlu0 %3935
      %3937 = vrot.lane.b32.xlu0 %v3378, 17
      %v3938 = vpop.permute.xlu0 %3937
      %3939 = vrot.lane.b32.xlu0 %v3397, 17
      %v3940 = vpop.permute.xlu0 %3939
      %3941 = vrot.lane.b32.xlu0 %v3398, 17
      %v3942 = vpop.permute.xlu0 %3941
      %v3943 = vsel %vm564, %v3512, %v3514
      %v3944 = vsel %vm564, %v3514, %v3516
      %v3945 = vsel %vm564, %v3518, %v3520
      %v3946 = vsel %vm564, %v3520, %v3522
      %v3947 = vsel %vm564, %v3524, %v3526
      %v3948 = vsel %vm564, %v3526, %v3528
      %v3949 = vsel %vm564, %v3530, %v3532
      %v3950 = vsel %vm564, %v3532, %v3534
      %v3951 = vsel %vm564, %v3536, %v3538
      %v3952 = vsel %vm564, %v3538, %v3540
      %v3953 = vsel %vm564, %v3542, %v3544
      %v3954 = vsel %vm564, %v3544, %v3546
      %v3955 = vsel %vm564, %v3548, %v3550
      %v3956 = vsel %vm564, %v3550, %v3552
      %v3957 = vsel %vm564, %v3554, %v3556
      %v3958 = vsel %vm564, %v3556, %v3558
      %v3959 = vsel %vm564, %v3560, %v3562
      %v3960 = vsel %vm564, %v3562, %v3564
      %v3961 = vsel %vm564, %v3566, %v3568
      %v3962 = vsel %vm564, %v3568, %v3570
      %v3963 = vsel %vm564, %v3572, %v3574
      %v3964 = vsel %vm564, %v3574, %v3576
      %v3965 = vsel %vm564, %v3578, %v3580
      %v3966 = vsel %vm564, %v3580, %v3582
      %v3967 = vsel %vm564, %v3584, %v3586
      %v3968 = vsel %vm564, %v3586, %v3588
      %v3969 = vsel %vm564, %v3590, %v3592
      %v3970 = vsel %vm564, %v3592, %v3594
      %v3971 = vsel %vm564, %v3596, %v3598
      %v3972 = vsel %vm564, %v3598, %v3600
      %v3973 = vsel %vm564, %v3602, %v3604
      %v3974 = vsel %vm564, %v3604, %v3606
      %v3975 = vsel %vm564, %v3608, %v3610
      %v3976 = vsel %vm564, %v3610, %v3612
      %v3977 = vsel %vm564, %v3614, %v3616
      %v3978 = vsel %vm564, %v3616, %v3618
      %v3979 = vsel %vm564, %v3620, %v3622
      %v3980 = vsel %vm564, %v3622, %v3624
      %v3981 = vsel %vm564, %v3626, %v3628
      %v3982 = vsel %vm564, %v3628, %v3630
      %v3983 = vsel %vm564, %v3632, %v3634
      %v3984 = vsel %vm564, %v3634, %v3636
      %v3985 = vsel %vm564, %v3638, %v3640
      %v3986 = vsel %vm564, %v3640, %v3642
      %v3987 = vsel %vm564, %v3644, %v3646
      %v3988 = vsel %vm564, %v3646, %v3648
      %v3989 = vsel %vm564, %v3650, %v3652
      %v3990 = vsel %vm564, %v3652, %v3654
      %v3991 = vsel %vm564, %v3656, %v3658
      %v3992 = vsel %vm564, %v3658, %v3660
      %v3993 = vsel %vm564, %v3662, %v3664
      %v3994 = vsel %vm564, %v3664, %v3666
      %v3995 = vsel %vm564, %v3668, %v3670
      %v3996 = vsel %vm564, %v3670, %v3672
      %v3997 = vsel %vm564, %v3674, %v3676
      %v3998 = vsel %vm564, %v3676, %v3678
      %v3999 = vsel %vm564, %v3680, %v3682
      %v4000 = vsel %vm564, %v3682, %v3684
      %v4001 = vsel %vm564, %v3686, %v3688
      %v4002 = vsel %vm564, %v3688, %v3690
      %v4003 = vsel %vm564, %v3692, %v3694
      %v4004 = vsel %vm564, %v3694, %v3696
      %v4005 = vsel %vm564, %v3698, %v3700
      %v4006 = vsel %vm564, %v3700, %v3702
      %v4007 = vsel %vm564, %v3704, %v3706
      %v4008 = vsel %vm564, %v3706, %v3708
      %v4009 = vsel %vm564, %v3710, %v3712
      %v4010 = vsel %vm564, %v3712, %v3714
      %v4011 = vsel %vm564, %v3716, %v3718
      %v4012 = vsel %vm564, %v3718, %v3720
      %v4013 = vsel %vm564, %v3722, %v3724
      %v4014 = vsel %vm564, %v3724, %v3726
      %v4015 = vsel %vm564, %v3728, %v3730
      %v4016 = vsel %vm564, %v3730, %v3732
      %v4017 = vsel %vm564, %v3734, %v3736
      %v4018 = vsel %vm564, %v3736, %v3738
      %v4019 = vsel %vm564, %v3740, %v3742
      %v4020 = vsel %vm564, %v3742, %v3744
      %v4021 = vsel %vm564, %v3746, %v3748
      %v4022 = vsel %vm564, %v3748, %v3750
      %v4023 = vsel %vm564, %v3752, %v3754
      %v4024 = vsel %vm564, %v3754, %v3756
      %v4025 = vsel %vm564, %v3758, %v3760
      %v4026 = vsel %vm564, %v3760, %v3762
      %v4027 = vsel %vm564, %v3764, %v3766
      %v4028 = vsel %vm564, %v3766, %v3768
      %v4029 = vsel %vm564, %v3770, %v3772
      %v4030 = vsel %vm564, %v3772, %v3774
      %v4031 = vsel %vm564, %v3776, %v3778
      %v4032 = vsel %vm564, %v3778, %v3780
      %v4033 = vsel %vm564, %v3782, %v3784
      %v4034 = vsel %vm564, %v3784, %v3786
      %v4035 = vsel %vm564, %v3788, %v3790
      %v4036 = vsel %vm564, %v3790, %v3792
      %v4037 = vsel %vm564, %v3794, %v3796
      %v4038 = vsel %vm564, %v3796, %v3798
      %v4039 = vsel %vm564, %v3800, %v3802
      %v4040 = vsel %vm564, %v3802, %v3804
      %v4041 = vsel %vm564, %v3806, %v3808
      %v4042 = vsel %vm564, %v3808, %v3810
      %v4043 = vsel %vm564, %v3812, %v3814
      %v4044 = vsel %vm564, %v3814, %v3816
      %v4045 = vsel %vm564, %v3818, %v3820
      %v4046 = vsel %vm564, %v3820, %v3822
      %v4047 = vsel %vm564, %v3824, %v3826
      %v4048 = vsel %vm564, %v3826, %v3828
      %v4049 = vsel %vm564, %v3830, %v3832
      %v4050 = vsel %vm564, %v3832, %v3834
      %v4051 = vsel %vm564, %v3836, %v3838
      %v4052 = vsel %vm564, %v3838, %v3840
      %v4053 = vsel %vm564, %v3842, %v3844
      %v4054 = vsel %vm564, %v3844, %v3846
      %v4055 = vsel %vm564, %v3848, %v3850
      %v4056 = vsel %vm564, %v3850, %v3852
      %v4057 = vsel %vm564, %v3854, %v3856
      %v4058 = vsel %vm564, %v3856, %v3858
      %v4059 = vsel %vm564, %v3860, %v3862
      %v4060 = vsel %vm564, %v3862, %v3864
      %v4061 = vsel %vm564, %v3866, %v3868
      %v4062 = vsel %vm564, %v3868, %v3870
      %v4063 = vsel %vm564, %v3872, %v3874
      %v4064 = vsel %vm564, %v3874, %v3876
      %v4065 = vsel %vm564, %v3878, %v3880
      %v4066 = vsel %vm564, %v3880, %v3882
      %v4067 = vsel %vm564, %v3884, %v3886
      %v4068 = vsel %vm564, %v3886, %v3888
      %v4069 = vsel %vm564, %v3890, %v3892
      %v4070 = vsel %vm564, %v3892, %v3894
      %v4071 = vsel %vm564, %v3896, %v3898
      %v4072 = vsel %vm564, %v3898, %v3900
      %v4073 = vsel %vm564, %v3902, %v3904
      %v4074 = vsel %vm564, %v3904, %v3906
      %v4075 = vsel %vm564, %v3908, %v3910
      %v4076 = vsel %vm564, %v3910, %v3912
      %v4077 = vsel %vm564, %v3914, %v3916
      %v4078 = vsel %vm564, %v3916, %v3918
      %v4079 = vsel %vm564, %v3920, %v3922
      %v4080 = vsel %vm564, %v3922, %v3924
      %v4081 = vsel %vm564, %v3926, %v3928
      %v4082 = vsel %vm564, %v3928, %v3930
      %v4083 = vsel %vm564, %v3932, %v3934
      %v4084 = vsel %vm564, %v3934, %v3936
      %v4085 = vsel %vm564, %v3938, %v3940
      %v4086 = vsel %vm564, %v3940, %v3942
      %v4232 = vsel %vm2087, %v3403, 0
      %v4235 = vsel %vm2087, %v3408, 0
      %v4238 = vsel %vm2087, %v3413, 0
      %v4241 = vsel %vm2087, %v3418, 0
      %v4244 = vsel %vm2087, %v3423, 0
      %v4247 = vsel %vm2087, %v3428, 0
      %v4250 = vsel %vm2087, %v3433, 0
      %v4253 = vsel %vm2087, %v3438, 0
      %4255 = vmatprep.subr.mxu0 %v3974
      %4256 = vmatpush1.msra.mxu0 %v3973
      %4257 = vmatprep.subr.mxu0 %v3972
      %4258 = vmatpush1.msra.mxu0 %v3971
      %4259 = vmatprep.subr.mxu0 %v3970
      %4260 = vmatpush1.msra.mxu0 %v3969
      %4261 = vmatprep.subr.mxu0 %v3968
      %4262 = vmatpush1.msra.mxu0 %v3967
      %4263 = vmatprep.subr.mxu0 %v3966
      %4264 = vmatpush1.msra.mxu0 %v3965
      %4265 = vmatprep.subr.mxu0 %v3964
      %4266 = vmatpush1.msra.mxu0 %v3963
      %4267 = vmatprep.subr.mxu0 %v3962
      %4268 = vmatpush1.msra.mxu0 %v3961
      %4269 = vmatprep.subr.mxu0 %v3960
      %4270 = vmatpush1.msra.mxu0 %v3959
      %4271 = vmatprep.subr.mxu0 %v3958
      %4272 = vmatpush1.msra.mxu0 %v3957
      %4273 = vmatprep.subr.mxu0 %v3956
      %4274 = vmatpush1.msra.mxu0 %v3955
      %4275 = vmatprep.subr.mxu0 %v3954
      %4276 = vmatpush1.msra.mxu0 %v3953
      %4277 = vmatprep.subr.mxu0 %v3952
      %4278 = vmatpush1.msra.mxu0 %v3951
      %4279 = vmatprep.subr.mxu0 %v3950
      %4280 = vmatpush1.msra.mxu0 %v3949
      %4281 = vmatprep.subr.mxu0 %v3948
      %4282 = vmatpush1.msra.mxu0 %v3947
      %4283 = vmatprep.subr.mxu0 %v3946
      %4284 = vmatpush1.msra.mxu0 %v3945
      %4285 = vmatprep.subr.mxu0 %v3944
      %4286 = vmatpush1.msra.mxu0 %v3943
      %4287 = vmatprep.subr.mxu0 %v4006
      %4288 = vmatpush2.msra.mxu0 %v4005
      %4289 = vmatprep.subr.mxu0 %v4004
      %4290 = vmatpush2.msra.mxu0 %v4003
      %4291 = vmatprep.subr.mxu0 %v4002
      %4292 = vmatpush2.msra.mxu0 %v4001
      %4293 = vmatprep.subr.mxu0 %v4000
      %4294 = vmatpush2.msra.mxu0 %v3999
      %4295 = vmatprep.subr.mxu0 %v3998
      %4296 = vmatpush2.msra.mxu0 %v3997
      %4297 = vmatprep.subr.mxu0 %v3996
      %4298 = vmatpush2.msra.mxu0 %v3995
      %4299 = vmatprep.subr.mxu0 %v3994
      %4300 = vmatpush2.msra.mxu0 %v3993
      %4301 = vmatprep.subr.mxu0 %v3992
      %4302 = vmatpush2.msra.mxu0 %v3991
      %4303 = vmatprep.subr.mxu0 %v3990
      %4304 = vmatpush2.msra.mxu0 %v3989
      %4305 = vmatprep.subr.mxu0 %v3988
      %4306 = vmatpush2.msra.mxu0 %v3987
      %4307 = vmatprep.subr.mxu0 %v3986
      %4308 = vmatpush2.msra.mxu0 %v3985
      %4309 = vmatprep.subr.mxu0 %v3984
      %4310 = vmatpush2.msra.mxu0 %v3983
      %4311 = vmatprep.subr.mxu0 %v3982
      %4312 = vmatpush2.msra.mxu0 %v3981
      %4313 = vmatprep.subr.mxu0 %v3980
      %4314 = vmatpush2.msra.mxu0 %v3979
      %4315 = vmatprep.subr.mxu0 %v3978
      %4316 = vmatpush2.msra.mxu0 %v3977
      %4317 = vmatprep.subr.mxu0 %v3976
      %4318 = vmatpush2.msra.mxu0 %v3975
      %4319 = vmatprep.mubr.f32.mxu0 %v3400
      %4320 = vmatmul.mubr.f32.gmra.mxu0 %v3399
      %v4321 = vpop.f32.mrf.mxu0
      %v4322 = vadd.f32 %v3450, %v4321
      %v4323 = vpop.f32.mrf.mxu0
      %v4324 = vadd.f32 %v3450, %v4323
      %4325 = vmatprep.mubr.f32.mxu0 %v3405
      %4326 = vmatmul.mubr.f32.gmra.mxu0 %v3404
      %v4327 = vpop.f32.mrf.mxu0
      %v4328 = vadd.f32 %v3455, %v4327
      %v4329 = vpop.f32.mrf.mxu0
      %v4330 = vadd.f32 %v3455, %v4329
      %4331 = vmatprep.mubr.f32.mxu0 %v3410
      %4332 = vmatmul.mubr.f32.gmra.mxu0 %v3409
      %v4333 = vpop.f32.mrf.mxu0
      %v4334 = vadd.f32 %v3460, %v4333
      %v4335 = vpop.f32.mrf.mxu0
      %v4336 = vadd.f32 %v3460, %v4335
      %4337 = vmatprep.mubr.f32.mxu0 %v3415
      %4338 = vmatmul.mubr.f32.gmra.mxu0 %v3414
      %v4339 = vpop.f32.mrf.mxu0
      %v4340 = vadd.f32 %v3465, %v4339
      %v4341 = vpop.f32.mrf.mxu0
      %v4342 = vadd.f32 %v3465, %v4341
      %4343 = vmatprep.mubr.f32.mxu0 %v3420
      %4344 = vmatmul.mubr.f32.gmra.mxu0 %v3419
      %v4345 = vpop.f32.mrf.mxu0
      %v4346 = vadd.f32 %v3470, %v4345
      %v4347 = vpop.f32.mrf.mxu0
      %v4348 = vadd.f32 %v3470, %v4347
      %4349 = vmatprep.mubr.f32.mxu0 %v3425
      %4350 = vmatmul.mubr.f32.gmra.mxu0 %v3424
      %v4351 = vpop.f32.mrf.mxu0
      %v4352 = vadd.f32 %v3475, %v4351
      %v4353 = vpop.f32.mrf.mxu0
      %v4354 = vadd.f32 %v3475, %v4353
      %4355 = vmatprep.mubr.f32.mxu0 %v3430
      %4356 = vmatmul.mubr.f32.gmra.mxu0 %v3429
      %v4357 = vpop.f32.mrf.mxu0
      %v4358 = vadd.f32 %v3480, %v4357
      %v4359 = vpop.f32.mrf.mxu0
      %v4360 = vadd.f32 %v3480, %v4359
      %4361 = vmatprep.mubr.f32.mxu0 %v3435
      %4362 = vmatmul.mubr.f32.gmra.mxu0 %v3434
      %v4363 = vpop.f32.mrf.mxu0
      %v4364 = vadd.f32 %v3485, %v4363
      %v4365 = vpop.f32.mrf.mxu0
      %v4366 = vadd.f32 %v3485, %v4365
      %4367 = vdwg.mxu0
      %4368 = vmatprep.subr.mxu0 %v4038
      %4369 = vmatpush1.msra.mxu0 %v4037
      %4370 = vmatprep.subr.mxu0 %v4036
      %4371 = vmatpush1.msra.mxu0 %v4035
      %4372 = vmatprep.subr.mxu0 %v4034
      %4373 = vmatpush1.msra.mxu0 %v4033
      %4374 = vmatprep.subr.mxu0 %v4032
      %4375 = vmatpush1.msra.mxu0 %v4031
      %4376 = vmatprep.subr.mxu0 %v4030
      %4377 = vmatpush1.msra.mxu0 %v4029
      %4378 = vmatprep.subr.mxu0 %v4028
      %4379 = vmatpush1.msra.mxu0 %v4027
      %4380 = vmatprep.subr.mxu0 %v4026
      %4381 = vmatpush1.msra.mxu0 %v4025
      %4382 = vmatprep.subr.mxu0 %v4024
      %4383 = vmatpush1.msra.mxu0 %v4023
      %4384 = vmatprep.subr.mxu0 %v4022
      %4385 = vmatpush1.msra.mxu0 %v4021
      %4386 = vmatprep.subr.mxu0 %v4020
      %4387 = vmatpush1.msra.mxu0 %v4019
      %4388 = vmatprep.subr.mxu0 %v4018
      %4389 = vmatpush1.msra.mxu0 %v4017
      %4390 = vmatprep.subr.mxu0 %v4016
      %4391 = vmatpush1.msra.mxu0 %v4015
      %4392 = vmatprep.subr.mxu0 %v4014
      %4393 = vmatpush1.msra.mxu0 %v4013
      %4394 = vmatprep.subr.mxu0 %v4012
      %4395 = vmatpush1.msra.mxu0 %v4011
      %4396 = vmatprep.subr.mxu0 %v4010
      %4397 = vmatpush1.msra.mxu0 %v4009
      %4398 = vmatprep.subr.mxu0 %v4008
      %4399 = vmatpush1.msra.mxu0 %v4007
      %4400 = vmatprep.subr.mxu0 %v4070
      %4401 = vmatpush2.msra.mxu0 %v4069
      %4402 = vmatprep.subr.mxu0 %v4068
      %4403 = vmatpush2.msra.mxu0 %v4067
      %4404 = vmatprep.subr.mxu0 %v4066
      %4405 = vmatpush2.msra.mxu0 %v4065
      %4406 = vmatprep.subr.mxu0 %v4064
      %4407 = vmatpush2.msra.mxu0 %v4063
      %4408 = vmatprep.subr.mxu0 %v4062
      %4409 = vmatpush2.msra.mxu0 %v4061
      %4410 = vmatprep.subr.mxu0 %v4060
      %4411 = vmatpush2.msra.mxu0 %v4059
      %4412 = vmatprep.subr.mxu0 %v4058
      %4413 = vmatpush2.msra.mxu0 %v4057
      %4414 = vmatprep.subr.mxu0 %v4056
      %4415 = vmatpush2.msra.mxu0 %v4055
      %4416 = vmatprep.subr.mxu0 %v4054
      %4417 = vmatpush2.msra.mxu0 %v4053
      %4418 = vmatprep.subr.mxu0 %v4052
      %4419 = vmatpush2.msra.mxu0 %v4051
      %4420 = vmatprep.subr.mxu0 %v4050
      %4421 = vmatpush2.msra.mxu0 %v4049
      %4422 = vmatprep.subr.mxu0 %v4048
      %4423 = vmatpush2.msra.mxu0 %v4047
      %4424 = vmatprep.subr.mxu0 %v4046
      %4425 = vmatpush2.msra.mxu0 %v4045
      %4426 = vmatprep.subr.mxu0 %v4044
      %4427 = vmatpush2.msra.mxu0 %v4043
      %4428 = vmatprep.subr.mxu0 %v4042
      %4429 = vmatpush2.msra.mxu0 %v4041
      %4430 = vmatprep.subr.mxu0 %v4040
      %4431 = vmatpush2.msra.mxu0 %v4039
      %4432 = vmatprep.mubr.f32.mxu0 %v3402
      %4433 = vmatmul.mubr.f32.gmra.mxu0 %v3401
      %v4434 = vpop.f32.mrf.mxu0
      %v4435 = vadd.f32 %v4322, %v4434
      %v4436 = vpop.f32.mrf.mxu0
      %v4437 = vadd.f32 %v4324, %v4436
      %4438 = vmatprep.mubr.f32.mxu0 %v3407
      %4439 = vmatmul.mubr.f32.gmra.mxu0 %v3406
      %v4440 = vpop.f32.mrf.mxu0
      %v4441 = vadd.f32 %v4328, %v4440
      %v4442 = vpop.f32.mrf.mxu0
      %v4443 = vadd.f32 %v4330, %v4442
      %4444 = vmatprep.mubr.f32.mxu0 %v3412
      %4445 = vmatmul.mubr.f32.gmra.mxu0 %v3411
      %v4446 = vpop.f32.mrf.mxu0
      %v4447 = vadd.f32 %v4334, %v4446
      %v4448 = vpop.f32.mrf.mxu0
      %v4449 = vadd.f32 %v4336, %v4448
      %4450 = vmatprep.mubr.f32.mxu0 %v3417
      %4451 = vmatmul.mubr.f32.gmra.mxu0 %v3416
      %v4452 = vpop.f32.mrf.mxu0
      %v4453 = vadd.f32 %v4340, %v4452
      %v4454 = vpop.f32.mrf.mxu0
      %v4455 = vadd.f32 %v4342, %v4454
      %4456 = vmatprep.mubr.f32.mxu0 %v3422
      %4457 = vmatmul.mubr.f32.gmra.mxu0 %v3421
      %v4458 = vpop.f32.mrf.mxu0
      %v4459 = vadd.f32 %v4346, %v4458
      %v4460 = vpop.f32.mrf.mxu0
      %v4461 = vadd.f32 %v4348, %v4460
      %4462 = vmatprep.mubr.f32.mxu0 %v3427
      %4463 = vmatmul.mubr.f32.gmra.mxu0 %v3426
      %v4464 = vpop.f32.mrf.mxu0
      %v4465 = vadd.f32 %v4352, %v4464
      %v4466 = vpop.f32.mrf.mxu0
      %v4467 = vadd.f32 %v4354, %v4466
      %4468 = vmatprep.mubr.f32.mxu0 %v3432
      %4469 = vmatmul.mubr.f32.gmra.mxu0 %v3431
      %v4470 = vpop.f32.mrf.mxu0
      %v4471 = vadd.f32 %v4358, %v4470
      %v4472 = vpop.f32.mrf.mxu0
      %v4473 = vadd.f32 %v4360, %v4472
      %4474 = vmatprep.mubr.f32.mxu0 %v3437
      %4475 = vmatmul.mubr.f32.gmra.mxu0 %v3436
      %v4476 = vpop.f32.mrf.mxu0
      %v4477 = vadd.f32 %v4364, %v4476
      %v4478 = vpop.f32.mrf.mxu0
      %v4479 = vadd.f32 %v4366, %v4478
      %4480 = vdwg.mxu0
      %4481 = vmatprep.subr.mxu0 0.0
      %4482 = vmatpush1.msra.mxu0 0.0
      %4483 = vmatprep.subr.mxu0 0.0
      %4484 = vmatpush1.msra.mxu0 0.0
      %4485 = vmatprep.subr.mxu0 0.0
      %4486 = vmatpush1.msra.mxu0 0.0
      %4487 = vmatprep.subr.mxu0 0.0
      %4488 = vmatpush1.msra.mxu0 0.0
      %4489 = vmatprep.subr.mxu0 0.0
      %4490 = vmatpush1.msra.mxu0 0.0
      %4491 = vmatprep.subr.mxu0 0.0
      %4492 = vmatpush1.msra.mxu0 0.0
      %4493 = vmatprep.subr.mxu0 0.0
      %4494 = vmatpush1.msra.mxu0 0.0
      %4495 = vmatprep.subr.mxu0 0.0
      %4496 = vmatpush1.msra.mxu0 0.0
      %4497 = vmatprep.subr.mxu0 %v4086
      %4498 = vmatpush1.msra.mxu0 %v4085
      %4499 = vmatprep.subr.mxu0 %v4084
      %4500 = vmatpush1.msra.mxu0 %v4083
      %4501 = vmatprep.subr.mxu0 %v4082
      %4502 = vmatpush1.msra.mxu0 %v4081
      %4503 = vmatprep.subr.mxu0 %v4080
      %4504 = vmatpush1.msra.mxu0 %v4079
      %4505 = vmatprep.subr.mxu0 %v4078
      %4506 = vmatpush1.msra.mxu0 %v4077
      %4507 = vmatprep.subr.mxu0 %v4076
      %4508 = vmatpush1.msra.mxu0 %v4075
      %4509 = vmatprep.subr.mxu0 %v4074
      %4510 = vmatpush1.msra.mxu0 %v4073
      %4511 = vmatprep.subr.mxu0 %v4072
      %4512 = vmatpush1.msra.mxu0 %v4071
      %4513 = vmatprep.subr.mxu0 0.0
      %4514 = vmatpush2.msra.mxu0 0.0
      %4515 = vmatprep.subr.mxu0 0.0
      %4516 = vmatpush2.msra.mxu0 0.0
      %4517 = vmatprep.subr.mxu0 0.0
      %4518 = vmatpush2.msra.mxu0 0.0
      %4519 = vmatprep.subr.mxu0 0.0
      %4520 = vmatpush2.msra.mxu0 0.0
      %4521 = vmatprep.subr.mxu0 0.0
      %4522 = vmatpush2.msra.mxu0 0.0
      %4523 = vmatprep.subr.mxu0 0.0
      %4524 = vmatpush2.msra.mxu0 0.0
      %4525 = vmatprep.subr.mxu0 0.0
      %4526 = vmatpush2.msra.mxu0 0.0
      %4527 = vmatprep.subr.mxu0 0.0
      %4528 = vmatpush2.msra.mxu0 0.0
      %4529 = vmatprep.subr.mxu0 0.0
      %4530 = vmatpush2.msra.mxu0 0.0
      %4531 = vmatprep.subr.mxu0 0.0
      %4532 = vmatpush2.msra.mxu0 0.0
      %4533 = vmatprep.subr.mxu0 0.0
      %4534 = vmatpush2.msra.mxu0 0.0
      %4535 = vmatprep.subr.mxu0 0.0
      %4536 = vmatpush2.msra.mxu0 0.0
      %4537 = vmatprep.subr.mxu0 0.0
      %4538 = vmatpush2.msra.mxu0 0.0
      %4539 = vmatprep.subr.mxu0 0.0
      %4540 = vmatpush2.msra.mxu0 0.0
      %4541 = vmatprep.subr.mxu0 0.0
      %4542 = vmatpush2.msra.mxu0 0.0
      %4543 = vmatprep.subr.mxu0 0.0
      %4544 = vmatpush2.msra.mxu0 0.0
      %4545 = vmatprep.mubr.f32.mxu0 0.0
      %4546 = vmatmul.mubr.f32.gmra.mxu0 %v4232
      %v4547 = vpop.f32.mrf.mxu0
      %v4548 = vadd.f32 %v4435, %v4547
      %v4549 = vpop.f32.mrf.mxu0
      %v4550 = vadd.f32 %v4437, %v4549
      %4551 = vmatprep.mubr.f32.mxu0 0.0
      %4552 = vmatmul.mubr.f32.gmra.mxu0 %v4235
      %v4553 = vpop.f32.mrf.mxu0
      %v4554 = vadd.f32 %v4441, %v4553
      %v4555 = vpop.f32.mrf.mxu0
      %v4556 = vadd.f32 %v4443, %v4555
      %4557 = vmatprep.mubr.f32.mxu0 0.0
      %4558 = vmatmul.mubr.f32.gmra.mxu0 %v4238
      %v4559 = vpop.f32.mrf.mxu0
      %v4560 = vadd.f32 %v4447, %v4559
      %v4561 = vpop.f32.mrf.mxu0
      %v4562 = vadd.f32 %v4449, %v4561
      %4563 = vmatprep.mubr.f32.mxu0 0.0
      %4564 = vmatmul.mubr.f32.gmra.mxu0 %v4241
      %v4565 = vpop.f32.mrf.mxu0
      %v4566 = vadd.f32 %v4453, %v4565
      %v4567 = vpop.f32.mrf.mxu0
      %v4568 = vadd.f32 %v4455, %v4567
      %4569 = vmatprep.mubr.f32.mxu0 0.0
      %4570 = vmatmul.mubr.f32.gmra.mxu0 %v4244
      %v4571 = vpop.f32.mrf.mxu0
      %v4572 = vadd.f32 %v4459, %v4571
      %v4573 = vpop.f32.mrf.mxu0
      %v4574 = vadd.f32 %v4461, %v4573
      %4575 = vmatprep.mubr.f32.mxu0 0.0
      %4576 = vmatmul.mubr.f32.gmra.mxu0 %v4247
      %v4577 = vpop.f32.mrf.mxu0
      %v4578 = vadd.f32 %v4465, %v4577
      %v4579 = vpop.f32.mrf.mxu0
      %v4580 = vadd.f32 %v4467, %v4579
      %4581 = vmatprep.mubr.f32.mxu0 0.0
      %4582 = vmatmul.mubr.f32.gmra.mxu0 %v4250
      %v4583 = vpop.f32.mrf.mxu0
      %v4584 = vadd.f32 %v4471, %v4583
      %v4585 = vpop.f32.mrf.mxu0
      %v4586 = vadd.f32 %v4473, %v4585
      %4587 = vmatprep.mubr.f32.mxu0 0.0
      %4588 = vmatmul.mubr.f32.gmra.mxu0 %v4253
      %v4589 = vpop.f32.mrf.mxu0
      %v4590 = vadd.f32 %v4477, %v4589
      %v4591 = vpop.f32.mrf.mxu0
      %v4592 = vadd.f32 %v4479, %v4591
      %4593 = vdwg.mxu0
      %v4594 = vadd.f32 %v4548, %v279
      %v4595 = vadd.f32 %v4550, %v280
      %v4596 = vadd.f32 %v4554, %v281
      %v4597 = vadd.f32 %v4556, %v282
      %v4598 = vadd.f32 %v4560, %v283
      %v4599 = vadd.f32 %v4562, %v284
      %v4600 = vadd.f32 %v4566, %v285
      %v4601 = vadd.f32 %v4568, %v286
      %v4602 = vadd.f32 %v4572, %v287
      %v4603 = vadd.f32 %v4574, %v288
      %v4604 = vadd.f32 %v4578, %v289
      %v4605 = vadd.f32 %v4580, %v290
      %v4606 = vadd.f32 %v4584, %v291
      %v4607 = vadd.f32 %v4586, %v292
      %v4608 = vadd.f32 %v4590, %v293
      %v4609 = vadd.f32 %v4592, %v294
      %4610 = vst [vmem:[%s278] sm:$0xff] %v4594
      %4611 = vst [vmem:[%s278 + $0x8] sm:$0xff] %v4595
      %4612 = vst [vmem:[%s278 + $0x10] sm:$0xff] %v4596
      %4613 = vst [vmem:[%s278 + $0x18] sm:$0xff] %v4597
      %4614 = vst [vmem:[%s278 + $0x20] sm:$0xff] %v4598
      %4615 = vst [vmem:[%s278 + $0x28] sm:$0xff] %v4599
      %4616 = vst [vmem:[%s278 + $0x30] sm:$0xff] %v4600
      %4617 = vst [vmem:[%s278 + $0x38] sm:$0xff] %v4601
      %4618 = vst [vmem:[%s278 + $0x40] sm:$0xff] %v4602
      %4619 = vst [vmem:[%s278 + $0x48] sm:$0xff] %v4603
      %4620 = vst [vmem:[%s278 + $0x50] sm:$0xff] %v4604
      %4621 = vst [vmem:[%s278 + $0x58] sm:$0xff] %v4605
      %4622 = vst [vmem:[%s278 + $0x60] sm:$0xff] %v4606
      %4623 = vst [vmem:[%s278 + $0x68] sm:$0xff] %v4607
      %4624 = vst [vmem:[%s278 + $0x70] sm:$0xff] %v4608
      %4625 = vst [vmem:[%s278 + $0x78] sm:$0xff] %v4609
      %p4626 = scmp.lt.s32.totalorder %s18, 1
      %s4627 = scalar_select %p4626, %s18, 1
      %s4628 = smul.addr %s4627, 16
      %s4629 = smul.addr %s4628, 8
      %s4630 = scalar_lea.vmem %s7, %s4629
      // Predicated region
      $region49: #{post_process_residual.1} parent=47 // pred_check
        %p4631 = pneg %p188
      $region50: #{post_process_residual.1} parent=47 // pred_check_branch
        %4633 = sbr.rel (%p4631) target = $region52
      $region51: #{post_process_residual.1} parent=47 // pred_region
        _
      $region52: #{post_process_residual.1} parent=47 // pred_fallthru
        _
    $region48: #{post_process_residual.1} parent=5 // pred_fallthru
      _
    %p4634 = scmp.le.s32.totalorder 2, %s13
    // Predicated region
    $region53: #{post_process_residual.1} parent=5 // pred_check
      %p4635 = pneg %p4634
    $region54: #{post_process_residual.1} parent=5 // pred_check_branch
      %4637 = sbr.rel (%p4635) target = $region56
    $region55: #{post_process_residual.1} parent=5 // pred_region
      %s4638 = ssub.s32 %s13, 2
      // Predicated region
      $region57: #{post_process_residual.1} parent=55 // pred_check
        %p4639 = pneg %p194
      $region58: #{post_process_residual.1} parent=55 // pred_check_branch
        %4641 = sbr.rel (%p4639) target = $region60
      $region59: #{post_process_residual.1} parent=55 // pred_region
        %p4642 = scmp.lt.s32.totalorder %s19, 1
        %s4643 = scalar_select %p4642, %s19, 1
        %s4644 = smul.addr %s4643, 16
        %s4645 = smul.addr %s4644, 8
        %s4646 = scalar_lea.vmem %s7, %s4645
      $region60: #{post_process_residual.1} parent=55 // pred_fallthru
        _
    $region56: #{post_process_residual.1} parent=5 // pred_fallthru
      _
  $region6: #{post_process_residual.1} parent=0 // loop_footer
    %s17 = sadd.s32 1, %s13
  $region7: #{post_process_residual.1} parent=0 // loop_footer_branch
    %12 = sbr.rel target = $region3
  $region8: #{post_process_residual.1} parent=0 // loop_exit
    _

</llo_original>
